<compile_context>
chip_gen: v7x
topology: tpu7x:2x2x1
jax: 0.10.0
libtpu: 0.0.40
codegen_flags: <defaults>
</compile_context>

<pallas_src>
import jax
import jax.numpy as jnp
import numpy as np
from jax.experimental import pallas as pl
from jax.experimental.pallas import tpu as pltpu

EPS = 1e-5


# ----------------------------------------------------------------------------
# Pallas kernel: full Bottleneck forward for one batch element (NHWC tile).
# ----------------------------------------------------------------------------
def _bottleneck_kernel(x_ref, w1_ref, b1_ref, w2_ref, b2_ref, w3_ref, b3_ref,
                       wc1_ref, bc1_ref, wh_ref, bh_ref, ww_ref, bw_ref,
                       o_ref, pad_ref):
    f32 = jnp.float32
    cdt = w1_ref.dtype                              # GEMM compute dtype (bf16)

    x = x_ref[0]                                    # (H, W, Cin) f32
    H, W, Cin = x.shape
    Wd = w1_ref.shape[1]                            # bottleneck width
    Cout = w3_ref.shape[1]

    # ---- conv1 (1x1) + bn1 (folded) + relu : one (H*W,Cin)x(Cin,Wd) GEMM ----
    xm = x.reshape(H * W, Cin).astype(cdt)
    t1 = jnp.dot(xm, w1_ref[...], preferred_element_type=f32) + b1_ref[...]
    t1 = jnp.maximum(t1, 0.0)                       # (H*W, Wd) f32

    # ---- conv2 (3x3, stride=1, pad=1) + bn2 + relu --------------------------
    # bf16 halo scratch; only the 1-px border is re-zeroed per step (interior
    # is fully overwritten).  Not gated on program_id==0: with a "parallel"
    # grid axis each core owns its scratch and may never run iteration 0.
    zrow = jnp.zeros((1, W + 2, Wd), cdt)
    zcol = jnp.zeros((H + 2, 1, Wd), cdt)
    pad_ref[pl.ds(0, 1), :, :] = zrow
    pad_ref[pl.ds(H + 1, 1), :, :] = zrow
    pad_ref[:, pl.ds(0, 1), :] = zcol
    pad_ref[:, pl.ds(W + 1, 1), :] = zcol
    pad_ref[pl.ds(1, H), pl.ds(1, W), :] = t1.reshape(H, W, Wd).astype(cdt)

    # 3 dx-grouped accumulated GEMMs (K = 3*Wd each).  For each dx, one
    # (possibly sublane-shifted) slab load; its three dy taps are free
    # major-axis slices, concatenated along the channel/lane axis.
    acc2 = None
    for dx in range(3):
        slab = pad_ref[:, pl.ds(dx, W), :]                         # (H+2, W, Wd)
        cols = jnp.concatenate([slab[dy:dy + H] for dy in range(3)], axis=-1)
        part = jnp.dot(cols.reshape(H * W, 3 * Wd), w2_ref[dx],
                       preferred_element_type=f32)
        acc2 = part if acc2 is None else acc2 + part
    t2 = jnp.maximum(acc2 + b2_ref[...], 0.0)                      # (H*W, Wd) f32

    # ---- conv3 (1x1) + bn3 (folded) -----------------------------------------
    y3 = jnp.dot(t2.astype(cdt), w3_ref[...],
                 preferred_element_type=f32) + b3_ref[...]         # (H*W, Cout)
    y3_img = y3.reshape(H, W, Cout)

    # ---- CoordAtt ------------------------------------------------------------
    # pool over W (sublane axis) as an MXU matvec against a one-hot/W selector
    # (keeps the reduction off the XLU); pool over H is a cheap major-axis mean.
    col = jax.lax.broadcasted_iota(jnp.int32, (H, H * W), 1)
    lo = jax.lax.broadcasted_iota(jnp.int32, (H, H * W), 0) * W
    sel_h = jnp.where((col >= lo) & (col < lo + W), 1.0 / W, 0.0).astype(cdt)
    xh = jnp.dot(sel_h, y3.astype(cdt), preferred_element_type=f32)  # (H, Cout)
    xw = jnp.mean(y3_img, axis=0)                                    # (W, Cout)

    ycat = jnp.concatenate([xh, xw], axis=0).astype(cdt)             # (H+W, Cout)
    y = jnp.dot(ycat, wc1_ref[...], preferred_element_type=f32) + bc1_ref[...]
    y = y * (jnp.clip(y + 3.0, 0.0, 6.0) * (1.0 / 6.0))              # h_swish
    y = y.astype(cdt)
    a_h = jax.nn.sigmoid(
        jnp.dot(y[:H], wh_ref[...], preferred_element_type=f32) + bh_ref[...])
    a_w = jax.nn.sigmoid(
        jnp.dot(y[H:], ww_ref[...], preferred_element_type=f32) + bw_ref[...])
    out = y3_img * a_w[None, :, :] * a_h[:, None, :]                 # identity*a_w*a_h

    # ---- residual add + relu (downsample=None, stride=1 => identity = x) ----
    o_ref[0] = jnp.maximum(out + x, 0.0).astype(o_ref.dtype)


# ----------------------------------------------------------------------------
# Parameter init (deterministic, synthetic) -- mirrors the torch module shapes.
# ----------------------------------------------------------------------------
def init_params(key, inplanes, planes, base_width=64, groups=1):
    width = int(planes * (base_width / 64.0)) * groups
    cout = planes * 4                              # expansion = 4
    mip = max(8, cout // 32)                       # CoordAtt reduction = 32
    ks = jax.random.split(key, 13)

    def w(k, shape, scale=0.1):
        return scale * jax.random.normal(k, shape, jnp.float32)

    def bn(k, c):
        k1, k2, k3, k4 = jax.random.split(k, 4)
        gamma = 1.0 + 0.1 * jax.random.normal(k1, (c,), jnp.float32)
        beta = 0.1 * jax.random.normal(k2, (c,), jnp.float32)
        mean = 0.1 * jax.random.normal(k3, (c,), jnp.float32)
        var = jax.random.uniform(k4, (c,), jnp.float32, minval=0.5, maxval=1.5)
        return gamma, beta, mean, var

    return dict(
        conv1_w=w(ks[0], (width, inplanes, 1, 1)),         # OIHW
        bn1=bn(ks[1], width),
        conv2_w=w(ks[2], (width, width, 3, 3)),
        bn2=bn(ks[3], width),
        conv3_w=w(ks[4], (cout, width, 1, 1)),
        bn3=bn(ks[5], cout),
        ca_conv1_w=w(ks[6], (mip, cout, 1, 1)),
        ca_conv1_b=w(ks[7], (mip,)),
        ca_bn1=bn(ks[8], mip),
        ca_convh_w=w(ks[9], (cout, mip, 1, 1)),
        ca_convh_b=w(ks[10], (cout,)),
        ca_convw_w=w(ks[11], (cout, mip, 1, 1)),
        ca_convw_b=w(ks[12], (cout,)),
    )


# ----------------------------------------------------------------------------
# BN folding and kernel-operand preparation (no lane padding).
# ----------------------------------------------------------------------------
def _fold_bn(w_oihw, bn, conv_bias=None):
    """Fold inference BN (and optional conv bias) into the conv.

    Returns weight (kh*kw, Cin, Cout) and bias (1, Cout), both f32."""
    gamma, beta, mean, var = bn
    scale = gamma / jnp.sqrt(var + EPS)                    # (O,)
    O, I, kh, kw = w_oihw.shape
    wm = jnp.transpose(w_oihw, (2, 3, 1, 0)).reshape(kh * kw, I, O)
    wm = wm * scale[None, None, :]
    b = beta - mean * scale
    if conv_bias is not None:
        b = b + conv_bias * scale
    return wm, b.reshape(1, O)


def _fold_params(params):
    """Unpadded, f32 folded parameters (shared by kernel wrapper and reference)."""
    w1, b1 = _fold_bn(params["conv1_w"], params["bn1"]); w1 = w1[0]    # (Cin, Wd)
    w2, b2 = _fold_bn(params["conv2_w"], params["bn2"])                # (9, Wd, Wd)
    w3, b3 = _fold_bn(params["conv3_w"], params["bn3"]); w3 = w3[0]    # (Wd, Cout)
    wc1, bc1 = _fold_bn(params["ca_conv1_w"], params["ca_bn1"],
                        conv_bias=params["ca_conv1_b"]); wc1 = wc1[0]  # (Cout, mip)
    wh = jnp.transpose(params["ca_convh_w"][:, :, 0, 0], (1, 0))       # (mip, Cout)
    bh = params["ca_convh_b"].reshape(1, -1)
    ww = jnp.transpose(params["ca_convw_w"][:, :, 0, 0], (1, 0))       # (mip, Cout)
    bw = params["ca_convw_b"].reshape(1, -1)
    return (w1, b1, w2, b2, w3, b3, wc1, bc1, wh, bh, ww, bw)


def _prep_kernel_args(folded, compute_dtype):
    """Cast GEMM weights to bf16 (biases stay f32) and regroup conv2 by dx."""
    w1, b1, w2, b2, w3, b3, wc1, bc1, wh, bh, ww, bw = folded
    # conv2: (9, I, O) taps (k = dy*3 + dx) -> (3, 3*I, O): for each dx the
    # three dy taps are stacked along the contraction axis, matching the
    # in-kernel lane-concat of the three dy-shifted slabs.
    w2g = jnp.stack(
        [jnp.concatenate([w2[dy * 3 + dx] for dy in range(3)], axis=0)
         for dx in range(3)], axis=0)
    cd = compute_dtype
    return (w1.astype(cd), b1, w2g.astype(cd), b2, w3.astype(cd), b3,
            wc1.astype(cd), bc1, wh.astype(cd), bh, ww.astype(cd), bw)


def _tpu_vmem_capacity_bytes():
    try:
        return int(pltpu.get_tpu_info().vmem_capacity_bytes)
    except Exception:
        return 64 * 2**20   # conservative fallback (v7x per-core VMEM)


# ----------------------------------------------------------------------------
# Wrappers: NHWC core entry point + NCHW compatibility wrapper (torch layout).
# ----------------------------------------------------------------------------
def bottleneck_forward_nhwc(x_nhwc, params, compute_dtype=jnp.bfloat16):
    x = x_nhwc.astype(jnp.float32)
    N, H, W, Cin = x.shape
    folded = _fold_params(params)
    kargs = _prep_kernel_args(folded, compute_dtype)
    Wd = folded[0].shape[1]
    Cout = folded[4].shape[1]
    assert Cin == Cout, \
        "downsample=None path requires inplanes == planes*expansion"

    # TODO(synk): for production feature maps (e.g. 56x56x256) add an H-tile
    # grid axis with a 1-row halo and split CoordAtt into a reduce-then-apply
    # two-pass; single-buffer the constant weight operands
    # (pipeline_mode=pl.Buffered(1)); and keep activations NHWC/bf16 across
    # blocks so the NCHW<->NHWC wrapper transposes disappear entirely.

    def _fixed_spec(a):
        nd = a.ndim
        return pl.BlockSpec(a.shape, lambda b, _nd=nd: (0,) * _nd)

    # VMEM budget: double-buffered in/out blocks + (double-buffered) weights +
    # bf16 halo scratch + in-kernel intermediates, with 2x headroom, clamped to
    # <= 3/4 of physical VMEM (<= 48 MiB on v7x).
    io_bytes = 2 * 2 * H * W * max(Cin, Cout) * 4
    w_bytes = 2 * sum(int(np.prod(a.shape)) * a.dtype.itemsize for a in kargs)
    scratch_bytes = (H + 2) * (W + 2) * Wd * 2
    interm_bytes = H * W * (3 * Wd * 2 + (2 * Wd + 3 * Cout) * 4) + H * H * W * 2
    est = io_bytes + w_bytes + scratch_bytes + interm_bytes
    cap = _tpu_vmem_capacity_bytes()
    vmem_limit = int(min(max(32 * 2**20, 2 * est), (3 * cap) // 4))

    grid_spec = pltpu.PrefetchScalarGridSpec(
        num_scalar_prefetch=0,
        grid=(N,),
        in_specs=[pl.BlockSpec((1, H, W, Cin), lambda b: (b, 0, 0, 0))]
        + [_fixed_spec(a) for a in kargs],
        out_specs=pl.BlockSpec((1, H, W, Cout), lambda b: (b, 0, 0, 0)),
        scratch_shapes=[pltpu.VMEM((H + 2, W + 2, Wd), compute_dtype)],
    )
    return pl.pallas_call(
        _bottleneck_kernel,
        out_shape=jax.ShapeDtypeStruct((N, H, W, Cout), jnp.float32),
        grid_spec=grid_spec,
        compiler_params=pltpu.CompilerParams(
            dimension_semantics=("parallel",),
            vmem_limit_bytes=vmem_limit),
    )(x, *kargs)


def bottleneck_forward(x_nchw, params, compute_dtype=jnp.bfloat16):
    x = jnp.transpose(x_nchw, (0, 2, 3, 1))                        # NCHW -> NHWC
    out = bottleneck_forward_nhwc(x, params, compute_dtype)
    return jnp.transpose(out, (0, 3, 1, 2))                        # back to NCHW


# ----------------------------------------------------------------------------
# Pure-JAX reference (same math incl. bf16 matmul operands, independent lowering).
# ----------------------------------------------------------------------------
def bottleneck_reference(x_nchw, params, compute_dtype=jnp.bfloat16):
    x = jnp.transpose(x_nchw, (0, 2, 3, 1)).astype(jnp.float32)
    N, H, W, Cin = x.shape
    w1, b1, w2, b2, w3, b3, wc1, bc1, wh, bh, ww, bw = _fold_params(params)
    cd = compute_dtype

    def mm(a, w):
        return jax.lax.dot_general(
            a.astype(cd), w.astype(cd),
            (((a.ndim - 1,), (0,)), ((), ())),
            preferred_element_type=jnp.float32)

    t1 = jnp.maximum(mm(x, w1) + b1[0], 0.0)
    xp = jnp.pad(t1, ((0, 0), (1, 1), (1, 1), (0, 0)))
    acc = jnp.zeros((N, H, W, w2.shape[2]), jnp.float32)
    for k in range(9):
        dy, dx = k // 3, k % 3
        acc = acc + mm(xp[:, dy:dy + H, dx:dx + W, :], w2[k])
    t2 = jnp.maximum(acc + b2[0], 0.0)
    t3 = mm(t2, w3) + b3[0]

    xh = t3.mean(axis=2)                                   # (N, H, Cout)
    xw = t3.mean(axis=1)                                   # (N, W, Cout)
    y = jnp.concatenate([xh, xw], axis=1)
    y = mm(y, wc1) + bc1[0]
    y = y * (jnp.clip(y + 3.0, 0.0, 6.0) / 6.0)
    a_h = jax.nn.sigmoid(mm(y[:, :H], wh) + bh[0])
    a_w = jax.nn.sigmoid(mm(y[:, H:], ww) + bw[0])
    out = t3 * a_w[:, None, :, :] * a_h[:, :, None, :]
    out = jnp.maximum(out + x, 0.0)
    return jnp.transpose(out, (0, 3, 1, 2))


if __name__ == "__main__":
    key = jax.random.PRNGKey(0)
    kx, kp = jax.random.split(key)

    inplanes, planes = 16, 4          # width = 4, out channels = planes*4 = 16
    N, H, W = 2, 16, 16
    x = jax.random.normal(kx, (N, inplanes, H, W), jnp.float32)    # NCHW input
    params = init_params(kp, inplanes, planes)

    out = bottleneck_forward(x, params)
    jax.block_until_ready(out)

    ref = bottleneck_reference(x, params)
    assert out.shape == (N, planes * 4, H, W)
    np.testing.assert_allclose(np.asarray(out), np.asarray(ref), atol=1e-2, rtol=1e-2)
    print("KERNEL_OK")
</pallas_src>

<mosaic_0001>
module attributes {stable_mosaic.version = 11 : i64} {
  func.func @_bottleneck_kernel(%arg0: i32, %arg1: memref<1x16x16x16xf32, #tpu.memory_space<vmem>>, %arg2: memref<16x4xbf16, #tpu.memory_space<vmem>>, %arg3: memref<1x4xf32, #tpu.memory_space<vmem>>, %arg4: memref<3x12x4xbf16, #tpu.memory_space<vmem>>, %arg5: memref<1x4xf32, #tpu.memory_space<vmem>>, %arg6: memref<4x16xbf16, #tpu.memory_space<vmem>>, %arg7: memref<1x16xf32, #tpu.memory_space<vmem>>, %arg8: memref<16x8xbf16, #tpu.memory_space<vmem>>, %arg9: memref<1x8xf32, #tpu.memory_space<vmem>>, %arg10: memref<8x16xbf16, #tpu.memory_space<vmem>>, %arg11: memref<1x16xf32, #tpu.memory_space<vmem>>, %arg12: memref<8x16xbf16, #tpu.memory_space<vmem>>, %arg13: memref<1x16xf32, #tpu.memory_space<vmem>>, %arg14: memref<1x16x16x16xf32, #tpu.memory_space<vmem>>, %arg15: memref<18x18x4xbf16, #tpu.memory_space<vmem>>) attributes {dimension_semantics = [#tpu.dimension_semantics<parallel>], iteration_bounds = array<i64: 2>, scalar_prefetch = 0 : i64, scratch_operands = 1 : i64, tpu.core_type = #tpu.core_type<tc>, window_params = [{transform_indices = @transform_0, window_bounds = array<i64: 1, 16, 16, 16>}, {pipeline_mode = #tpu.pipeline_mode<synchronous>, transform_indices = @transform_1, window_bounds = array<i64: 16, 4>}, {pipeline_mode = #tpu.pipeline_mode<synchronous>, transform_indices = @transform_2, window_bounds = array<i64: 1, 4>}, {pipeline_mode = #tpu.pipeline_mode<synchronous>, transform_indices = @transform_3, window_bounds = array<i64: 3, 12, 4>}, {pipeline_mode = #tpu.pipeline_mode<synchronous>, transform_indices = @transform_4, window_bounds = array<i64: 1, 4>}, {pipeline_mode = #tpu.pipeline_mode<synchronous>, transform_indices = @transform_5, window_bounds = array<i64: 4, 16>}, {pipeline_mode = #tpu.pipeline_mode<synchronous>, transform_indices = @transform_6, window_bounds = array<i64: 1, 16>}, {pipeline_mode = #tpu.pipeline_mode<synchronous>, transform_indices = @transform_7, window_bounds = array<i64: 16, 8>}, {pipeline_mode = #tpu.pipeline_mode<synchronous>, transform_indices = @transform_8, window_bounds = array<i64: 1, 8>}, {pipeline_mode = #tpu.pipeline_mode<synchronous>, transform_indices = @transform_9, window_bounds = array<i64: 8, 16>}, {pipeline_mode = #tpu.pipeline_mode<synchronous>, transform_indices = @transform_10, window_bounds = array<i64: 1, 16>}, {pipeline_mode = #tpu.pipeline_mode<synchronous>, transform_indices = @transform_11, window_bounds = array<i64: 8, 16>}, {pipeline_mode = #tpu.pipeline_mode<synchronous>, transform_indices = @transform_12, window_bounds = array<i64: 1, 16>}, {transform_indices = @transform_13, window_bounds = array<i64: 1, 16, 16, 16>}]} {
    %c0 = arith.constant 0 : index
    %c0_0 = arith.constant 0 : index
    %c0_1 = arith.constant 0 : index
    %c0_2 = arith.constant 0 : index
    %0 = vector.load %arg1[%c0, %c0_0, %c0_1, %c0_2] : memref<1x16x16x16xf32, #tpu.memory_space<vmem>>, vector<1x16x16x16xf32>
    %1 = vector.shape_cast %0 : vector<1x16x16x16xf32> to vector<16x16x16xf32>
    %2 = vector.shape_cast %1 : vector<16x16x16xf32> to vector<256x16xf32>
    %3 = arith.truncf %2 : vector<256x16xf32> to vector<256x16xbf16>
    %c0_3 = arith.constant 0 : index
    %c0_4 = arith.constant 0 : index
    %4 = vector.load %arg2[%c0_3, %c0_4] : memref<16x4xbf16, #tpu.memory_space<vmem>>, vector<16x4xbf16>
    %cst = arith.constant dense<0.000000e+00> : vector<256x4xf32>
    %5 = tpu.matmul %3, %4, %cst {dimension_numbers = #tpu.dot_dimension_numbers<[1], [0], [0], [1], [0, 0, 1, 1], [], []>} : vector<256x16xbf16>, vector<16x4xbf16>, vector<256x4xf32> -> vector<256x4xf32>
    %c0_5 = arith.constant 0 : index
    %c0_6 = arith.constant 0 : index
    %6 = vector.load %arg3[%c0_5, %c0_6] : memref<1x4xf32, #tpu.memory_space<vmem>>, vector<1x4xf32>
    %7 = vector.broadcast %6 : vector<1x4xf32> to vector<256x4xf32>
    %8 = arith.addf %5, %7 : vector<256x4xf32>
    %cst_7 = arith.constant 0.000000e+00 : f32
    %9 = vector.broadcast %cst_7 : f32 to vector<256x4xf32>
    %10 = arith.maximumf %8, %9 : vector<256x4xf32>
    %cst_8 = arith.constant 0.000000e+00 : bf16
    %11 = vector.broadcast %cst_8 : bf16 to vector<1x18x4xbf16>
    %cst_9 = arith.constant 0.000000e+00 : bf16
    %12 = vector.broadcast %cst_9 : bf16 to vector<18x1x4xbf16>
    %c0_10 = arith.constant 0 : index
    %c0_11 = arith.constant 0 : index
    %c0_12 = arith.constant 0 : index
    %13 = vector.load %arg15[%c0_10, %c0_11, %c0_12] : memref<18x18x4xbf16, #tpu.memory_space<vmem>>, vector<1x18x4xbf16>
    tpu.vector_store %arg15[%c0_10, %c0_11, %c0_12], %11 {strides = array<i32>} : memref<18x18x4xbf16, #tpu.memory_space<vmem>>, vector<1x18x4xbf16>,
    %c17 = arith.constant 17 : index
    %c0_13 = arith.constant 0 : index
    %c0_14 = arith.constant 0 : index
    %14 = vector.load %arg15[%c17, %c0_13, %c0_14] : memref<18x18x4xbf16, #tpu.memory_space<vmem>>, vector<1x18x4xbf16>
    tpu.vector_store %arg15[%c17, %c0_13, %c0_14], %11 {strides = array<i32>} : memref<18x18x4xbf16, #tpu.memory_space<vmem>>, vector<1x18x4xbf16>,
    %c0_15 = arith.constant 0 : index
    %c0_16 = arith.constant 0 : index
    %c0_17 = arith.constant 0 : index
    %15 = vector.load %arg15[%c0_15, %c0_16, %c0_17] : memref<18x18x4xbf16, #tpu.memory_space<vmem>>, vector<18x1x4xbf16>
    tpu.vector_store %arg15[%c0_15, %c0_16, %c0_17], %12 {strides = array<i32>} : memref<18x18x4xbf16, #tpu.memory_space<vmem>>, vector<18x1x4xbf16>,
    %c0_18 = arith.constant 0 : index
    %c17_19 = arith.constant 17 : index
    %c0_20 = arith.constant 0 : index
    %16 = vector.load %arg15[%c0_18, %c17_19, %c0_20] : memref<18x18x4xbf16, #tpu.memory_space<vmem>>, vector<18x1x4xbf16>
    tpu.vector_store %arg15[%c0_18, %c17_19, %c0_20], %12 {strides = array<i32>} : memref<18x18x4xbf16, #tpu.memory_space<vmem>>, vector<18x1x4xbf16>,
    %17 = vector.shape_cast %10 : vector<256x4xf32> to vector<16x16x4xf32>
    %18 = arith.truncf %17 : vector<16x16x4xf32> to vector<16x16x4xbf16>
    %c1 = arith.constant 1 : index
    %c1_21 = arith.constant 1 : index
    %c0_22 = arith.constant 0 : index
    %19 = vector.load %arg15[%c1, %c1_21, %c0_22] : memref<18x18x4xbf16, #tpu.memory_space<vmem>>, vector<16x16x4xbf16>
    tpu.vector_store %arg15[%c1, %c1_21, %c0_22], %18 {strides = array<i32>} : memref<18x18x4xbf16, #tpu.memory_space<vmem>>, vector<16x16x4xbf16>,
    %c0_23 = arith.constant 0 : index
    %c0_24 = arith.constant 0 : index
    %c0_25 = arith.constant 0 : index
    %20 = vector.load %arg15[%c0_23, %c0_24, %c0_25] : memref<18x18x4xbf16, #tpu.memory_space<vmem>>, vector<18x16x4xbf16>
    %21 = vector.extract_strided_slice %20 {offsets = [0, 0, 0], sizes = [16, 16, 4], strides = [1, 1, 1]} : vector<18x16x4xbf16> to vector<16x16x4xbf16>
    %22 = vector.extract_strided_slice %20 {offsets = [1, 0, 0], sizes = [16, 16, 4], strides = [1, 1, 1]} : vector<18x16x4xbf16> to vector<16x16x4xbf16>
    %23 = vector.extract_strided_slice %20 {offsets = [2, 0, 0], sizes = [16, 16, 4], strides = [1, 1, 1]} : vector<18x16x4xbf16> to vector<16x16x4xbf16>
    %24 = tpu.concatenate %21, %22, %23 in 2 : vector<16x16x4xbf16>, vector<16x16x4xbf16>, vector<16x16x4xbf16> -> vector<16x16x12xbf16>
    %25 = vector.shape_cast %24 : vector<16x16x12xbf16> to vector<256x12xbf16>
    %c0_26 = arith.constant 0 : index
    %c0_27 = arith.constant 0 : index
    %c0_28 = arith.constant 0 : index
    %26 = vector.load %arg4[%c0_26, %c0_27, %c0_28] : memref<3x12x4xbf16, #tpu.memory_space<vmem>>, vector<1x12x4xbf16>
    %27 = vector.shape_cast %26 : vector<1x12x4xbf16> to vector<12x4xbf16>
    %cst_29 = arith.constant dense<0.000000e+00> : vector<256x4xf32>
    %28 = tpu.matmul %25, %27, %cst_29 {dimension_numbers = #tpu.dot_dimension_numbers<[1], [0], [0], [1], [0, 0, 1, 1], [], []>} : vector<256x12xbf16>, vector<12x4xbf16>, vector<256x4xf32> -> vector<256x4xf32>
    %c0_30 = arith.constant 0 : index
    %c1_31 = arith.constant 1 : index
    %c0_32 = arith.constant 0 : index
    %29 = vector.load %arg15[%c0_30, %c1_31, %c0_32] : memref<18x18x4xbf16, #tpu.memory_space<vmem>>, vector<18x16x4xbf16>
    %30 = vector.extract_strided_slice %29 {offsets = [0, 0, 0], sizes = [16, 16, 4], strides = [1, 1, 1]} : vector<18x16x4xbf16> to vector<16x16x4xbf16>
    %31 = vector.extract_strided_slice %29 {offsets = [1, 0, 0], sizes = [16, 16, 4], strides = [1, 1, 1]} : vector<18x16x4xbf16> to vector<16x16x4xbf16>
    %32 = vector.extract_strided_slice %29 {offsets = [2, 0, 0], sizes = [16, 16, 4], strides = [1, 1, 1]} : vector<18x16x4xbf16> to vector<16x16x4xbf16>
    %33 = tpu.concatenate %30, %31, %32 in 2 : vector<16x16x4xbf16>, vector<16x16x4xbf16>, vector<16x16x4xbf16> -> vector<16x16x12xbf16>
    %34 = vector.shape_cast %33 : vector<16x16x12xbf16> to vector<256x12xbf16>
    %c1_33 = arith.constant 1 : index
    %c0_34 = arith.constant 0 : index
    %c0_35 = arith.constant 0 : index
    %35 = vector.load %arg4[%c1_33, %c0_34, %c0_35] : memref<3x12x4xbf16, #tpu.memory_space<vmem>>, vector<1x12x4xbf16>
    %36 = vector.shape_cast %35 : vector<1x12x4xbf16> to vector<12x4xbf16>
    %cst_36 = arith.constant dense<0.000000e+00> : vector<256x4xf32>
    %37 = tpu.matmul %34, %36, %cst_36 {dimension_numbers = #tpu.dot_dimension_numbers<[1], [0], [0], [1], [0, 0, 1, 1], [], []>} : vector<256x12xbf16>, vector<12x4xbf16>, vector<256x4xf32> -> vector<256x4xf32>
    %38 = arith.addf %28, %37 : vector<256x4xf32>
    %c0_37 = arith.constant 0 : index
    %c2 = arith.constant 2 : index
    %c0_38 = arith.constant 0 : index
    %39 = vector.load %arg15[%c0_37, %c2, %c0_38] : memref<18x18x4xbf16, #tpu.memory_space<vmem>>, vector<18x16x4xbf16>
    %40 = vector.extract_strided_slice %39 {offsets = [0, 0, 0], sizes = [16, 16, 4], strides = [1, 1, 1]} : vector<18x16x4xbf16> to vector<16x16x4xbf16>
    %41 = vector.extract_strided_slice %39 {offsets = [1, 0, 0], sizes = [16, 16, 4], strides = [1, 1, 1]} : vector<18x16x4xbf16> to vector<16x16x4xbf16>
    %42 = vector.extract_strided_slice %39 {offsets = [2, 0, 0], sizes = [16, 16, 4], strides = [1, 1, 1]} : vector<18x16x4xbf16> to vector<16x16x4xbf16>
    %43 = tpu.concatenate %40, %41, %42 in 2 : vector<16x16x4xbf16>, vector<16x16x4xbf16>, vector<16x16x4xbf16> -> vector<16x16x12xbf16>
    %44 = vector.shape_cast %43 : vector<16x16x12xbf16> to vector<256x12xbf16>
    %c2_39 = arith.constant 2 : index
    %c0_40 = arith.constant 0 : index
    %c0_41 = arith.constant 0 : index
    %45 = vector.load %arg4[%c2_39, %c0_40, %c0_41] : memref<3x12x4xbf16, #tpu.memory_space<vmem>>, vector<1x12x4xbf16>
    %46 = vector.shape_cast %45 : vector<1x12x4xbf16> to vector<12x4xbf16>
    %cst_42 = arith.constant dense<0.000000e+00> : vector<256x4xf32>
    %47 = tpu.matmul %44, %46, %cst_42 {dimension_numbers = #tpu.dot_dimension_numbers<[1], [0], [0], [1], [0, 0, 1, 1], [], []>} : vector<256x12xbf16>, vector<12x4xbf16>, vector<256x4xf32> -> vector<256x4xf32>
    %48 = arith.addf %38, %47 : vector<256x4xf32>
    %c0_43 = arith.constant 0 : index
    %c0_44 = arith.constant 0 : index
    %49 = vector.load %arg5[%c0_43, %c0_44] : memref<1x4xf32, #tpu.memory_space<vmem>>, vector<1x4xf32>
    %50 = vector.broadcast %49 : vector<1x4xf32> to vector<256x4xf32>
    %51 = arith.addf %48, %50 : vector<256x4xf32>
    %cst_45 = arith.constant 0.000000e+00 : f32
    %52 = vector.broadcast %cst_45 : f32 to vector<256x4xf32>
    %53 = arith.maximumf %51, %52 : vector<256x4xf32>
    %54 = arith.truncf %53 : vector<256x4xf32> to vector<256x4xbf16>
    %c0_46 = arith.constant 0 : index
    %c0_47 = arith.constant 0 : index
    %55 = vector.load %arg6[%c0_46, %c0_47] : memref<4x16xbf16, #tpu.memory_space<vmem>>, vector<4x16xbf16>
    %cst_48 = arith.constant dense<0.000000e+00> : vector<256x16xf32>
    %56 = tpu.matmul %54, %55, %cst_48 {dimension_numbers = #tpu.dot_dimension_numbers<[1], [0], [0], [1], [0, 0, 1, 1], [], []>} : vector<256x4xbf16>, vector<4x16xbf16>, vector<256x16xf32> -> vector<256x16xf32>
    %c0_49 = arith.constant 0 : index
    %c0_50 = arith.constant 0 : index
    %57 = vector.load %arg7[%c0_49, %c0_50] : memref<1x16xf32, #tpu.memory_space<vmem>>, vector<1x16xf32>
    %58 = vector.broadcast %57 : vector<1x16xf32> to vector<256x16xf32>
    %59 = arith.addf %56, %58 : vector<256x16xf32>
    %60 = vector.shape_cast %59 : vector<256x16xf32> to vector<16x16x16xf32>
    %61 = tpu.iota {dimensions = array<i32: 1>} : vector<16x256xi32>
    %62 = tpu.iota {dimensions = array<i32: 0>} : vector<16x256xi32>
    %c16_i32 = arith.constant 16 : i32
    %63 = vector.broadcast %c16_i32 : i32 to vector<16x256xi32>
    %64 = arith.muli %62, %63 : vector<16x256xi32>
    %65 = arith.cmpi sge, %61, %64 : vector<16x256xi32>
    %c16_i32_51 = arith.constant 16 : i32
    %66 = vector.broadcast %c16_i32_51 : i32 to vector<16x256xi32>
    %67 = arith.addi %64, %66 : vector<16x256xi32>
    %68 = arith.cmpi slt, %61, %67 : vector<16x256xi32>
    %69 = arith.andi %65, %68 : vector<16x256xi1>
    %cst_52 = arith.constant 6.250000e-02 : f32
    %cst_53 = arith.constant 0.000000e+00 : f32
    %70 = vector.broadcast %cst_52 : f32 to vector<16x256xf32>
    %71 = vector.broadcast %cst_53 : f32 to vector<16x256xf32>
    %72 = arith.select %69, %70, %71 : vector<16x256xi1>, vector<16x256xf32>
    %73 = arith.truncf %72 : vector<16x256xf32> to vector<16x256xbf16>
    %74 = arith.truncf %59 : vector<256x16xf32> to vector<256x16xbf16>
    %cst_54 = arith.constant dense<0.000000e+00> : vector<16x16xf32>
    %75 = tpu.matmul %73, %74, %cst_54 {dimension_numbers = #tpu.dot_dimension_numbers<[1], [0], [0], [1], [0, 0, 1, 1], [], []>} : vector<16x256xbf16>, vector<256x16xbf16>, vector<16x16xf32> -> vector<16x16xf32>
    %cst_55 = arith.constant dense<0.000000e+00> : vector<16x16xf32>
    %76 = vector.multi_reduction <add>, %60, %cst_55 [0] : vector<16x16x16xf32> to vector<16x16xf32>
    %cst_56 = arith.constant 1.600000e+01 : f32
    %77 = vector.broadcast %cst_56 : f32 to vector<16x16xf32>
    %78 = arith.divf %76, %77 : vector<16x16xf32>
    %79 = tpu.concatenate %75, %78 in 0 : vector<16x16xf32>, vector<16x16xf32> -> vector<32x16xf32>
    %80 = arith.truncf %79 : vector<32x16xf32> to vector<32x16xbf16>
    %c0_57 = arith.constant 0 : index
    %c0_58 = arith.constant 0 : index
    %81 = vector.load %arg8[%c0_57, %c0_58] : memref<16x8xbf16, #tpu.memory_space<vmem>>, vector<16x8xbf16>
    %cst_59 = arith.constant dense<0.000000e+00> : vector<32x8xf32>
    %82 = tpu.matmul %80, %81, %cst_59 {dimension_numbers = #tpu.dot_dimension_numbers<[1], [0], [0], [1], [0, 0, 1, 1], [], []>} : vector<32x16xbf16>, vector<16x8xbf16>, vector<32x8xf32> -> vector<32x8xf32>
    %c0_60 = arith.constant 0 : index
    %c0_61 = arith.constant 0 : index
    %83 = vector.load %arg9[%c0_60, %c0_61] : memref<1x8xf32, #tpu.memory_space<vmem>>, vector<1x8xf32>
    %84 = vector.broadcast %83 : vector<1x8xf32> to vector<32x8xf32>
    %85 = arith.addf %82, %84 : vector<32x8xf32>
    %cst_62 = arith.constant 3.000000e+00 : f32
    %86 = vector.broadcast %cst_62 : f32 to vector<32x8xf32>
    %87 = arith.addf %85, %86 : vector<32x8xf32>
    %cst_63 = arith.constant 0.000000e+00 : f32
    %cst_64 = arith.constant 6.000000e+00 : f32
    %88 = vector.broadcast %cst_63 : f32 to vector<32x8xf32>
    %89 = arith.maximumf %88, %87 : vector<32x8xf32>
    %90 = vector.broadcast %cst_64 : f32 to vector<32x8xf32>
    %91 = arith.minimumf %90, %89 : vector<32x8xf32>
    %cst_65 = arith.constant 0.166666672 : f32
    %92 = vector.broadcast %cst_65 : f32 to vector<32x8xf32>
    %93 = arith.mulf %91, %92 : vector<32x8xf32>
    %94 = arith.mulf %85, %93 : vector<32x8xf32>
    %95 = arith.truncf %94 : vector<32x8xf32> to vector<32x8xbf16>
    %96 = vector.extract_strided_slice %95 {offsets = [0, 0], sizes = [16, 8], strides = [1, 1]} : vector<32x8xbf16> to vector<16x8xbf16>
    %c0_66 = arith.constant 0 : index
    %c0_67 = arith.constant 0 : index
    %97 = vector.load %arg10[%c0_66, %c0_67] : memref<8x16xbf16, #tpu.memory_space<vmem>>, vector<8x16xbf16>
    %cst_68 = arith.constant dense<0.000000e+00> : vector<16x16xf32>
    %98 = tpu.matmul %96, %97, %cst_68 {dimension_numbers = #tpu.dot_dimension_numbers<[1], [0], [0], [1], [0, 0, 1, 1], [], []>} : vector<16x8xbf16>, vector<8x16xbf16>, vector<16x16xf32> -> vector<16x16xf32>
    %c0_69 = arith.constant 0 : index
    %c0_70 = arith.constant 0 : index
    %99 = vector.load %arg11[%c0_69, %c0_70] : memref<1x16xf32, #tpu.memory_space<vmem>>, vector<1x16xf32>
    %100 = vector.broadcast %99 : vector<1x16xf32> to vector<16x16xf32>
    %101 = arith.addf %98, %100 : vector<16x16xf32>
    %102 = arith.negf %101 : vector<16x16xf32>
    %103 = math.exp %102 : vector<16x16xf32>
    %cst_71 = arith.constant 1.000000e+00 : f32
    %104 = vector.broadcast %cst_71 : f32 to vector<16x16xf32>
    %105 = arith.addf %104, %103 : vector<16x16xf32>
    %106 = arith.divf %104, %105 : vector<16x16xf32>
    %107 = vector.extract_strided_slice %95 {offsets = [16, 0], sizes = [16, 8], strides = [1, 1]} : vector<32x8xbf16> to vector<16x8xbf16>
    %c0_72 = arith.constant 0 : index
    %c0_73 = arith.constant 0 : index
    %108 = vector.load %arg12[%c0_72, %c0_73] : memref<8x16xbf16, #tpu.memory_space<vmem>>, vector<8x16xbf16>
    %cst_74 = arith.constant dense<0.000000e+00> : vector<16x16xf32>
    %109 = tpu.matmul %107, %108, %cst_74 {dimension_numbers = #tpu.dot_dimension_numbers<[1], [0], [0], [1], [0, 0, 1, 1], [], []>} : vector<16x8xbf16>, vector<8x16xbf16>, vector<16x16xf32> -> vector<16x16xf32>
    %c0_75 = arith.constant 0 : index
    %c0_76 = arith.constant 0 : index
    %110 = vector.load %arg13[%c0_75, %c0_76] : memref<1x16xf32, #tpu.memory_space<vmem>>, vector<1x16xf32>
    %111 = vector.broadcast %110 : vector<1x16xf32> to vector<16x16xf32>
    %112 = arith.addf %109, %111 : vector<16x16xf32>
    %113 = arith.negf %112 : vector<16x16xf32>
    %114 = math.exp %113 : vector<16x16xf32>
    %cst_77 = arith.constant 1.000000e+00 : f32
    %115 = vector.broadcast %cst_77 : f32 to vector<16x16xf32>
    %116 = arith.addf %115, %114 : vector<16x16xf32>
    %117 = arith.divf %115, %116 : vector<16x16xf32>
    %118 = vector.shape_cast %117 : vector<16x16xf32> to vector<1x16x16xf32>
    %119 = vector.broadcast %118 : vector<1x16x16xf32> to vector<16x16x16xf32>
    %120 = arith.mulf %60, %119 : vector<16x16x16xf32>
    %121 = vector.shape_cast %106 : vector<16x16xf32> to vector<16x1x16xf32>
    %122 = vector.broadcast %121 : vector<16x1x16xf32> to vector<16x16x16xf32>
    %123 = arith.mulf %120, %122 : vector<16x16x16xf32>
    %124 = arith.addf %123, %1 : vector<16x16x16xf32>
    %cst_78 = arith.constant 0.000000e+00 : f32
    %125 = vector.broadcast %cst_78 : f32 to vector<16x16x16xf32>
    %126 = arith.maximumf %124, %125 : vector<16x16x16xf32>
    %c0_79 = arith.constant 0 : index
    %c0_80 = arith.constant 0 : index
    %c0_81 = arith.constant 0 : index
    %c0_82 = arith.constant 0 : index
    %127 = vector.load %arg14[%c0_79, %c0_80, %c0_81, %c0_82] : memref<1x16x16x16xf32, #tpu.memory_space<vmem>>, vector<1x16x16x16xf32>
    %128 = vector.shape_cast %127 : vector<1x16x16x16xf32> to vector<16x16x16xf32>
    %129 = vector.shape_cast %126 : vector<16x16x16xf32> to vector<1x16x16x16xf32>
    tpu.vector_store %arg14[%c0_79, %c0_80, %c0_81, %c0_82], %129 {strides = array<i32>} : memref<1x16x16x16xf32, #tpu.memory_space<vmem>>, vector<1x16x16x16xf32>,
    return
  }
  func.func @transform_0(%arg0: i32) -> (i32, i32, i32, i32) {
    %c0_i32 = arith.constant 0 : i32
    %c0_i32_0 = arith.constant 0 : i32
    %c0_i32_1 = arith.constant 0 : i32
    %c0_i32_2 = arith.constant 0 : i32
    return %arg0, %c0_i32, %c0_i32_0, %c0_i32_1 : i32, i32, i32, i32
  }
  func.func @transform_1(%arg0: i32) -> (i32, i32) {
    %c0_i32 = arith.constant 0 : i32
    %c0_i32_0 = arith.constant 0 : i32
    %c0_i32_1 = arith.constant 0 : i32
    return %c0_i32, %c0_i32_0 : i32, i32
  }
  func.func @transform_2(%arg0: i32) -> (i32, i32) {
    %c0_i32 = arith.constant 0 : i32
    %c0_i32_0 = arith.constant 0 : i32
    %c0_i32_1 = arith.constant 0 : i32
    return %c0_i32, %c0_i32_0 : i32, i32
  }
  func.func @transform_3(%arg0: i32) -> (i32, i32, i32) {
    %c0_i32 = arith.constant 0 : i32
    %c0_i32_0 = arith.constant 0 : i32
    %c0_i32_1 = arith.constant 0 : i32
    %c0_i32_2 = arith.constant 0 : i32
    return %c0_i32, %c0_i32_0, %c0_i32_1 : i32, i32, i32
  }
  func.func @transform_4(%arg0: i32) -> (i32, i32) {
    %c0_i32 = arith.constant 0 : i32
    %c0_i32_0 = arith.constant 0 : i32
    %c0_i32_1 = arith.constant 0 : i32
    return %c0_i32, %c0_i32_0 : i32, i32
  }
  func.func @transform_5(%arg0: i32) -> (i32, i32) {
    %c0_i32 = arith.constant 0 : i32
    %c0_i32_0 = arith.constant 0 : i32
    %c0_i32_1 = arith.constant 0 : i32
    return %c0_i32, %c0_i32_0 : i32, i32
  }
  func.func @transform_6(%arg0: i32) -> (i32, i32) {
    %c0_i32 = arith.constant 0 : i32
    %c0_i32_0 = arith.constant 0 : i32
    %c0_i32_1 = arith.constant 0 : i32
    return %c0_i32, %c0_i32_0 : i32, i32
  }
  func.func @transform_7(%arg0: i32) -> (i32, i32) {
    %c0_i32 = arith.constant 0 : i32
    %c0_i32_0 = arith.constant 0 : i32
    %c0_i32_1 = arith.constant 0 : i32
    return %c0_i32, %c0_i32_0 : i32, i32
  }
  func.func @transform_8(%arg0: i32) -> (i32, i32) {
    %c0_i32 = arith.constant 0 : i32
    %c0_i32_0 = arith.constant 0 : i32
    %c0_i32_1 = arith.constant 0 : i32
    return %c0_i32, %c0_i32_0 : i32, i32
  }
  func.func @transform_9(%arg0: i32) -> (i32, i32) {
    %c0_i32 = arith.constant 0 : i32
    %c0_i32_0 = arith.constant 0 : i32
    %c0_i32_1 = arith.constant 0 : i32
    return %c0_i32, %c0_i32_0 : i32, i32
  }
  func.func @transform_10(%arg0: i32) -> (i32, i32) {
    %c0_i32 = arith.constant 0 : i32
    %c0_i32_0 = arith.constant 0 : i32
    %c0_i32_1 = arith.constant 0 : i32
    return %c0_i32, %c0_i32_0 : i32, i32
  }
  func.func @transform_11(%arg0: i32) -> (i32, i32) {
    %c0_i32 = arith.constant 0 : i32
    %c0_i32_0 = arith.constant 0 : i32
    %c0_i32_1 = arith.constant 0 : i32
    return %c0_i32, %c0_i32_0 : i32, i32
  }
  func.func @transform_12(%arg0: i32) -> (i32, i32) {
    %c0_i32 = arith.constant 0 : i32
    %c0_i32_0 = arith.constant 0 : i32
    %c0_i32_1 = arith.constant 0 : i32
    return %c0_i32, %c0_i32_0 : i32, i32
  }
  func.func @transform_13(%arg0: i32) -> (i32, i32, i32, i32) {
    %c0_i32 = arith.constant 0 : i32
    %c0_i32_0 = arith.constant 0 : i32
    %c0_i32_1 = arith.constant 0 : i32
    %c0_i32_2 = arith.constant 0 : i32
    return %arg0, %c0_i32, %c0_i32_0, %c0_i32_1 : i32, i32, i32, i32
  }
}

</mosaic_0001>

<llo_original>
// kernel: tpu_custom_call.1
$region0: #{tpu_custom_call.1}
  #allocation0 [shape = 'u32[]', space=smem, size = 0x4, offset = 0x4, fixed_abs, tag = 'smem constant byte address 0x4 - core index']
  #allocation1 [shape = 'u32[144,128]{1,0:T(1,128)}', space=vmem, size = 0x12000, scoped, tag = 'internal scratch']
  #allocation2 [shape = 'bf16[18,18,4]{2,1,0:T(8,128)(2,1)}', space=vmem, size = 0x1b000, scoped, tag = 'scratch operand']
  %s0 = inlined_call_operand.hbm [shape: f32[2,16,16,16], index: 0, kind: input, shape index: {}]
  %s1 = inlined_call_operand.vmem [shape: bf16[16,4], index: 1, kind: input, shape index: {}]
  %s2 = inlined_call_operand.vmem [shape: f32[1,4], index: 2, kind: input, shape index: {}]
  %s3 = inlined_call_operand.vmem [shape: bf16[3,12,4], index: 3, kind: input, shape index: {}]
  %s4 = inlined_call_operand.vmem [shape: f32[1,4], index: 4, kind: input, shape index: {}]
  %s5 = inlined_call_operand.vmem [shape: bf16[4,16], index: 5, kind: input, shape index: {}]
  %s6 = inlined_call_operand.vmem [shape: f32[1,16], index: 6, kind: input, shape index: {}]
  %s7 = inlined_call_operand.vmem [shape: bf16[16,8], index: 7, kind: input, shape index: {}]
  %s8 = inlined_call_operand.vmem [shape: f32[1,8], index: 8, kind: input, shape index: {}]
  %s9 = inlined_call_operand.vmem [shape: bf16[8,16], index: 9, kind: input, shape index: {}]
  %s10 = inlined_call_operand.vmem [shape: f32[1,16], index: 10, kind: input, shape index: {}]
  %s11 = inlined_call_operand.vmem [shape: bf16[8,16], index: 11, kind: input, shape index: {}]
  %s12 = inlined_call_operand.vmem [shape: f32[1,16], index: 12, kind: input, shape index: {}]
  %s13 = inlined_call_operand.hbm [shape: f32[2,16,16,16], index: 13, kind: output, shape index: {}]
  %s14 = sld [smem:[#allocation0]]
  $region89: #{tpu_custom_call.1} parent=0
    _
  %s16 = ssub.s32 1, %s14
  %s17 = scalar_select 0, %s16, %s14
  $region1: #{tpu_custom_call.1} parent=0
    #allocation3 [shape = 'u8[262144]{0}', space=vmem, size = 0x40000, scoped, tag = 'input window, operand 0']
    #allocation4 [shape = 's32[2]{0}', space=sflag, size = 0x8, scoped, tag = 'scoped memory for tpu_custom_call.1']
    #allocation5 [shape = 's32[2]{0}', space=sflag, size = 0x8, scoped, tag = 'scoped memory for tpu_custom_call.1']
    #allocation6 [shape = 'u8[262144]{0}', space=vmem, size = 0x40000, scoped, tag = 'output window, operand 0']
    %18 = vsyncpa [#allocation4], 0
    %s19 = scalar_lea.sflag [#allocation4], 1
    %20 = vsyncpa %s19, 0
    %21 = vsyncpa [#allocation5], 0
    %s22 = scalar_lea.sflag [#allocation5], 1
    %23 = vsyncpa %s22, 0
    loop: start=0, step=1, limit=4
    $region2: #{tpu_custom_call.1} parent=1 // loop_pre_header
      _
    $region3: #{tpu_custom_call.1} parent=1 // loop_header
      %s25 = sphi 0, %s29
      %p26 = scmp.ge.s32.totalorder %s25, 4
      %s35 = sphi 0, %s37
      %s38 = sphi 0, %s35
      %s39 = sphi 0, %s38
      %s55 = sphi 0, %s39
      %s59 = sphi 0, %s59
      %s61 = sphi 0, %s59
      %s62 = sphi 0, %s61
      %s76 = sphi 0, %s62
      %s80 = sphi 0, %s80
      %s82 = sphi 0, %s80
      %s83 = sphi 0, %s82
      %s97 = sphi 0, %s83
      %s101 = sphi 0, %s101
      %s103 = sphi 0, %s101
      %s104 = sphi 0, %s103
      %s118 = sphi 0, %s104
      %s122 = sphi 0, %s122
      %s124 = sphi 0, %s122
      %s125 = sphi 0, %s124
      %s139 = sphi 0, %s125
      %s143 = sphi 0, %s143
      %s145 = sphi 0, %s143
      %s146 = sphi 0, %s145
      %s160 = sphi 0, %s146
      %s164 = sphi 0, %s164
      %s166 = sphi 0, %s164
      %s167 = sphi 0, %s166
      %s181 = sphi 0, %s167
      %s185 = sphi 0, %s185
      %s187 = sphi 0, %s185
      %s188 = sphi 0, %s187
      %s202 = sphi 0, %s188
      %s206 = sphi 0, %s206
      %s208 = sphi 0, %s206
      %s209 = sphi 0, %s208
      %s223 = sphi 0, %s209
      %s227 = sphi 0, %s227
      %s229 = sphi 0, %s227
      %s230 = sphi 0, %s229
      %s244 = sphi 0, %s230
      %s248 = sphi 0, %s248
      %s250 = sphi 0, %s248
      %s251 = sphi 0, %s250
      %s265 = sphi 0, %s251
      %s269 = sphi 0, %s269
      %s271 = sphi 0, %s269
      %s272 = sphi 0, %s271
      %s286 = sphi 0, %s272
      %s290 = sphi 0, %s290
      %s292 = sphi 0, %s290
      %s293 = sphi 0, %s292
      %s307 = sphi 0, %s293
      %s313 = sphi 0, %s315
      %s316 = sphi 0, %s313
      %s317 = sphi 0, %s316
      %s333 = sphi 0, %s317
    $region4: #{tpu_custom_call.1} parent=1 // loop_header_branch
      %28 = sbr.rel (%p26) target = $region8
    $region5: #{tpu_custom_call.1} parent=1 // loop_body
      %s30 = ssub.s32 %s25, 1
      %s31 = ssub.s32 %s25, 2
      %s32 = sadd.s32 %s25, 1
      %s33 = ssub.s32 %s25, %s32
      %p34 = scmp.eq.s32.totalorder %s33, 0
      %s36 = sadd.s32 %s35, 1
      %s37 = scalar_select %p34, %s35, %s36
      %p40 = pneg %p34
      %p41 = scmp.eq.s32.totalorder %s25, 1
      %p42 = por %p40, %p41
      %p43 = scmp.ne.s32.totalorder %s35, %s38
      %p44 = scmp.eq.s32.totalorder %s25, 0
      %p45 = por %p43, %p44
      %p46 = scmp.ne.s32.totalorder %s35, %s38
      %p47 = scmp.eq.s32.totalorder %s30, 1
      %p48 = por %p46, %p47
      %p49 = scmp.ne.s32.totalorder %s38, %s39
      %p50 = scmp.eq.s32.totalorder %s30, 0
      %p51 = por %p49, %p50
      %p52 = scmp.ne.s32.totalorder %s38, %s39
      %p53 = scmp.eq.s32.totalorder %s31, 1
      %p54 = por %p52, %p53
      %p56 = scmp.ne.s32.totalorder %s39, %s55
      %p57 = scmp.eq.s32.totalorder %s31, 0
      %p58 = por %p56, %p57
      %s60 = sadd.s32 %s59, 1
      %p63 = scmp.eq.s32.totalorder %s25, 1
      %p64 = scmp.ne.s32.totalorder %s59, %s61
      %p65 = scmp.eq.s32.totalorder %s25, 0
      %p66 = por %p64, %p65
      %p67 = scmp.ne.s32.totalorder %s59, %s61
      %p68 = scmp.eq.s32.totalorder %s30, 1
      %p69 = por %p67, %p68
      %p70 = scmp.ne.s32.totalorder %s61, %s62
      %p71 = scmp.eq.s32.totalorder %s30, 0
      %p72 = por %p70, %p71
      %p73 = scmp.ne.s32.totalorder %s61, %s62
      %p74 = scmp.eq.s32.totalorder %s31, 1
      %p75 = por %p73, %p74
      %p77 = scmp.ne.s32.totalorder %s62, %s76
      %p78 = scmp.eq.s32.totalorder %s31, 0
      %p79 = por %p77, %p78
      %s81 = sadd.s32 %s80, 1
      %p84 = scmp.eq.s32.totalorder %s25, 1
      %p85 = scmp.ne.s32.totalorder %s80, %s82
      %p86 = scmp.eq.s32.totalorder %s25, 0
      %p87 = por %p85, %p86
      %p88 = scmp.ne.s32.totalorder %s80, %s82
      %p89 = scmp.eq.s32.totalorder %s30, 1
      %p90 = por %p88, %p89
      %p91 = scmp.ne.s32.totalorder %s82, %s83
      %p92 = scmp.eq.s32.totalorder %s30, 0
      %p93 = por %p91, %p92
      %p94 = scmp.ne.s32.totalorder %s82, %s83
      %p95 = scmp.eq.s32.totalorder %s31, 1
      %p96 = por %p94, %p95
      %p98 = scmp.ne.s32.totalorder %s83, %s97
      %p99 = scmp.eq.s32.totalorder %s31, 0
      %p100 = por %p98, %p99
      %s102 = sadd.s32 %s101, 1
      %p105 = scmp.eq.s32.totalorder %s25, 1
      %p106 = scmp.ne.s32.totalorder %s101, %s103
      %p107 = scmp.eq.s32.totalorder %s25, 0
      %p108 = por %p106, %p107
      %p109 = scmp.ne.s32.totalorder %s101, %s103
      %p110 = scmp.eq.s32.totalorder %s30, 1
      %p111 = por %p109, %p110
      %p112 = scmp.ne.s32.totalorder %s103, %s104
      %p113 = scmp.eq.s32.totalorder %s30, 0
      %p114 = por %p112, %p113
      %p115 = scmp.ne.s32.totalorder %s103, %s104
      %p116 = scmp.eq.s32.totalorder %s31, 1
      %p117 = por %p115, %p116
      %p119 = scmp.ne.s32.totalorder %s104, %s118
      %p120 = scmp.eq.s32.totalorder %s31, 0
      %p121 = por %p119, %p120
      %s123 = sadd.s32 %s122, 1
      %p126 = scmp.eq.s32.totalorder %s25, 1
      %p127 = scmp.ne.s32.totalorder %s122, %s124
      %p128 = scmp.eq.s32.totalorder %s25, 0
      %p129 = por %p127, %p128
      %p130 = scmp.ne.s32.totalorder %s122, %s124
      %p131 = scmp.eq.s32.totalorder %s30, 1
      %p132 = por %p130, %p131
      %p133 = scmp.ne.s32.totalorder %s124, %s125
      %p134 = scmp.eq.s32.totalorder %s30, 0
      %p135 = por %p133, %p134
      %p136 = scmp.ne.s32.totalorder %s124, %s125
      %p137 = scmp.eq.s32.totalorder %s31, 1
      %p138 = por %p136, %p137
      %p140 = scmp.ne.s32.totalorder %s125, %s139
      %p141 = scmp.eq.s32.totalorder %s31, 0
      %p142 = por %p140, %p141
      %s144 = sadd.s32 %s143, 1
      %p147 = scmp.eq.s32.totalorder %s25, 1
      %p148 = scmp.ne.s32.totalorder %s143, %s145
      %p149 = scmp.eq.s32.totalorder %s25, 0
      %p150 = por %p148, %p149
      %p151 = scmp.ne.s32.totalorder %s143, %s145
      %p152 = scmp.eq.s32.totalorder %s30, 1
      %p153 = por %p151, %p152
      %p154 = scmp.ne.s32.totalorder %s145, %s146
      %p155 = scmp.eq.s32.totalorder %s30, 0
      %p156 = por %p154, %p155
      %p157 = scmp.ne.s32.totalorder %s145, %s146
      %p158 = scmp.eq.s32.totalorder %s31, 1
      %p159 = por %p157, %p158
      %p161 = scmp.ne.s32.totalorder %s146, %s160
      %p162 = scmp.eq.s32.totalorder %s31, 0
      %p163 = por %p161, %p162
      %s165 = sadd.s32 %s164, 1
      %p168 = scmp.eq.s32.totalorder %s25, 1
      %p169 = scmp.ne.s32.totalorder %s164, %s166
      %p170 = scmp.eq.s32.totalorder %s25, 0
      %p171 = por %p169, %p170
      %p172 = scmp.ne.s32.totalorder %s164, %s166
      %p173 = scmp.eq.s32.totalorder %s30, 1
      %p174 = por %p172, %p173
      %p175 = scmp.ne.s32.totalorder %s166, %s167
      %p176 = scmp.eq.s32.totalorder %s30, 0
      %p177 = por %p175, %p176
      %p178 = scmp.ne.s32.totalorder %s166, %s167
      %p179 = scmp.eq.s32.totalorder %s31, 1
      %p180 = por %p178, %p179
      %p182 = scmp.ne.s32.totalorder %s167, %s181
      %p183 = scmp.eq.s32.totalorder %s31, 0
      %p184 = por %p182, %p183
      %s186 = sadd.s32 %s185, 1
      %p189 = scmp.eq.s32.totalorder %s25, 1
      %p190 = scmp.ne.s32.totalorder %s185, %s187
      %p191 = scmp.eq.s32.totalorder %s25, 0
      %p192 = por %p190, %p191
      %p193 = scmp.ne.s32.totalorder %s185, %s187
      %p194 = scmp.eq.s32.totalorder %s30, 1
      %p195 = por %p193, %p194
      %p196 = scmp.ne.s32.totalorder %s187, %s188
      %p197 = scmp.eq.s32.totalorder %s30, 0
      %p198 = por %p196, %p197
      %p199 = scmp.ne.s32.totalorder %s187, %s188
      %p200 = scmp.eq.s32.totalorder %s31, 1
      %p201 = por %p199, %p200
      %p203 = scmp.ne.s32.totalorder %s188, %s202
      %p204 = scmp.eq.s32.totalorder %s31, 0
      %p205 = por %p203, %p204
      %s207 = sadd.s32 %s206, 1
      %p210 = scmp.eq.s32.totalorder %s25, 1
      %p211 = scmp.ne.s32.totalorder %s206, %s208
      %p212 = scmp.eq.s32.totalorder %s25, 0
      %p213 = por %p211, %p212
      %p214 = scmp.ne.s32.totalorder %s206, %s208
      %p215 = scmp.eq.s32.totalorder %s30, 1
      %p216 = por %p214, %p215
      %p217 = scmp.ne.s32.totalorder %s208, %s209
      %p218 = scmp.eq.s32.totalorder %s30, 0
      %p219 = por %p217, %p218
      %p220 = scmp.ne.s32.totalorder %s208, %s209
      %p221 = scmp.eq.s32.totalorder %s31, 1
      %p222 = por %p220, %p221
      %p224 = scmp.ne.s32.totalorder %s209, %s223
      %p225 = scmp.eq.s32.totalorder %s31, 0
      %p226 = por %p224, %p225
      %s228 = sadd.s32 %s227, 1
      %p231 = scmp.eq.s32.totalorder %s25, 1
      %p232 = scmp.ne.s32.totalorder %s227, %s229
      %p233 = scmp.eq.s32.totalorder %s25, 0
      %p234 = por %p232, %p233
      %p235 = scmp.ne.s32.totalorder %s227, %s229
      %p236 = scmp.eq.s32.totalorder %s30, 1
      %p237 = por %p235, %p236
      %p238 = scmp.ne.s32.totalorder %s229, %s230
      %p239 = scmp.eq.s32.totalorder %s30, 0
      %p240 = por %p238, %p239
      %p241 = scmp.ne.s32.totalorder %s229, %s230
      %p242 = scmp.eq.s32.totalorder %s31, 1
      %p243 = por %p241, %p242
      %p245 = scmp.ne.s32.totalorder %s230, %s244
      %p246 = scmp.eq.s32.totalorder %s31, 0
      %p247 = por %p245, %p246
      %s249 = sadd.s32 %s248, 1
      %p252 = scmp.eq.s32.totalorder %s25, 1
      %p253 = scmp.ne.s32.totalorder %s248, %s250
      %p254 = scmp.eq.s32.totalorder %s25, 0
      %p255 = por %p253, %p254
      %p256 = scmp.ne.s32.totalorder %s248, %s250
      %p257 = scmp.eq.s32.totalorder %s30, 1
      %p258 = por %p256, %p257
      %p259 = scmp.ne.s32.totalorder %s250, %s251
      %p260 = scmp.eq.s32.totalorder %s30, 0
      %p261 = por %p259, %p260
      %p262 = scmp.ne.s32.totalorder %s250, %s251
      %p263 = scmp.eq.s32.totalorder %s31, 1
      %p264 = por %p262, %p263
      %p266 = scmp.ne.s32.totalorder %s251, %s265
      %p267 = scmp.eq.s32.totalorder %s31, 0
      %p268 = por %p266, %p267
      %s270 = sadd.s32 %s269, 1
      %p273 = scmp.eq.s32.totalorder %s25, 1
      %p274 = scmp.ne.s32.totalorder %s269, %s271
      %p275 = scmp.eq.s32.totalorder %s25, 0
      %p276 = por %p274, %p275
      %p277 = scmp.ne.s32.totalorder %s269, %s271
      %p278 = scmp.eq.s32.totalorder %s30, 1
      %p279 = por %p277, %p278
      %p280 = scmp.ne.s32.totalorder %s271, %s272
      %p281 = scmp.eq.s32.totalorder %s30, 0
      %p282 = por %p280, %p281
      %p283 = scmp.ne.s32.totalorder %s271, %s272
      %p284 = scmp.eq.s32.totalorder %s31, 1
      %p285 = por %p283, %p284
      %p287 = scmp.ne.s32.totalorder %s272, %s286
      %p288 = scmp.eq.s32.totalorder %s31, 0
      %p289 = por %p287, %p288
      %s291 = sadd.s32 %s290, 1
      %p294 = scmp.eq.s32.totalorder %s25, 1
      %p295 = scmp.ne.s32.totalorder %s290, %s292
      %p296 = scmp.eq.s32.totalorder %s25, 0
      %p297 = por %p295, %p296
      %p298 = scmp.ne.s32.totalorder %s290, %s292
      %p299 = scmp.eq.s32.totalorder %s30, 1
      %p300 = por %p298, %p299
      %p301 = scmp.ne.s32.totalorder %s292, %s293
      %p302 = scmp.eq.s32.totalorder %s30, 0
      %p303 = por %p301, %p302
      %p304 = scmp.ne.s32.totalorder %s292, %s293
      %p305 = scmp.eq.s32.totalorder %s31, 1
      %p306 = por %p304, %p305
      %p308 = scmp.ne.s32.totalorder %s293, %s307
      %p309 = scmp.eq.s32.totalorder %s31, 0
      %p310 = por %p308, %p309
      %s311 = ssub.s32 %s25, %s32
      %p312 = scmp.eq.s32.totalorder %s311, 0
      %s314 = sadd.s32 %s313, 1
      %s315 = scalar_select %p312, %s313, %s314
      %p318 = pneg %p312
      %p319 = scmp.eq.s32.totalorder %s25, 1
      %p320 = por %p318, %p319
      %p321 = scmp.ne.s32.totalorder %s313, %s316
      %p322 = scmp.eq.s32.totalorder %s25, 0
      %p323 = por %p321, %p322
      %p324 = scmp.ne.s32.totalorder %s313, %s316
      %p325 = scmp.eq.s32.totalorder %s30, 1
      %p326 = por %p324, %p325
      %p327 = scmp.ne.s32.totalorder %s316, %s317
      %p328 = scmp.eq.s32.totalorder %s30, 0
      %p329 = por %p327, %p328
      %p330 = scmp.ne.s32.totalorder %s316, %s317
      %p331 = scmp.eq.s32.totalorder %s31, 1
      %p332 = por %p330, %p331
      %p334 = scmp.ne.s32.totalorder %s317, %s333
      %p335 = scmp.eq.s32.totalorder %s31, 0
      %p336 = por %p334, %p335
      %p337 = scmp.le.s32.totalorder 1, %s25
      %p338 = scmp.lt.s32.totalorder %s25, 3
      %p339 = pnand %p337, %p338
      %p340 = pneg %p339
      // Predicated region
      $region9: #{tpu_custom_call.1} parent=5 // pred_check
        _
      $region10: #{tpu_custom_call.1} parent=5 // pred_check_branch
        %342 = sbr.rel (%p339) target = $region12
      $region11: #{tpu_custom_call.1} parent=5 // pred_region
        %s343 = ssub.s32 %s25, 1
        // Predicated region
        $region13: #{tpu_custom_call.1} parent=11 // pred_check
          %p344 = pneg %p72
        $region14: #{tpu_custom_call.1} parent=11 // pred_check_branch
          %346 = sbr.rel (%p344) target = $region16
        $region15: #{tpu_custom_call.1} parent=11 // pred_region
          _
        $region16: #{tpu_custom_call.1} parent=11 // pred_fallthru
          _
        // Predicated region
        $region17: #{tpu_custom_call.1} parent=11 // pred_check
          %p347 = pneg %p93
        $region18: #{tpu_custom_call.1} parent=11 // pred_check_branch
          %349 = sbr.rel (%p347) target = $region20
        $region19: #{tpu_custom_call.1} parent=11 // pred_region
          _
        $region20: #{tpu_custom_call.1} parent=11 // pred_fallthru
          _
        // Predicated region
        $region21: #{tpu_custom_call.1} parent=11 // pred_check
          %p350 = pneg %p114
        $region22: #{tpu_custom_call.1} parent=11 // pred_check_branch
          %352 = sbr.rel (%p350) target = $region24
        $region23: #{tpu_custom_call.1} parent=11 // pred_region
          _
        $region24: #{tpu_custom_call.1} parent=11 // pred_fallthru
          _
        // Predicated region
        $region25: #{tpu_custom_call.1} parent=11 // pred_check
          %p353 = pneg %p135
        $region26: #{tpu_custom_call.1} parent=11 // pred_check_branch
          %355 = sbr.rel (%p353) target = $region28
        $region27: #{tpu_custom_call.1} parent=11 // pred_region
          _
        $region28: #{tpu_custom_call.1} parent=11 // pred_fallthru
          _
        // Predicated region
        $region29: #{tpu_custom_call.1} parent=11 // pred_check
          %p356 = pneg %p156
        $region30: #{tpu_custom_call.1} parent=11 // pred_check_branch
          %358 = sbr.rel (%p356) target = $region32
        $region31: #{tpu_custom_call.1} parent=11 // pred_region
          _
        $region32: #{tpu_custom_call.1} parent=11 // pred_fallthru
          _
        // Predicated region
        $region33: #{tpu_custom_call.1} parent=11 // pred_check
          %p359 = pneg %p177
        $region34: #{tpu_custom_call.1} parent=11 // pred_check_branch
          %361 = sbr.rel (%p359) target = $region36
        $region35: #{tpu_custom_call.1} parent=11 // pred_region
          _
        $region36: #{tpu_custom_call.1} parent=11 // pred_fallthru
          _
        // Predicated region
        $region37: #{tpu_custom_call.1} parent=11 // pred_check
          %p362 = pneg %p198
        $region38: #{tpu_custom_call.1} parent=11 // pred_check_branch
          %364 = sbr.rel (%p362) target = $region40
        $region39: #{tpu_custom_call.1} parent=11 // pred_region
          _
        $region40: #{tpu_custom_call.1} parent=11 // pred_fallthru
          _
        // Predicated region
        $region41: #{tpu_custom_call.1} parent=11 // pred_check
          %p365 = pneg %p219
        $region42: #{tpu_custom_call.1} parent=11 // pred_check_branch
          %367 = sbr.rel (%p365) target = $region44
        $region43: #{tpu_custom_call.1} parent=11 // pred_region
          _
        $region44: #{tpu_custom_call.1} parent=11 // pred_fallthru
          _
        // Predicated region
        $region45: #{tpu_custom_call.1} parent=11 // pred_check
          %p368 = pneg %p240
        $region46: #{tpu_custom_call.1} parent=11 // pred_check_branch
          %370 = sbr.rel (%p368) target = $region48
        $region47: #{tpu_custom_call.1} parent=11 // pred_region
          _
        $region48: #{tpu_custom_call.1} parent=11 // pred_fallthru
          _
        // Predicated region
        $region49: #{tpu_custom_call.1} parent=11 // pred_check
          %p371 = pneg %p261
        $region50: #{tpu_custom_call.1} parent=11 // pred_check_branch
          %373 = sbr.rel (%p371) target = $region52
        $region51: #{tpu_custom_call.1} parent=11 // pred_region
          _
        $region52: #{tpu_custom_call.1} parent=11 // pred_fallthru
          _
        // Predicated region
        $region53: #{tpu_custom_call.1} parent=11 // pred_check
          %p374 = pneg %p282
        $region54: #{tpu_custom_call.1} parent=11 // pred_check_branch
          %376 = sbr.rel (%p374) target = $region56
        $region55: #{tpu_custom_call.1} parent=11 // pred_region
          _
        $region56: #{tpu_custom_call.1} parent=11 // pred_fallthru
          _
        // Predicated region
        $region57: #{tpu_custom_call.1} parent=11 // pred_check
          %p377 = pneg %p303
        $region58: #{tpu_custom_call.1} parent=11 // pred_check_branch
          %379 = sbr.rel (%p377) target = $region60
        $region59: #{tpu_custom_call.1} parent=11 // pred_region
          _
        $region60: #{tpu_custom_call.1} parent=11 // pred_fallthru
          _
      $region12: #{tpu_custom_call.1} parent=5 // pred_fallthru
        _
      %p380 = scmp.lt.s32.totalorder %s25, 2
      // Predicated region
      $region61: #{tpu_custom_call.1} parent=5 // pred_check
        %p381 = pneg %p380
      $region62: #{tpu_custom_call.1} parent=5 // pred_check_branch
        %383 = sbr.rel (%p381) target = $region64
      $region63: #{tpu_custom_call.1} parent=5 // pred_region
        // Predicated region
        $region65: #{tpu_custom_call.1} parent=63 // pred_check
          %p384 = pneg %p45
        $region66: #{tpu_custom_call.1} parent=63 // pred_check_branch
          %386 = sbr.rel (%p384) target = $region68
        $region67: #{tpu_custom_call.1} parent=63 // pred_region
          %s387 = sand.u32 %s35, 1
          %s388 = scalar_lea.sflag [#allocation4], %s387
          %s389 = sand.u32 %s35, 1
          %s390 = smul.addr %s389, 256
          %s391 = scalar_lea.vmem [#allocation3], %s390
          %s393 = ssub.s32 4096, 4096
          %394 = vsyncadd %s388, %s393
          %s395 = smul.addr %s25, 32
          %s396 = smul.addr %s395, 128
          %s397 = scalar_lea.hbm %s0, %s396
          %s398 = sshll.u32 %s391, 4
          %s399 = int_to_ptr.vmem [resolvable:$true] %s398
          %404 = dma.hbm_to_vmem [thread:$0]  %s397, 4096, %s399, %s388, 128, 128, 8
        $region68: #{tpu_custom_call.1} parent=63 // pred_fallthru
          _
      $region64: #{tpu_custom_call.1} parent=5 // pred_fallthru
        _
      %p405 = scmp.le.s32.totalorder 1, %s25
      %p406 = scmp.lt.s32.totalorder %s25, 3
      %p407 = pnand %p405, %p406
      %p408 = pneg %p407
      // Predicated region
      $region69: #{tpu_custom_call.1} parent=5 // pred_check
        _
      $region70: #{tpu_custom_call.1} parent=5 // pred_check_branch
        %410 = sbr.rel (%p407) target = $region72
      $region71: #{tpu_custom_call.1} parent=5 // pred_region
        %s411 = ssub.s32 %s25, 1
        %s412 = sand.u32 %s38, 1
        %s413 = scalar_lea.sflag [#allocation4], %s412
        %s414 = sand.u32 %s38, 1
        %s415 = smul.addr %s414, 256
        %s416 = scalar_lea.vmem [#allocation3], %s415
        // Predicated region
        $region73: #{tpu_custom_call.1} parent=71 // pred_check
          %p417 = pneg %p51
        $region74: #{tpu_custom_call.1} parent=71 // pred_check_branch
          %419 = sbr.rel (%p417) target = $region76
        $region75: #{tpu_custom_call.1} parent=71 // pred_region
          %420 = dma.done %s413, 4096
        $region76: #{tpu_custom_call.1} parent=71 // pred_fallthru
          _
        %s421 = sand.u32 %s38, 1
        %s422 = scalar_lea.sflag [#allocation4], %s421
        %s423 = sand.u32 %s38, 1
        %s424 = smul.addr %s423, 256
        %s425 = scalar_lea.vmem [#allocation3], %s424
        %p426 = pneg %p51
        %p427 = pneg %p48
        %p428 = pneg %p72
        %p429 = pneg %p69
        %p430 = pneg %p93
        %p431 = pneg %p90
        %p432 = pneg %p114
        %p433 = pneg %p111
        %p434 = pneg %p135
        %p435 = pneg %p132
        %p436 = pneg %p156
        %p437 = pneg %p153
        %p438 = pneg %p177
        %p439 = pneg %p174
        %p440 = pneg %p198
        %p441 = pneg %p195
        %p442 = pneg %p219
        %p443 = pneg %p216
        %p444 = pneg %p240
        %p445 = pneg %p237
        %p446 = pneg %p261
        %p447 = pneg %p258
        %p448 = pneg %p282
        %p449 = pneg %p279
        %p450 = pneg %p303
        %p451 = pneg %p300
        %p452 = pneg %p329
        %p453 = pneg %p326
        %s454 = sand.u32 %s316, 1
        %s455 = scalar_lea.sflag [#allocation5], %s454
        %s456 = sand.u32 %s316, 1
        %s457 = smul.addr %s456, 256
        %s458 = scalar_lea.vmem [#allocation6], %s457
        %v460 = vld [vmem:[%s416] sm:$0xff]
        %v461 = vld [vmem:[%s416 + $0x8] sm:$0xff]
        %v462 = vld [vmem:[%s416 + $0x10] sm:$0xff]
        %v463 = vld [vmem:[%s416 + $0x18] sm:$0xff]
        %v464 = vld [vmem:[%s416 + $0x20] sm:$0xff]
        %v465 = vld [vmem:[%s416 + $0x28] sm:$0xff]
        %v466 = vld [vmem:[%s416 + $0x30] sm:$0xff]
        %v467 = vld [vmem:[%s416 + $0x38] sm:$0xff]
        %v468 = vld [vmem:[%s416 + $0x40] sm:$0xff]
        %v469 = vld [vmem:[%s416 + $0x48] sm:$0xff]
        %v470 = vld [vmem:[%s416 + $0x50] sm:$0xff]
        %v471 = vld [vmem:[%s416 + $0x58] sm:$0xff]
        %v472 = vld [vmem:[%s416 + $0x60] sm:$0xff]
        %v473 = vld [vmem:[%s416 + $0x68] sm:$0xff]
        %v474 = vld [vmem:[%s416 + $0x70] sm:$0xff]
        %v475 = vld [vmem:[%s416 + $0x78] sm:$0xff]
        %v476 = vld [vmem:[%s416 + $0x80] sm:$0xff]
        %v477 = vld [vmem:[%s416 + $0x88] sm:$0xff]
        %v478 = vld [vmem:[%s416 + $0x90] sm:$0xff]
        %v479 = vld [vmem:[%s416 + $0x98] sm:$0xff]
        %v480 = vld [vmem:[%s416 + $0xa0] sm:$0xff]
        %v481 = vld [vmem:[%s416 + $0xa8] sm:$0xff]
        %v482 = vld [vmem:[%s416 + $0xb0] sm:$0xff]
        %v483 = vld [vmem:[%s416 + $0xb8] sm:$0xff]
        %v484 = vld [vmem:[%s416 + $0xc0] sm:$0xff]
        %v485 = vld [vmem:[%s416 + $0xc8] sm:$0xff]
        %v486 = vld [vmem:[%s416 + $0xd0] sm:$0xff]
        %v487 = vld [vmem:[%s416 + $0xd8] sm:$0xff]
        %v488 = vld [vmem:[%s416 + $0xe0] sm:$0xff]
        %v489 = vld [vmem:[%s416 + $0xe8] sm:$0xff]
        %v490 = vld [vmem:[%s416 + $0xf0] sm:$0xff]
        %v491 = vld [vmem:[%s416 + $0xf8] sm:$0xff]
        %v492 = vpack.c.bf16 %v461, %v460
        %v493 = vpack.c.bf16 %v463, %v462
        %v494 = vpack.c.bf16 %v465, %v464
        %v495 = vpack.c.bf16 %v467, %v466
        %v496 = vpack.c.bf16 %v469, %v468
        %v497 = vpack.c.bf16 %v471, %v470
        %v498 = vpack.c.bf16 %v473, %v472
        %v499 = vpack.c.bf16 %v475, %v474
        %v500 = vpack.c.bf16 %v477, %v476
        %v501 = vpack.c.bf16 %v479, %v478
        %v502 = vpack.c.bf16 %v481, %v480
        %v503 = vpack.c.bf16 %v483, %v482
        %v504 = vpack.c.bf16 %v485, %v484
        %v505 = vpack.c.bf16 %v487, %v486
        %v506 = vpack.c.bf16 %v489, %v488
        %v507 = vpack.c.bf16 %v491, %v490
        %v508 = vld [vmem:[%s1] sm:$0xf]
        %v509 = vld [vmem:[%s1 + $0x4] sm:$0xf]
        %v510 = vld [vmem:[%s2] sm:$0x1]
        %v512 = vlaneseq
        %v513 = vshrl.u32 %v512, 7
        %v514 = vsub.s32 0, %v513
        %v515 = vrot.slane %v510, %v514
        %v519 = vunpack.c.l.b16 %v508
        %v520 = vunpack.c.l.b16 %v509
        %v521 = vpack.c.b16 %v520, %v519
        %vm523 = vcmask 130048
        %v525 = vsel %vm523, %v492, 0
        %v528 = vsel %vm523, %v493, 0
        %v531 = vsel %vm523, %v494, 0
        %v534 = vsel %vm523, %v495, 0
        %v537 = vsel %vm523, %v496, 0
        %v540 = vsel %vm523, %v497, 0
        %v543 = vsel %vm523, %v498, 0
        %v546 = vsel %vm523, %v499, 0
        %v549 = vsel %vm523, %v500, 0
        %v552 = vsel %vm523, %v501, 0
        %v555 = vsel %vm523, %v502, 0
        %v558 = vsel %vm523, %v503, 0
        %v561 = vsel %vm523, %v504, 0
        %v564 = vsel %vm523, %v505, 0
        %v567 = vsel %vm523, %v506, 0
        %v570 = vsel %vm523, %v507, 0
        %572 = vmatprep.subr.bf16.mxu0 0
        %573 = vmatpush1.bf16.msra.mxu0 %v521
        %574 = vmatprep.subr.bf16.mxu0 0
        %575 = vmatpush1.bf16.msra.mxu0 0
        %576 = vmatprep.subr.bf16.mxu0 0
        %577 = vmatpush1.bf16.msra.mxu0 0
        %578 = vmatprep.subr.bf16.mxu0 0
        %579 = vmatpush1.bf16.msra.mxu0 0
        %580 = vmatprep.subr.bf16.mxu0 0
        %581 = vmatpush1.bf16.msra.mxu0 0
        %582 = vmatprep.subr.bf16.mxu0 0
        %583 = vmatpush1.bf16.msra.mxu0 0
        %584 = vmatprep.subr.bf16.mxu0 0
        %585 = vmatpush1.bf16.msra.mxu0 0
        %586 = vmatprep.subr.bf16.mxu0 0
        %587 = vmatpush1.bf16.msra.mxu0 0
        %588 = vmatprep.subr.bf16.mxu0 0
        %589 = vmatpush1.bf16.msra.mxu0 0
        %590 = vmatprep.subr.bf16.mxu0 0
        %591 = vmatpush1.bf16.msra.mxu0 0
        %592 = vmatprep.subr.bf16.mxu0 0
        %593 = vmatpush1.bf16.msra.mxu0 0
        %594 = vmatprep.subr.bf16.mxu0 0
        %595 = vmatpush1.bf16.msra.mxu0 0
        %596 = vmatprep.subr.bf16.mxu0 0
        %597 = vmatpush1.bf16.msra.mxu0 0
        %598 = vmatprep.subr.bf16.mxu0 0
        %599 = vmatpush1.bf16.msra.mxu0 0
        %600 = vmatprep.subr.bf16.mxu0 0
        %601 = vmatpush1.bf16.msra.mxu0 0
        %602 = vmatprep.subr.bf16.mxu0 0
        %603 = vmatpush1.bf16.msra.mxu0 0
        %604 = vmatprep.mubr.bf16.mxu0 0
        %605 = vmatmul.mubr.bf16.gmra.mrb[0].mxu0 %v525
        %v606 = vpop.f32.mrb[0].mxu0
        %v607 = vadd.f32 %v515, %v606
        %v608 = vpop.f32.mrb[0].mxu0
        %v609 = vpop.f32.mrb[0].mxu0
        %v610 = vadd.f32 %v515, %v609
        %v611 = vpop.f32.mrb[0].mxu0
        %612 = vmatprep.mubr.bf16.mxu0 0
        %613 = vmatmul.mubr.bf16.gmra.mrb[0].mxu0 %v528
        %v614 = vpop.f32.mrb[0].mxu0
        %v615 = vadd.f32 %v515, %v614
        %v616 = vpop.f32.mrb[0].mxu0
        %v617 = vpop.f32.mrb[0].mxu0
        %v618 = vadd.f32 %v515, %v617
        %v619 = vpop.f32.mrb[0].mxu0
        %620 = vmatprep.mubr.bf16.mxu0 0
        %621 = vmatmul.mubr.bf16.gmra.mrb[0].mxu0 %v531
        %v622 = vpop.f32.mrb[0].mxu0
        %v623 = vadd.f32 %v515, %v622
        %v624 = vpop.f32.mrb[0].mxu0
        %v625 = vpop.f32.mrb[0].mxu0
        %v626 = vadd.f32 %v515, %v625
        %v627 = vpop.f32.mrb[0].mxu0
        %628 = vmatprep.mubr.bf16.mxu0 0
        %629 = vmatmul.mubr.bf16.gmra.mrb[0].mxu0 %v534
        %v630 = vpop.f32.mrb[0].mxu0
        %v631 = vadd.f32 %v515, %v630
        %v632 = vpop.f32.mrb[0].mxu0
        %v633 = vpop.f32.mrb[0].mxu0
        %v634 = vadd.f32 %v515, %v633
        %v635 = vpop.f32.mrb[0].mxu0
        %636 = vmatprep.mubr.bf16.mxu0 0
        %637 = vmatmul.mubr.bf16.gmra.mrb[0].mxu0 %v537
        %v638 = vpop.f32.mrb[0].mxu0
        %v639 = vadd.f32 %v515, %v638
        %v640 = vpop.f32.mrb[0].mxu0
        %v641 = vpop.f32.mrb[0].mxu0
        %v642 = vadd.f32 %v515, %v641
        %v643 = vpop.f32.mrb[0].mxu0
        %644 = vmatprep.mubr.bf16.mxu0 0
        %645 = vmatmul.mubr.bf16.gmra.mrb[0].mxu0 %v540
        %v646 = vpop.f32.mrb[0].mxu0
        %v647 = vadd.f32 %v515, %v646
        %v648 = vpop.f32.mrb[0].mxu0
        %v649 = vpop.f32.mrb[0].mxu0
        %v650 = vadd.f32 %v515, %v649
        %v651 = vpop.f32.mrb[0].mxu0
        %652 = vmatprep.mubr.bf16.mxu0 0
        %653 = vmatmul.mubr.bf16.gmra.mrb[0].mxu0 %v543
        %v654 = vpop.f32.mrb[0].mxu0
        %v655 = vadd.f32 %v515, %v654
        %v656 = vpop.f32.mrb[0].mxu0
        %v657 = vpop.f32.mrb[0].mxu0
        %v658 = vadd.f32 %v515, %v657
        %v659 = vpop.f32.mrb[0].mxu0
        %660 = vmatprep.mubr.bf16.mxu0 0
        %661 = vmatmul.mubr.bf16.gmra.mrb[0].mxu0 %v546
        %v662 = vpop.f32.mrb[0].mxu0
        %v663 = vadd.f32 %v515, %v662
        %v664 = vpop.f32.mrb[0].mxu0
        %v665 = vpop.f32.mrb[0].mxu0
        %v666 = vadd.f32 %v515, %v665
        %v667 = vpop.f32.mrb[0].mxu0
        %668 = vmatprep.mubr.bf16.mxu0 0
        %669 = vmatmul.mubr.bf16.gmra.mrb[0].mxu0 %v549
        %v670 = vpop.f32.mrb[0].mxu0
        %v671 = vadd.f32 %v515, %v670
        %v672 = vpop.f32.mrb[0].mxu0
        %v673 = vpop.f32.mrb[0].mxu0
        %v674 = vadd.f32 %v515, %v673
        %v675 = vpop.f32.mrb[0].mxu0
        %676 = vmatprep.mubr.bf16.mxu0 0
        %677 = vmatmul.mubr.bf16.gmra.mrb[0].mxu0 %v552
        %v678 = vpop.f32.mrb[0].mxu0
        %v679 = vadd.f32 %v515, %v678
        %v680 = vpop.f32.mrb[0].mxu0
        %v681 = vpop.f32.mrb[0].mxu0
        %v682 = vadd.f32 %v515, %v681
        %v683 = vpop.f32.mrb[0].mxu0
        %684 = vmatprep.mubr.bf16.mxu0 0
        %685 = vmatmul.mubr.bf16.gmra.mrb[0].mxu0 %v555
        %v686 = vpop.f32.mrb[0].mxu0
        %v687 = vadd.f32 %v515, %v686
        %v688 = vpop.f32.mrb[0].mxu0
        %v689 = vpop.f32.mrb[0].mxu0
        %v690 = vadd.f32 %v515, %v689
        %v691 = vpop.f32.mrb[0].mxu0
        %692 = vmatprep.mubr.bf16.mxu0 0
        %693 = vmatmul.mubr.bf16.gmra.mrb[0].mxu0 %v558
        %v694 = vpop.f32.mrb[0].mxu0
        %v695 = vadd.f32 %v515, %v694
        %v696 = vpop.f32.mrb[0].mxu0
        %v697 = vpop.f32.mrb[0].mxu0
        %v698 = vadd.f32 %v515, %v697
        %v699 = vpop.f32.mrb[0].mxu0
        %700 = vmatprep.mubr.bf16.mxu0 0
        %701 = vmatmul.mubr.bf16.gmra.mrb[0].mxu0 %v561
        %v702 = vpop.f32.mrb[0].mxu0
        %v703 = vadd.f32 %v515, %v702
        %v704 = vpop.f32.mrb[0].mxu0
        %v705 = vpop.f32.mrb[0].mxu0
        %v706 = vadd.f32 %v515, %v705
        %v707 = vpop.f32.mrb[0].mxu0
        %708 = vmatprep.mubr.bf16.mxu0 0
        %709 = vmatmul.mubr.bf16.gmra.mrb[0].mxu0 %v564
        %v710 = vpop.f32.mrb[0].mxu0
        %v711 = vadd.f32 %v515, %v710
        %v712 = vpop.f32.mrb[0].mxu0
        %v713 = vpop.f32.mrb[0].mxu0
        %v714 = vadd.f32 %v515, %v713
        %v715 = vpop.f32.mrb[0].mxu0
        %716 = vmatprep.mubr.bf16.mxu0 0
        %717 = vmatmul.mubr.bf16.gmra.mrb[0].mxu0 %v567
        %v718 = vpop.f32.mrb[0].mxu0
        %v719 = vadd.f32 %v515, %v718
        %v720 = vpop.f32.mrb[0].mxu0
        %v721 = vpop.f32.mrb[0].mxu0
        %v722 = vadd.f32 %v515, %v721
        %v723 = vpop.f32.mrb[0].mxu0
        %724 = vmatprep.mubr.bf16.mxu0 0
        %725 = vmatmul.mubr.bf16.gmra.mrb[0].mxu0 %v570
        %v726 = vpop.f32.mrb[0].mxu0
        %v727 = vadd.f32 %v515, %v726
        %v728 = vpop.f32.mrb[0].mxu0
        %v729 = vpop.f32.mrb[0].mxu0
        %v730 = vadd.f32 %v515, %v729
        %v731 = vpop.f32.mrb[0].mxu0
        %732 = vdwg.mxu0
        %v733 = vmax.f32 %v607, 0.0
        %v734 = vmax.f32 %v610, 0.0
        %v735 = vmax.f32 %v615, 0.0
        %v736 = vmax.f32 %v618, 0.0
        %v737 = vmax.f32 %v623, 0.0
        %v738 = vmax.f32 %v626, 0.0
        %v739 = vmax.f32 %v631, 0.0
        %v740 = vmax.f32 %v634, 0.0
        %v741 = vmax.f32 %v639, 0.0
        %v742 = vmax.f32 %v642, 0.0
        %v743 = vmax.f32 %v647, 0.0
        %v744 = vmax.f32 %v650, 0.0
        %v745 = vmax.f32 %v655, 0.0
        %v746 = vmax.f32 %v658, 0.0
        %v747 = vmax.f32 %v663, 0.0
        %v748 = vmax.f32 %v666, 0.0
        %v749 = vmax.f32 %v671, 0.0
        %v750 = vmax.f32 %v674, 0.0
        %v751 = vmax.f32 %v679, 0.0
        %v752 = vmax.f32 %v682, 0.0
        %v753 = vmax.f32 %v687, 0.0
        %v754 = vmax.f32 %v690, 0.0
        %v755 = vmax.f32 %v695, 0.0
        %v756 = vmax.f32 %v698, 0.0
        %v757 = vmax.f32 %v703, 0.0
        %v758 = vmax.f32 %v706, 0.0
        %v759 = vmax.f32 %v711, 0.0
        %v760 = vmax.f32 %v714, 0.0
        %v761 = vmax.f32 %v719, 0.0
        %v762 = vmax.f32 %v722, 0.0
        %v763 = vmax.f32 %v727, 0.0
        %v764 = vmax.f32 %v730, 0.0
        %vm765 = vcmask 27648
        %766 = vst.msk [vmem:[#allocation2] sm:$0xf] %vm765, 0
        %767 = vst.msk [vmem:[#allocation2 + $0x4] sm:$0xf] %vm765, 0
        %vm768 = vcmask 24576
        %769 = vst.msk [vmem:[#allocation2 + $0x8] sm:$0x1] %vm768, 0
        %s770 = scalar_lea.vmem [#allocation2], 204
        %771 = vst.msk [vmem:[%s770] sm:$0xf] %vm765, 0
        %772 = vst.msk [vmem:[%s770 + $0x4] sm:$0xf] %vm765, 0
        %773 = vst.msk [vmem:[%s770 + $0x8] sm:$0x1] %vm768, 0
        %vm774 = vcmask 24576
        %vm775 = vsmask.f32 256
        %vm776 = vmand %vm774, %vm775
        %v777 = vld [vmem:[#allocation2] sm:$0x1]
        %v778 = vsel %vm776, 0, %v777
        %779 = vst [vmem:[#allocation2] sm:$0x1] %v778
        %v780 = vld [vmem:[#allocation2 + $0xc] sm:$0x1]
        %v781 = vsel %vm776, 0, %v780
        %782 = vst [vmem:[#allocation2 + $0xc] sm:$0x1] %v781
        %v783 = vld [vmem:[#allocation2 + $0x18] sm:$0x1]
        %v784 = vsel %vm776, 0, %v783
        %785 = vst [vmem:[#allocation2 + $0x18] sm:$0x1] %v784
        %v786 = vld [vmem:[#allocation2 + $0x24] sm:$0x1]
        %v787 = vsel %vm776, 0, %v786
        %788 = vst [vmem:[#allocation2 + $0x24] sm:$0x1] %v787
        %v789 = vld [vmem:[#allocation2 + $0x30] sm:$0x1]
        %v790 = vsel %vm776, 0, %v789
        %791 = vst [vmem:[#allocation2 + $0x30] sm:$0x1] %v790
        %v792 = vld [vmem:[#allocation2 + $0x3c] sm:$0x1]
        %v793 = vsel %vm776, 0, %v792
        %794 = vst [vmem:[#allocation2 + $0x3c] sm:$0x1] %v793
        %v795 = vld [vmem:[#allocation2 + $0x48] sm:$0x1]
        %v796 = vsel %vm776, 0, %v795
        %797 = vst [vmem:[#allocation2 + $0x48] sm:$0x1] %v796
        %v798 = vld [vmem:[#allocation2 + $0x54] sm:$0x1]
        %v799 = vsel %vm776, 0, %v798
        %800 = vst [vmem:[#allocation2 + $0x54] sm:$0x1] %v799
        %v801 = vld [vmem:[#allocation2 + $0x60] sm:$0x1]
        %v802 = vsel %vm776, 0, %v801
        %803 = vst [vmem:[#allocation2 + $0x60] sm:$0x1] %v802
        %v804 = vld [vmem:[#allocation2 + $0x6c] sm:$0x1]
        %v805 = vsel %vm776, 0, %v804
        %806 = vst [vmem:[#allocation2 + $0x6c] sm:$0x1] %v805
        %v807 = vld [vmem:[#allocation2 + $0x78] sm:$0x1]
        %v808 = vsel %vm776, 0, %v807
        %809 = vst [vmem:[#allocation2 + $0x78] sm:$0x1] %v808
        %v810 = vld [vmem:[#allocation2 + $0x84] sm:$0x1]
        %v811 = vsel %vm776, 0, %v810
        %812 = vst [vmem:[#allocation2 + $0x84] sm:$0x1] %v811
        %v813 = vld [vmem:[#allocation2 + $0x90] sm:$0x1]
        %v814 = vsel %vm776, 0, %v813
        %815 = vst [vmem:[#allocation2 + $0x90] sm:$0x1] %v814
        %v816 = vld [vmem:[#allocation2 + $0x9c] sm:$0x1]
        %v817 = vsel %vm776, 0, %v816
        %818 = vst [vmem:[#allocation2 + $0x9c] sm:$0x1] %v817
        %v819 = vld [vmem:[#allocation2 + $0xa8] sm:$0x1]
        %v820 = vsel %vm776, 0, %v819
        %821 = vst [vmem:[#allocation2 + $0xa8] sm:$0x1] %v820
        %v822 = vld [vmem:[#allocation2 + $0xb4] sm:$0x1]
        %v823 = vsel %vm776, 0, %v822
        %824 = vst [vmem:[#allocation2 + $0xb4] sm:$0x1] %v823
        %v825 = vld [vmem:[#allocation2 + $0xc0] sm:$0x1]
        %v826 = vsel %vm776, 0, %v825
        %827 = vst [vmem:[#allocation2 + $0xc0] sm:$0x1] %v826
        %v828 = vld [vmem:[#allocation2 + $0xcc] sm:$0x1]
        %v829 = vsel %vm776, 0, %v828
        %830 = vst [vmem:[#allocation2 + $0xcc] sm:$0x1] %v829
        %vm831 = vsmask.f32 7938
        %vm832 = vmand %vm774, %vm831
        %v833 = vld [vmem:[#allocation2 + $0x8] sm:$0x1]
        %v834 = vsel %vm832, 0, %v833
        %835 = vst [vmem:[#allocation2 + $0x8] sm:$0x1] %v834
        %v836 = vld [vmem:[#allocation2 + $0x14] sm:$0x1]
        %v837 = vsel %vm832, 0, %v836
        %838 = vst [vmem:[#allocation2 + $0x14] sm:$0x1] %v837
        %v839 = vld [vmem:[#allocation2 + $0x20] sm:$0x1]
        %v840 = vsel %vm832, 0, %v839
        %841 = vst [vmem:[#allocation2 + $0x20] sm:$0x1] %v840
        %v842 = vld [vmem:[#allocation2 + $0x2c] sm:$0x1]
        %v843 = vsel %vm832, 0, %v842
        %844 = vst [vmem:[#allocation2 + $0x2c] sm:$0x1] %v843
        %v845 = vld [vmem:[#allocation2 + $0x38] sm:$0x1]
        %v846 = vsel %vm832, 0, %v845
        %847 = vst [vmem:[#allocation2 + $0x38] sm:$0x1] %v846
        %v848 = vld [vmem:[#allocation2 + $0x44] sm:$0x1]
        %v849 = vsel %vm832, 0, %v848
        %850 = vst [vmem:[#allocation2 + $0x44] sm:$0x1] %v849
        %v851 = vld [vmem:[#allocation2 + $0x50] sm:$0x1]
        %v852 = vsel %vm832, 0, %v851
        %853 = vst [vmem:[#allocation2 + $0x50] sm:$0x1] %v852
        %v854 = vld [vmem:[#allocation2 + $0x5c] sm:$0x1]
        %v855 = vsel %vm832, 0, %v854
        %856 = vst [vmem:[#allocation2 + $0x5c] sm:$0x1] %v855
        %v857 = vld [vmem:[#allocation2 + $0x68] sm:$0x1]
        %v858 = vsel %vm832, 0, %v857
        %859 = vst [vmem:[#allocation2 + $0x68] sm:$0x1] %v858
        %v860 = vld [vmem:[#allocation2 + $0x74] sm:$0x1]
        %v861 = vsel %vm832, 0, %v860
        %862 = vst [vmem:[#allocation2 + $0x74] sm:$0x1] %v861
        %v863 = vld [vmem:[#allocation2 + $0x80] sm:$0x1]
        %v864 = vsel %vm832, 0, %v863
        %865 = vst [vmem:[#allocation2 + $0x80] sm:$0x1] %v864
        %v866 = vld [vmem:[#allocation2 + $0x8c] sm:$0x1]
        %v867 = vsel %vm832, 0, %v866
        %868 = vst [vmem:[#allocation2 + $0x8c] sm:$0x1] %v867
        %v869 = vld [vmem:[#allocation2 + $0x98] sm:$0x1]
        %v870 = vsel %vm832, 0, %v869
        %871 = vst [vmem:[#allocation2 + $0x98] sm:$0x1] %v870
        %v872 = vld [vmem:[#allocation2 + $0xa4] sm:$0x1]
        %v873 = vsel %vm832, 0, %v872
        %874 = vst [vmem:[#allocation2 + $0xa4] sm:$0x1] %v873
        %v875 = vld [vmem:[#allocation2 + $0xb0] sm:$0x1]
        %v876 = vsel %vm832, 0, %v875
        %877 = vst [vmem:[#allocation2 + $0xb0] sm:$0x1] %v876
        %v878 = vld [vmem:[#allocation2 + $0xbc] sm:$0x1]
        %v879 = vsel %vm832, 0, %v878
        %880 = vst [vmem:[#allocation2 + $0xbc] sm:$0x1] %v879
        %v881 = vld [vmem:[#allocation2 + $0xc8] sm:$0x1]
        %v882 = vsel %vm832, 0, %v881
        %883 = vst [vmem:[#allocation2 + $0xc8] sm:$0x1] %v882
        %v884 = vld [vmem:[#allocation2 + $0xd4] sm:$0x1]
        %v885 = vsel %vm832, 0, %v884
        %886 = vst [vmem:[#allocation2 + $0xd4] sm:$0x1] %v885
        %v887 = vpack.c.bf16 %v734, %v733
        %v888 = vpack.c.bf16 %v736, %v735
        %v889 = vpack.c.bf16 %v738, %v737
        %v890 = vpack.c.bf16 %v740, %v739
        %v891 = vpack.c.bf16 %v742, %v741
        %v892 = vpack.c.bf16 %v744, %v743
        %v893 = vpack.c.bf16 %v746, %v745
        %v894 = vpack.c.bf16 %v748, %v747
        %v895 = vpack.c.bf16 %v750, %v749
        %v896 = vpack.c.bf16 %v752, %v751
        %v897 = vpack.c.bf16 %v754, %v753
        %v898 = vpack.c.bf16 %v756, %v755
        %v899 = vpack.c.bf16 %v758, %v757
        %v900 = vpack.c.bf16 %v760, %v759
        %v901 = vpack.c.bf16 %v762, %v761
        %v902 = vpack.c.bf16 %v764, %v763
        %v919 = vunpack.c.l.b16 %v887
        %v920 = vunpack.c.h.b16 %v887
        %v921 = vunpack.c.l.b16 %v888
        %v922 = vunpack.c.h.b16 %v888
        %v923 = vunpack.c.l.b16 %v889
        %v924 = vunpack.c.h.b16 %v889
        %v925 = vunpack.c.l.b16 %v890
        %v926 = vunpack.c.h.b16 %v890
        %v927 = vunpack.c.l.b16 %v891
        %v928 = vunpack.c.h.b16 %v891
        %v929 = vunpack.c.l.b16 %v892
        %v930 = vunpack.c.h.b16 %v892
        %v931 = vunpack.c.l.b16 %v893
        %v932 = vunpack.c.h.b16 %v893
        %v933 = vunpack.c.l.b16 %v894
        %v934 = vunpack.c.h.b16 %v894
        %v935 = vunpack.c.l.b16 %v895
        %v936 = vunpack.c.h.b16 %v895
        %v937 = vunpack.c.l.b16 %v896
        %v938 = vunpack.c.h.b16 %v896
        %v939 = vunpack.c.l.b16 %v897
        %v940 = vunpack.c.h.b16 %v897
        %v941 = vunpack.c.l.b16 %v898
        %v942 = vunpack.c.h.b16 %v898
        %v943 = vunpack.c.l.b16 %v899
        %v944 = vunpack.c.h.b16 %v899
        %v945 = vunpack.c.l.b16 %v900
        %v946 = vunpack.c.h.b16 %v900
        %v947 = vunpack.c.l.b16 %v901
        %v948 = vunpack.c.h.b16 %v901
        %v949 = vunpack.c.l.b16 %v902
        %v950 = vunpack.c.h.b16 %v902
        %v951 = vpack.c.b16 %v919, %v919
        %v952 = vpack.c.b16 %v920, %v920
        %v953 = vpack.c.b16 %v921, %v921
        %v954 = vpack.c.b16 %v922, %v922
        %v955 = vpack.c.b16 %v923, %v923
        %v956 = vpack.c.b16 %v924, %v924
        %v957 = vpack.c.b16 %v925, %v925
        %v958 = vpack.c.b16 %v926, %v926
        %v959 = vpack.c.b16 %v927, %v927
        %v960 = vpack.c.b16 %v928, %v928
        %v961 = vpack.c.b16 %v929, %v929
        %v962 = vpack.c.b16 %v930, %v930
        %v963 = vpack.c.b16 %v931, %v931
        %v964 = vpack.c.b16 %v932, %v932
        %v965 = vpack.c.b16 %v933, %v933
        %v966 = vpack.c.b16 %v934, %v934
        %v967 = vpack.c.b16 %v935, %v935
        %v968 = vpack.c.b16 %v936, %v936
        %v969 = vpack.c.b16 %v937, %v937
        %v970 = vpack.c.b16 %v938, %v938
        %v971 = vpack.c.b16 %v939, %v939
        %v972 = vpack.c.b16 %v940, %v940
        %v973 = vpack.c.b16 %v941, %v941
        %v974 = vpack.c.b16 %v942, %v942
        %v975 = vpack.c.b16 %v943, %v943
        %v976 = vpack.c.b16 %v944, %v944
        %v977 = vpack.c.b16 %v945, %v945
        %v978 = vpack.c.b16 %v946, %v946
        %v979 = vpack.c.b16 %v947, %v947
        %v980 = vpack.c.b16 %v948, %v948
        %v981 = vpack.c.b16 %v949, %v949
        %v982 = vpack.c.b16 %v950, %v950
        %vm983 = vsmask.f32 4368
        %vm984 = vmor %vm775, %vm983
        %v986 = vshrl.u32 %v951, 16
        %v988 = vrot.slane %v986, 7
        %v989 = vshll.u32 %v951, 16
        %v991 = vor.u32 %v988, %v989
        %v992 = vrot.slane %v988, 4
        %v994 = vshrl.u32 %v952, 16
        %v996 = vrot.slane %v994, 7
        %v997 = vshll.u32 %v952, 16
        %v999 = vor.u32 %v996, %v997
        %v1000 = vsel %vm984, %v992, %v999
        %v1001 = vrot.slane %v996, 4
        %v1003 = vshrl.u32 %v953, 16
        %v1005 = vrot.slane %v1003, 7
        %v1006 = vshll.u32 %v953, 16
        %v1008 = vor.u32 %v1005, %v1006
        %v1009 = vrot.slane %v1005, 4
        %v1011 = vshrl.u32 %v954, 16
        %v1013 = vrot.slane %v1011, 7
        %v1014 = vshll.u32 %v954, 16
        %v1016 = vor.u32 %v1013, %v1014
        %v1017 = vsel %vm984, %v1009, %v1016
        %v1018 = vrot.slane %v1013, 4
        %v1020 = vshrl.u32 %v955, 16
        %v1022 = vrot.slane %v1020, 7
        %v1023 = vshll.u32 %v955, 16
        %v1025 = vor.u32 %v1022, %v1023
        %v1026 = vrot.slane %v1022, 4
        %v1028 = vshrl.u32 %v956, 16
        %v1030 = vrot.slane %v1028, 7
        %v1031 = vshll.u32 %v956, 16
        %v1033 = vor.u32 %v1030, %v1031
        %v1034 = vsel %vm984, %v1026, %v1033
        %v1035 = vrot.slane %v1030, 4
        %v1037 = vshrl.u32 %v957, 16
        %v1039 = vrot.slane %v1037, 7
        %v1040 = vshll.u32 %v957, 16
        %v1042 = vor.u32 %v1039, %v1040
        %v1043 = vrot.slane %v1039, 4
        %v1045 = vshrl.u32 %v958, 16
        %v1047 = vrot.slane %v1045, 7
        %v1048 = vshll.u32 %v958, 16
        %v1050 = vor.u32 %v1047, %v1048
        %v1051 = vsel %vm984, %v1043, %v1050
        %v1052 = vrot.slane %v1047, 4
        %v1054 = vshrl.u32 %v959, 16
        %v1056 = vrot.slane %v1054, 7
        %v1057 = vshll.u32 %v959, 16
        %v1059 = vor.u32 %v1056, %v1057
        %v1060 = vrot.slane %v1056, 4
        %v1062 = vshrl.u32 %v960, 16
        %v1064 = vrot.slane %v1062, 7
        %v1065 = vshll.u32 %v960, 16
        %v1067 = vor.u32 %v1064, %v1065
        %v1068 = vsel %vm984, %v1060, %v1067
        %v1069 = vrot.slane %v1064, 4
        %v1071 = vshrl.u32 %v961, 16
        %v1073 = vrot.slane %v1071, 7
        %v1074 = vshll.u32 %v961, 16
        %v1076 = vor.u32 %v1073, %v1074
        %v1077 = vrot.slane %v1073, 4
        %v1079 = vshrl.u32 %v962, 16
        %v1081 = vrot.slane %v1079, 7
        %v1082 = vshll.u32 %v962, 16
        %v1084 = vor.u32 %v1081, %v1082
        %v1085 = vsel %vm984, %v1077, %v1084
        %v1086 = vrot.slane %v1081, 4
        %v1088 = vshrl.u32 %v963, 16
        %v1090 = vrot.slane %v1088, 7
        %v1091 = vshll.u32 %v963, 16
        %v1093 = vor.u32 %v1090, %v1091
        %v1094 = vrot.slane %v1090, 4
        %v1096 = vshrl.u32 %v964, 16
        %v1098 = vrot.slane %v1096, 7
        %v1099 = vshll.u32 %v964, 16
        %v1101 = vor.u32 %v1098, %v1099
        %v1102 = vsel %vm984, %v1094, %v1101
        %v1103 = vrot.slane %v1098, 4
        %v1105 = vshrl.u32 %v965, 16
        %v1107 = vrot.slane %v1105, 7
        %v1108 = vshll.u32 %v965, 16
        %v1110 = vor.u32 %v1107, %v1108
        %v1111 = vrot.slane %v1107, 4
        %v1113 = vshrl.u32 %v966, 16
        %v1115 = vrot.slane %v1113, 7
        %v1116 = vshll.u32 %v966, 16
        %v1118 = vor.u32 %v1115, %v1116
        %v1119 = vsel %vm984, %v1111, %v1118
        %v1120 = vrot.slane %v1115, 4
        %v1122 = vshrl.u32 %v967, 16
        %v1124 = vrot.slane %v1122, 7
        %v1125 = vshll.u32 %v967, 16
        %v1127 = vor.u32 %v1124, %v1125
        %v1128 = vrot.slane %v1124, 4
        %v1130 = vshrl.u32 %v968, 16
        %v1132 = vrot.slane %v1130, 7
        %v1133 = vshll.u32 %v968, 16
        %v1135 = vor.u32 %v1132, %v1133
        %v1136 = vsel %vm984, %v1128, %v1135
        %v1137 = vrot.slane %v1132, 4
        %v1139 = vshrl.u32 %v969, 16
        %v1141 = vrot.slane %v1139, 7
        %v1142 = vshll.u32 %v969, 16
        %v1144 = vor.u32 %v1141, %v1142
        %v1145 = vrot.slane %v1141, 4
        %v1147 = vshrl.u32 %v970, 16
        %v1149 = vrot.slane %v1147, 7
        %v1150 = vshll.u32 %v970, 16
        %v1152 = vor.u32 %v1149, %v1150
        %v1153 = vsel %vm984, %v1145, %v1152
        %v1154 = vrot.slane %v1149, 4
        %v1156 = vshrl.u32 %v971, 16
        %v1158 = vrot.slane %v1156, 7
        %v1159 = vshll.u32 %v971, 16
        %v1161 = vor.u32 %v1158, %v1159
        %v1162 = vrot.slane %v1158, 4
        %v1164 = vshrl.u32 %v972, 16
        %v1166 = vrot.slane %v1164, 7
        %v1167 = vshll.u32 %v972, 16
        %v1169 = vor.u32 %v1166, %v1167
        %v1170 = vsel %vm984, %v1162, %v1169
        %v1171 = vrot.slane %v1166, 4
        %v1173 = vshrl.u32 %v973, 16
        %v1175 = vrot.slane %v1173, 7
        %v1176 = vshll.u32 %v973, 16
        %v1178 = vor.u32 %v1175, %v1176
        %v1179 = vrot.slane %v1175, 4
        %v1181 = vshrl.u32 %v974, 16
        %v1183 = vrot.slane %v1181, 7
        %v1184 = vshll.u32 %v974, 16
        %v1186 = vor.u32 %v1183, %v1184
        %v1187 = vsel %vm984, %v1179, %v1186
        %v1188 = vrot.slane %v1183, 4
        %v1190 = vshrl.u32 %v975, 16
        %v1192 = vrot.slane %v1190, 7
        %v1193 = vshll.u32 %v975, 16
        %v1195 = vor.u32 %v1192, %v1193
        %v1196 = vrot.slane %v1192, 4
        %v1198 = vshrl.u32 %v976, 16
        %v1200 = vrot.slane %v1198, 7
        %v1201 = vshll.u32 %v976, 16
        %v1203 = vor.u32 %v1200, %v1201
        %v1204 = vsel %vm984, %v1196, %v1203
        %v1205 = vrot.slane %v1200, 4
        %v1207 = vshrl.u32 %v977, 16
        %v1209 = vrot.slane %v1207, 7
        %v1210 = vshll.u32 %v977, 16
        %v1212 = vor.u32 %v1209, %v1210
        %v1213 = vrot.slane %v1209, 4
        %v1215 = vshrl.u32 %v978, 16
        %v1217 = vrot.slane %v1215, 7
        %v1218 = vshll.u32 %v978, 16
        %v1220 = vor.u32 %v1217, %v1218
        %v1221 = vsel %vm984, %v1213, %v1220
        %v1222 = vrot.slane %v1217, 4
        %v1224 = vshrl.u32 %v979, 16
        %v1226 = vrot.slane %v1224, 7
        %v1227 = vshll.u32 %v979, 16
        %v1229 = vor.u32 %v1226, %v1227
        %v1230 = vrot.slane %v1226, 4
        %v1232 = vshrl.u32 %v980, 16
        %v1234 = vrot.slane %v1232, 7
        %v1235 = vshll.u32 %v980, 16
        %v1237 = vor.u32 %v1234, %v1235
        %v1238 = vsel %vm984, %v1230, %v1237
        %v1239 = vrot.slane %v1234, 4
        %v1241 = vshrl.u32 %v981, 16
        %v1243 = vrot.slane %v1241, 7
        %v1244 = vshll.u32 %v981, 16
        %v1246 = vor.u32 %v1243, %v1244
        %v1247 = vrot.slane %v1243, 4
        %v1249 = vshrl.u32 %v982, 16
        %v1251 = vrot.slane %v1249, 7
        %v1252 = vshll.u32 %v982, 16
        %v1254 = vor.u32 %v1251, %v1252
        %v1255 = vsel %vm984, %v1247, %v1254
        %v1256 = vrot.slane %v1251, 4
        %s1305 = scalar_lea.vmem [#allocation2], 12
        %vm1306 = vcmask 27648
        %vm1307 = vmand %vm1306, %vm831
        %v1308 = vld [vmem:[%s1305] sm:$0xf]
        %v1309 = vsel %vm1307, %v991, %v1308
        %1310 = vst [vmem:[%s1305] sm:$0xf] %v1309
        %1311 = vst.msk [vmem:[%s1305 + $0x4] sm:$0xf] %vm765, %v1000
        %v1312 = vld [vmem:[%s1305 + $0x8] sm:$0x1]
        %v1313 = vsel %vm776, %v1001, %v1312
        %1314 = vst [vmem:[%s1305 + $0x8] sm:$0x1] %v1313
        %v1315 = vld [vmem:[%s1305 + $0xc] sm:$0xf]
        %v1316 = vsel %vm1307, %v1008, %v1315
        %1317 = vst [vmem:[%s1305 + $0xc] sm:$0xf] %v1316
        %1318 = vst.msk [vmem:[%s1305 + $0x10] sm:$0xf] %vm765, %v1017
        %v1319 = vld [vmem:[%s1305 + $0x14] sm:$0x1]
        %v1320 = vsel %vm776, %v1018, %v1319
        %1321 = vst [vmem:[%s1305 + $0x14] sm:$0x1] %v1320
        %v1322 = vld [vmem:[%s1305 + $0x18] sm:$0xf]
        %v1323 = vsel %vm1307, %v1025, %v1322
        %1324 = vst [vmem:[%s1305 + $0x18] sm:$0xf] %v1323
        %1325 = vst.msk [vmem:[%s1305 + $0x1c] sm:$0xf] %vm765, %v1034
        %v1326 = vld [vmem:[%s1305 + $0x20] sm:$0x1]
        %v1327 = vsel %vm776, %v1035, %v1326
        %1328 = vst [vmem:[%s1305 + $0x20] sm:$0x1] %v1327
        %v1329 = vld [vmem:[%s1305 + $0x24] sm:$0xf]
        %v1330 = vsel %vm1307, %v1042, %v1329
        %1331 = vst [vmem:[%s1305 + $0x24] sm:$0xf] %v1330
        %1332 = vst.msk [vmem:[%s1305 + $0x28] sm:$0xf] %vm765, %v1051
        %v1333 = vld [vmem:[%s1305 + $0x2c] sm:$0x1]
        %v1334 = vsel %vm776, %v1052, %v1333
        %1335 = vst [vmem:[%s1305 + $0x2c] sm:$0x1] %v1334
        %v1336 = vld [vmem:[%s1305 + $0x30] sm:$0xf]
        %v1337 = vsel %vm1307, %v1059, %v1336
        %1338 = vst [vmem:[%s1305 + $0x30] sm:$0xf] %v1337
        %1339 = vst.msk [vmem:[%s1305 + $0x34] sm:$0xf] %vm765, %v1068
        %v1340 = vld [vmem:[%s1305 + $0x38] sm:$0x1]
        %v1341 = vsel %vm776, %v1069, %v1340
        %1342 = vst [vmem:[%s1305 + $0x38] sm:$0x1] %v1341
        %v1343 = vld [vmem:[%s1305 + $0x3c] sm:$0xf]
        %v1344 = vsel %vm1307, %v1076, %v1343
        %1345 = vst [vmem:[%s1305 + $0x3c] sm:$0xf] %v1344
        %1346 = vst.msk [vmem:[%s1305 + $0x40] sm:$0xf] %vm765, %v1085
        %v1347 = vld [vmem:[%s1305 + $0x44] sm:$0x1]
        %v1348 = vsel %vm776, %v1086, %v1347
        %1349 = vst [vmem:[%s1305 + $0x44] sm:$0x1] %v1348
        %v1350 = vld [vmem:[%s1305 + $0x48] sm:$0xf]
        %v1351 = vsel %vm1307, %v1093, %v1350
        %1352 = vst [vmem:[%s1305 + $0x48] sm:$0xf] %v1351
        %1353 = vst.msk [vmem:[%s1305 + $0x4c] sm:$0xf] %vm765, %v1102
        %v1354 = vld [vmem:[%s1305 + $0x50] sm:$0x1]
        %v1355 = vsel %vm776, %v1103, %v1354
        %1356 = vst [vmem:[%s1305 + $0x50] sm:$0x1] %v1355
        %v1357 = vld [vmem:[%s1305 + $0x54] sm:$0xf]
        %v1358 = vsel %vm1307, %v1110, %v1357
        %1359 = vst [vmem:[%s1305 + $0x54] sm:$0xf] %v1358
        %1360 = vst.msk [vmem:[%s1305 + $0x58] sm:$0xf] %vm765, %v1119
        %v1361 = vld [vmem:[%s1305 + $0x5c] sm:$0x1]
        %v1362 = vsel %vm776, %v1120, %v1361
        %1363 = vst [vmem:[%s1305 + $0x5c] sm:$0x1] %v1362
        %v1364 = vld [vmem:[%s1305 + $0x60] sm:$0xf]
        %v1365 = vsel %vm1307, %v1127, %v1364
        %1366 = vst [vmem:[%s1305 + $0x60] sm:$0xf] %v1365
        %1367 = vst.msk [vmem:[%s1305 + $0x64] sm:$0xf] %vm765, %v1136
        %v1368 = vld [vmem:[%s1305 + $0x68] sm:$0x1]
        %v1369 = vsel %vm776, %v1137, %v1368
        %1370 = vst [vmem:[%s1305 + $0x68] sm:$0x1] %v1369
        %v1371 = vld [vmem:[%s1305 + $0x6c] sm:$0xf]
        %v1372 = vsel %vm1307, %v1144, %v1371
        %1373 = vst [vmem:[%s1305 + $0x6c] sm:$0xf] %v1372
        %1374 = vst.msk [vmem:[%s1305 + $0x70] sm:$0xf] %vm765, %v1153
        %v1375 = vld [vmem:[%s1305 + $0x74] sm:$0x1]
        %v1376 = vsel %vm776, %v1154, %v1375
        %1377 = vst [vmem:[%s1305 + $0x74] sm:$0x1] %v1376
        %v1378 = vld [vmem:[%s1305 + $0x78] sm:$0xf]
        %v1379 = vsel %vm1307, %v1161, %v1378
        %1380 = vst [vmem:[%s1305 + $0x78] sm:$0xf] %v1379
        %1381 = vst.msk [vmem:[%s1305 + $0x7c] sm:$0xf] %vm765, %v1170
        %v1382 = vld [vmem:[%s1305 + $0x80] sm:$0x1]
        %v1383 = vsel %vm776, %v1171, %v1382
        %1384 = vst [vmem:[%s1305 + $0x80] sm:$0x1] %v1383
        %v1385 = vld [vmem:[%s1305 + $0x84] sm:$0xf]
        %v1386 = vsel %vm1307, %v1178, %v1385
        %1387 = vst [vmem:[%s1305 + $0x84] sm:$0xf] %v1386
        %1388 = vst.msk [vmem:[%s1305 + $0x88] sm:$0xf] %vm765, %v1187
        %v1389 = vld [vmem:[%s1305 + $0x8c] sm:$0x1]
        %v1390 = vsel %vm776, %v1188, %v1389
        %1391 = vst [vmem:[%s1305 + $0x8c] sm:$0x1] %v1390
        %v1392 = vld [vmem:[%s1305 + $0x90] sm:$0xf]
        %v1393 = vsel %vm1307, %v1195, %v1392
        %1394 = vst [vmem:[%s1305 + $0x90] sm:$0xf] %v1393
        %1395 = vst.msk [vmem:[%s1305 + $0x94] sm:$0xf] %vm765, %v1204
        %v1396 = vld [vmem:[%s1305 + $0x98] sm:$0x1]
        %v1397 = vsel %vm776, %v1205, %v1396
        %1398 = vst [vmem:[%s1305 + $0x98] sm:$0x1] %v1397
        %v1399 = vld [vmem:[%s1305 + $0x9c] sm:$0xf]
        %v1400 = vsel %vm1307, %v1212, %v1399
        %1401 = vst [vmem:[%s1305 + $0x9c] sm:$0xf] %v1400
        %1402 = vst.msk [vmem:[%s1305 + $0xa0] sm:$0xf] %vm765, %v1221
        %v1403 = vld [vmem:[%s1305 + $0xa4] sm:$0x1]
        %v1404 = vsel %vm776, %v1222, %v1403
        %1405 = vst [vmem:[%s1305 + $0xa4] sm:$0x1] %v1404
        %v1406 = vld [vmem:[%s1305 + $0xa8] sm:$0xf]
        %v1407 = vsel %vm1307, %v1229, %v1406
        %1408 = vst [vmem:[%s1305 + $0xa8] sm:$0xf] %v1407
        %1409 = vst.msk [vmem:[%s1305 + $0xac] sm:$0xf] %vm765, %v1238
        %v1410 = vld [vmem:[%s1305 + $0xb0] sm:$0x1]
        %v1411 = vsel %vm776, %v1239, %v1410
        %1412 = vst [vmem:[%s1305 + $0xb0] sm:$0x1] %v1411
        %v1413 = vld [vmem:[%s1305 + $0xb4] sm:$0xf]
        %v1414 = vsel %vm1307, %v1246, %v1413
        %1415 = vst [vmem:[%s1305 + $0xb4] sm:$0xf] %v1414
        %1416 = vst.msk [vmem:[%s1305 + $0xb8] sm:$0xf] %vm765, %v1255
        %v1417 = vld [vmem:[%s1305 + $0xbc] sm:$0x1]
        %v1418 = vsel %vm776, %v1256, %v1417
        %1419 = vst [vmem:[%s1305 + $0xbc] sm:$0x1] %v1418
        %v1420 = vld [vmem:[#allocation2] sm:$0xf]
        %v1421 = vld [vmem:[#allocation2 + $0x4] sm:$0xf]
        %v1422 = vld [vmem:[#allocation2 + $0xc] sm:$0xf]
        %v1423 = vld [vmem:[#allocation2 + $0x10] sm:$0xf]
        %v1424 = vld [vmem:[#allocation2 + $0x18] sm:$0xf]
        %v1425 = vld [vmem:[#allocation2 + $0x1c] sm:$0xf]
        %v1426 = vld [vmem:[#allocation2 + $0x24] sm:$0xf]
        %v1427 = vld [vmem:[#allocation2 + $0x28] sm:$0xf]
        %v1428 = vld [vmem:[#allocation2 + $0x30] sm:$0xf]
        %v1429 = vld [vmem:[#allocation2 + $0x34] sm:$0xf]
        %v1430 = vld [vmem:[#allocation2 + $0x3c] sm:$0xf]
        %v1431 = vld [vmem:[#allocation2 + $0x40] sm:$0xf]
        %v1432 = vld [vmem:[#allocation2 + $0x48] sm:$0xf]
        %v1433 = vld [vmem:[#allocation2 + $0x4c] sm:$0xf]
        %v1434 = vld [vmem:[#allocation2 + $0x54] sm:$0xf]
        %v1435 = vld [vmem:[#allocation2 + $0x58] sm:$0xf]
        %v1436 = vld [vmem:[#allocation2 + $0x60] sm:$0xf]
        %v1437 = vld [vmem:[#allocation2 + $0x64] sm:$0xf]
        %v1438 = vld [vmem:[#allocation2 + $0x6c] sm:$0xf]
        %v1439 = vld [vmem:[#allocation2 + $0x70] sm:$0xf]
        %v1440 = vld [vmem:[#allocation2 + $0x78] sm:$0xf]
        %v1441 = vld [vmem:[#allocation2 + $0x7c] sm:$0xf]
        %v1442 = vld [vmem:[#allocation2 + $0x84] sm:$0xf]
        %v1443 = vld [vmem:[#allocation2 + $0x88] sm:$0xf]
        %v1444 = vld [vmem:[#allocation2 + $0x90] sm:$0xf]
        %v1445 = vld [vmem:[#allocation2 + $0x94] sm:$0xf]
        %v1446 = vld [vmem:[#allocation2 + $0x9c] sm:$0xf]
        %v1447 = vld [vmem:[#allocation2 + $0xa0] sm:$0xf]
        %v1448 = vld [vmem:[#allocation2 + $0xa8] sm:$0xf]
        %v1449 = vld [vmem:[#allocation2 + $0xac] sm:$0xf]
        %v1450 = vld [vmem:[#allocation2 + $0xb4] sm:$0xf]
        %v1451 = vld [vmem:[#allocation2 + $0xb8] sm:$0xf]
        %v1452 = vld [vmem:[#allocation2 + $0xc0] sm:$0xf]
        %v1453 = vld [vmem:[#allocation2 + $0xc4] sm:$0xf]
        %v1454 = vld [vmem:[#allocation2 + $0xcc] sm:$0xf]
        %v1455 = vld [vmem:[#allocation2 + $0xd0] sm:$0xf]
        %v1488 = vunpack.c.l.b16 %v1420
        %v1489 = vunpack.c.l.b16 %v1421
        %v1490 = vunpack.c.l.b16 %v1422
        %v1491 = vunpack.c.l.b16 %v1423
        %v1492 = vunpack.c.l.b16 %v1424
        %v1493 = vunpack.c.l.b16 %v1425
        %v1494 = vunpack.c.l.b16 %v1426
        %v1495 = vunpack.c.l.b16 %v1427
        %v1496 = vunpack.c.l.b16 %v1428
        %v1497 = vunpack.c.l.b16 %v1429
        %v1498 = vunpack.c.l.b16 %v1430
        %v1499 = vunpack.c.l.b16 %v1431
        %v1500 = vunpack.c.l.b16 %v1432
        %v1501 = vunpack.c.l.b16 %v1433
        %v1502 = vunpack.c.l.b16 %v1434
        %v1503 = vunpack.c.l.b16 %v1435
        %v1504 = vunpack.c.l.b16 %v1436
        %v1505 = vunpack.c.l.b16 %v1437
        %v1506 = vunpack.c.l.b16 %v1438
        %v1507 = vunpack.c.l.b16 %v1439
        %v1508 = vunpack.c.l.b16 %v1440
        %v1509 = vunpack.c.l.b16 %v1441
        %v1510 = vunpack.c.l.b16 %v1442
        %v1511 = vunpack.c.l.b16 %v1443
        %v1512 = vunpack.c.l.b16 %v1444
        %v1513 = vunpack.c.l.b16 %v1445
        %v1514 = vunpack.c.l.b16 %v1446
        %v1515 = vunpack.c.l.b16 %v1447
        %v1516 = vunpack.c.l.b16 %v1448
        %v1517 = vunpack.c.l.b16 %v1449
        %v1518 = vunpack.c.l.b16 %v1450
        %v1519 = vunpack.c.l.b16 %v1451
        %v1520 = vpack.c.b16 %v1489, %v1488
        %v1521 = vpack.c.b16 %v1491, %v1490
        %v1522 = vpack.c.b16 %v1493, %v1492
        %v1523 = vpack.c.b16 %v1495, %v1494
        %v1524 = vpack.c.b16 %v1497, %v1496
        %v1525 = vpack.c.b16 %v1499, %v1498
        %v1526 = vpack.c.b16 %v1501, %v1500
        %v1527 = vpack.c.b16 %v1503, %v1502
        %v1528 = vpack.c.b16 %v1505, %v1504
        %v1529 = vpack.c.b16 %v1507, %v1506
        %v1530 = vpack.c.b16 %v1509, %v1508
        %v1531 = vpack.c.b16 %v1511, %v1510
        %v1532 = vpack.c.b16 %v1513, %v1512
        %v1533 = vpack.c.b16 %v1515, %v1514
        %v1534 = vpack.c.b16 %v1517, %v1516
        %v1535 = vpack.c.b16 %v1519, %v1518
        %v1538 = vunpack.c.l.b16 %v1452
        %v1539 = vunpack.c.l.b16 %v1453
        %v1540 = vpack.c.b16 %v1539, %v1538
        %1541 = vrot.lane.b32.xlu0 %v1521, 4
        %v1542 = vpop.permute.xlu0 %1541
        %1543 = vrot.lane.b32.xlu0 %v1522, 4
        %v1544 = vpop.permute.xlu0 %1543
        %1545 = vrot.lane.b32.xlu0 %v1523, 4
        %v1546 = vpop.permute.xlu0 %1545
        %1547 = vrot.lane.b32.xlu0 %v1524, 4
        %v1548 = vpop.permute.xlu0 %1547
        %1549 = vrot.lane.b32.xlu0 %v1525, 4
        %v1550 = vpop.permute.xlu0 %1549
        %1551 = vrot.lane.b32.xlu0 %v1526, 4
        %v1552 = vpop.permute.xlu0 %1551
        %1553 = vrot.lane.b32.xlu0 %v1527, 4
        %v1554 = vpop.permute.xlu0 %1553
        %1555 = vrot.lane.b32.xlu0 %v1528, 4
        %v1556 = vpop.permute.xlu0 %1555
        %1557 = vrot.lane.b32.xlu0 %v1529, 4
        %v1558 = vpop.permute.xlu0 %1557
        %1559 = vrot.lane.b32.xlu0 %v1530, 4
        %v1560 = vpop.permute.xlu0 %1559
        %1561 = vrot.lane.b32.xlu0 %v1531, 4
        %v1562 = vpop.permute.xlu0 %1561
        %1563 = vrot.lane.b32.xlu0 %v1532, 4
        %v1564 = vpop.permute.xlu0 %1563
        %1565 = vrot.lane.b32.xlu0 %v1533, 4
        %v1566 = vpop.permute.xlu0 %1565
        %1567 = vrot.lane.b32.xlu0 %v1534, 4
        %v1568 = vpop.permute.xlu0 %1567
        %1569 = vrot.lane.b32.xlu0 %v1535, 4
        %v1570 = vpop.permute.xlu0 %1569
        %1571 = vrot.lane.b32.xlu0 %v1540, 4
        %v1572 = vpop.permute.xlu0 %1571
        %v1575 = vunpack.c.l.b16 %v1454
        %v1576 = vunpack.c.l.b16 %v1455
        %v1577 = vpack.c.b16 %v1576, %v1575
        %1578 = vrot.lane.b32.xlu0 %v1522, 8
        %v1579 = vpop.permute.xlu0 %1578
        %1580 = vrot.lane.b32.xlu0 %v1523, 8
        %v1581 = vpop.permute.xlu0 %1580
        %1582 = vrot.lane.b32.xlu0 %v1524, 8
        %v1583 = vpop.permute.xlu0 %1582
        %1584 = vrot.lane.b32.xlu0 %v1525, 8
        %v1585 = vpop.permute.xlu0 %1584
        %1586 = vrot.lane.b32.xlu0 %v1526, 8
        %v1587 = vpop.permute.xlu0 %1586
        %1588 = vrot.lane.b32.xlu0 %v1527, 8
        %v1589 = vpop.permute.xlu0 %1588
        %1590 = vrot.lane.b32.xlu0 %v1528, 8
        %v1591 = vpop.permute.xlu0 %1590
        %1592 = vrot.lane.b32.xlu0 %v1529, 8
        %v1593 = vpop.permute.xlu0 %1592
        %1594 = vrot.lane.b32.xlu0 %v1530, 8
        %v1595 = vpop.permute.xlu0 %1594
        %1596 = vrot.lane.b32.xlu0 %v1531, 8
        %v1597 = vpop.permute.xlu0 %1596
        %1598 = vrot.lane.b32.xlu0 %v1532, 8
        %v1599 = vpop.permute.xlu0 %1598
        %1600 = vrot.lane.b32.xlu0 %v1533, 8
        %v1601 = vpop.permute.xlu0 %1600
        %1602 = vrot.lane.b32.xlu0 %v1534, 8
        %v1603 = vpop.permute.xlu0 %1602
        %1604 = vrot.lane.b32.xlu0 %v1535, 8
        %v1605 = vpop.permute.xlu0 %1604
        %1606 = vrot.lane.b32.xlu0 %v1540, 8
        %v1607 = vpop.permute.xlu0 %1606
        %1608 = vrot.lane.b32.xlu0 %v1577, 8
        %v1609 = vpop.permute.xlu0 %1608
        %vm1610 = vcmask 31744
        %v1613 = vsel %vm1610, %v1520, %v1542
        %v1616 = vsel %vm1610, %v1521, %v1544
        %v1619 = vsel %vm1610, %v1522, %v1546
        %v1622 = vsel %vm1610, %v1523, %v1548
        %v1625 = vsel %vm1610, %v1524, %v1550
        %v1628 = vsel %vm1610, %v1525, %v1552
        %v1631 = vsel %vm1610, %v1526, %v1554
        %v1634 = vsel %vm1610, %v1527, %v1556
        %v1637 = vsel %vm1610, %v1528, %v1558
        %v1640 = vsel %vm1610, %v1529, %v1560
        %v1643 = vsel %vm1610, %v1530, %v1562
        %v1646 = vsel %vm1610, %v1531, %v1564
        %v1649 = vsel %vm1610, %v1532, %v1566
        %v1652 = vsel %vm1610, %v1533, %v1568
        %v1655 = vsel %vm1610, %v1534, %v1570
        %v1658 = vsel %vm1610, %v1535, %v1572
        %vm1659 = vcmask 64512
        %v1661 = vsel %vm1659, %v1613, %v1579
        %v1663 = vsel %vm1659, %v1616, %v1581
        %v1665 = vsel %vm1659, %v1619, %v1583
        %v1667 = vsel %vm1659, %v1622, %v1585
        %v1669 = vsel %vm1659, %v1625, %v1587
        %v1671 = vsel %vm1659, %v1628, %v1589
        %v1673 = vsel %vm1659, %v1631, %v1591
        %v1675 = vsel %vm1659, %v1634, %v1593
        %v1677 = vsel %vm1659, %v1637, %v1595
        %v1679 = vsel %vm1659, %v1640, %v1597
        %v1681 = vsel %vm1659, %v1643, %v1599
        %v1683 = vsel %vm1659, %v1646, %v1601
        %v1685 = vsel %vm1659, %v1649, %v1603
        %v1687 = vsel %vm1659, %v1652, %v1605
        %v1689 = vsel %vm1659, %v1655, %v1607
        %v1691 = vsel %vm1659, %v1658, %v1609
        %v1692 = vld [vmem:[%s3] sm:$0xf]
        %v1693 = vld [vmem:[%s3 + $0x4] sm:$0x3]
        %v1694 = vld [vmem:[#allocation2 + $0x8] sm:$0x1]
        %v1695 = vld [vmem:[#allocation2 + $0x14] sm:$0x1]
        %v1696 = vld [vmem:[#allocation2 + $0x20] sm:$0x1]
        %v1697 = vld [vmem:[#allocation2 + $0x2c] sm:$0x1]
        %v1698 = vld [vmem:[#allocation2 + $0x38] sm:$0x1]
        %v1699 = vld [vmem:[#allocation2 + $0x44] sm:$0x1]
        %v1700 = vld [vmem:[#allocation2 + $0x50] sm:$0x1]
        %v1701 = vld [vmem:[#allocation2 + $0x5c] sm:$0x1]
        %v1702 = vld [vmem:[#allocation2 + $0x68] sm:$0x1]
        %v1703 = vld [vmem:[#allocation2 + $0x74] sm:$0x1]
        %v1704 = vld [vmem:[#allocation2 + $0x80] sm:$0x1]
        %v1705 = vld [vmem:[#allocation2 + $0x8c] sm:$0x1]
        %v1706 = vld [vmem:[#allocation2 + $0x98] sm:$0x1]
        %v1707 = vld [vmem:[#allocation2 + $0xa4] sm:$0x1]
        %v1708 = vld [vmem:[#allocation2 + $0xb0] sm:$0x1]
        %v1709 = vld [vmem:[#allocation2 + $0xbc] sm:$0x1]
        %v1710 = vld [vmem:[#allocation2 + $0xc8] sm:$0x1]
        %v1711 = vld [vmem:[#allocation2 + $0xd4] sm:$0x1]
        %v1728 = vunpack.c.l.b16 %v1694
        %v1729 = vunpack.c.l.b16 %v1695
        %v1730 = vunpack.c.l.b16 %v1696
        %v1731 = vunpack.c.l.b16 %v1697
        %v1732 = vunpack.c.l.b16 %v1698
        %v1733 = vunpack.c.l.b16 %v1699
        %v1734 = vunpack.c.l.b16 %v1700
        %v1735 = vunpack.c.l.b16 %v1701
        %v1736 = vunpack.c.l.b16 %v1702
        %v1737 = vunpack.c.l.b16 %v1703
        %v1738 = vunpack.c.l.b16 %v1704
        %v1739 = vunpack.c.l.b16 %v1705
        %v1740 = vunpack.c.l.b16 %v1706
        %v1741 = vunpack.c.l.b16 %v1707
        %v1742 = vunpack.c.l.b16 %v1708
        %v1743 = vunpack.c.l.b16 %v1709
        %v1744 = vpack.c.b16 %v1728, %v1728
        %v1745 = vpack.c.b16 %v1729, %v1729
        %v1746 = vpack.c.b16 %v1730, %v1730
        %v1747 = vpack.c.b16 %v1731, %v1731
        %v1748 = vpack.c.b16 %v1732, %v1732
        %v1749 = vpack.c.b16 %v1733, %v1733
        %v1750 = vpack.c.b16 %v1734, %v1734
        %v1751 = vpack.c.b16 %v1735, %v1735
        %v1752 = vpack.c.b16 %v1736, %v1736
        %v1753 = vpack.c.b16 %v1737, %v1737
        %v1754 = vpack.c.b16 %v1738, %v1738
        %v1755 = vpack.c.b16 %v1739, %v1739
        %v1756 = vpack.c.b16 %v1740, %v1740
        %v1757 = vpack.c.b16 %v1741, %v1741
        %v1758 = vpack.c.b16 %v1742, %v1742
        %v1759 = vpack.c.b16 %v1743, %v1743
        %v1761 = vunpack.c.l.b16 %v1710
        %v1762 = vpack.c.b16 %v1761, %v1761
        %1763 = vrot.lane.b32.xlu0 %v1745, 4
        %v1764 = vpop.permute.xlu0 %1763
        %1765 = vrot.lane.b32.xlu0 %v1746, 4
        %v1766 = vpop.permute.xlu0 %1765
        %1767 = vrot.lane.b32.xlu0 %v1747, 4
        %v1768 = vpop.permute.xlu0 %1767
        %1769 = vrot.lane.b32.xlu0 %v1748, 4
        %v1770 = vpop.permute.xlu0 %1769
        %1771 = vrot.lane.b32.xlu0 %v1749, 4
        %v1772 = vpop.permute.xlu0 %1771
        %1773 = vrot.lane.b32.xlu0 %v1750, 4
        %v1774 = vpop.permute.xlu0 %1773
        %1775 = vrot.lane.b32.xlu0 %v1751, 4
        %v1776 = vpop.permute.xlu0 %1775
        %1777 = vrot.lane.b32.xlu0 %v1752, 4
        %v1778 = vpop.permute.xlu0 %1777
        %1779 = vrot.lane.b32.xlu0 %v1753, 4
        %v1780 = vpop.permute.xlu0 %1779
        %1781 = vrot.lane.b32.xlu0 %v1754, 4
        %v1782 = vpop.permute.xlu0 %1781
        %1783 = vrot.lane.b32.xlu0 %v1755, 4
        %v1784 = vpop.permute.xlu0 %1783
        %1785 = vrot.lane.b32.xlu0 %v1756, 4
        %v1786 = vpop.permute.xlu0 %1785
        %1787 = vrot.lane.b32.xlu0 %v1757, 4
        %v1788 = vpop.permute.xlu0 %1787
        %1789 = vrot.lane.b32.xlu0 %v1758, 4
        %v1790 = vpop.permute.xlu0 %1789
        %1791 = vrot.lane.b32.xlu0 %v1759, 4
        %v1792 = vpop.permute.xlu0 %1791
        %1793 = vrot.lane.b32.xlu0 %v1762, 4
        %v1794 = vpop.permute.xlu0 %1793
        %v1796 = vunpack.c.l.b16 %v1711
        %v1797 = vpack.c.b16 %v1796, %v1796
        %1798 = vrot.lane.b32.xlu0 %v1746, 8
        %v1799 = vpop.permute.xlu0 %1798
        %1800 = vrot.lane.b32.xlu0 %v1747, 8
        %v1801 = vpop.permute.xlu0 %1800
        %1802 = vrot.lane.b32.xlu0 %v1748, 8
        %v1803 = vpop.permute.xlu0 %1802
        %1804 = vrot.lane.b32.xlu0 %v1749, 8
        %v1805 = vpop.permute.xlu0 %1804
        %1806 = vrot.lane.b32.xlu0 %v1750, 8
        %v1807 = vpop.permute.xlu0 %1806
        %1808 = vrot.lane.b32.xlu0 %v1751, 8
        %v1809 = vpop.permute.xlu0 %1808
        %1810 = vrot.lane.b32.xlu0 %v1752, 8
        %v1811 = vpop.permute.xlu0 %1810
        %1812 = vrot.lane.b32.xlu0 %v1753, 8
        %v1813 = vpop.permute.xlu0 %1812
        %1814 = vrot.lane.b32.xlu0 %v1754, 8
        %v1815 = vpop.permute.xlu0 %1814
        %1816 = vrot.lane.b32.xlu0 %v1755, 8
        %v1817 = vpop.permute.xlu0 %1816
        %1818 = vrot.lane.b32.xlu0 %v1756, 8
        %v1819 = vpop.permute.xlu0 %1818
        %1820 = vrot.lane.b32.xlu0 %v1757, 8
        %v1821 = vpop.permute.xlu0 %1820
        %1822 = vrot.lane.b32.xlu0 %v1758, 8
        %v1823 = vpop.permute.xlu0 %1822
        %1824 = vrot.lane.b32.xlu0 %v1759, 8
        %v1825 = vpop.permute.xlu0 %1824
        %1826 = vrot.lane.b32.xlu0 %v1762, 8
        %v1827 = vpop.permute.xlu0 %1826
        %1828 = vrot.lane.b32.xlu0 %v1797, 8
        %v1829 = vpop.permute.xlu0 %1828
        %v1832 = vsel %vm1610, %v1744, %v1764
        %v1835 = vsel %vm1610, %v1745, %v1766
        %v1838 = vsel %vm1610, %v1746, %v1768
        %v1841 = vsel %vm1610, %v1747, %v1770
        %v1844 = vsel %vm1610, %v1748, %v1772
        %v1847 = vsel %vm1610, %v1749, %v1774
        %v1850 = vsel %vm1610, %v1750, %v1776
        %v1853 = vsel %vm1610, %v1751, %v1778
        %v1856 = vsel %vm1610, %v1752, %v1780
        %v1859 = vsel %vm1610, %v1753, %v1782
        %v1862 = vsel %vm1610, %v1754, %v1784
        %v1865 = vsel %vm1610, %v1755, %v1786
        %v1868 = vsel %vm1610, %v1756, %v1788
        %v1871 = vsel %vm1610, %v1757, %v1790
        %v1874 = vsel %vm1610, %v1758, %v1792
        %v1877 = vsel %vm1610, %v1759, %v1794
        %v1879 = vsel %vm1659, %v1832, %v1799
        %v1881 = vsel %vm1659, %v1835, %v1801
        %v1883 = vsel %vm1659, %v1838, %v1803
        %v1885 = vsel %vm1659, %v1841, %v1805
        %v1887 = vsel %vm1659, %v1844, %v1807
        %v1889 = vsel %vm1659, %v1847, %v1809
        %v1891 = vsel %vm1659, %v1850, %v1811
        %v1893 = vsel %vm1659, %v1853, %v1813
        %v1895 = vsel %vm1659, %v1856, %v1815
        %v1897 = vsel %vm1659, %v1859, %v1817
        %v1899 = vsel %vm1659, %v1862, %v1819
        %v1901 = vsel %vm1659, %v1865, %v1821
        %v1903 = vsel %vm1659, %v1868, %v1823
        %v1905 = vsel %vm1659, %v1871, %v1825
        %v1907 = vsel %vm1659, %v1874, %v1827
        %v1909 = vsel %vm1659, %v1877, %v1829
        %vm1910 = vsmask.f32 7424
        %v1911 = vshrl.u32 %v1661, 16
        %v1913 = vshll.u32 %v1661, 16
        %v1915 = vrot.slane %v1913, 1
        %v1916 = vor.u32 %v1911, %v1915
        %v1917 = vshll.u32 %v1879, 16
        %v1919 = vrot.slane %v1917, 1
        %v1920 = vsel %vm1910, %v1916, %v1919
        %v1921 = vshrl.u32 %v1663, 16
        %v1923 = vshll.u32 %v1663, 16
        %v1925 = vrot.slane %v1923, 1
        %v1926 = vor.u32 %v1921, %v1925
        %v1927 = vshll.u32 %v1881, 16
        %v1929 = vrot.slane %v1927, 1
        %v1930 = vsel %vm1910, %v1926, %v1929
        %v1931 = vshrl.u32 %v1665, 16
        %v1933 = vshll.u32 %v1665, 16
        %v1935 = vrot.slane %v1933, 1
        %v1936 = vor.u32 %v1931, %v1935
        %v1937 = vshll.u32 %v1883, 16
        %v1939 = vrot.slane %v1937, 1
        %v1940 = vsel %vm1910, %v1936, %v1939
        %v1941 = vshrl.u32 %v1667, 16
        %v1943 = vshll.u32 %v1667, 16
        %v1945 = vrot.slane %v1943, 1
        %v1946 = vor.u32 %v1941, %v1945
        %v1947 = vshll.u32 %v1885, 16
        %v1949 = vrot.slane %v1947, 1
        %v1950 = vsel %vm1910, %v1946, %v1949
        %v1951 = vshrl.u32 %v1669, 16
        %v1953 = vshll.u32 %v1669, 16
        %v1955 = vrot.slane %v1953, 1
        %v1956 = vor.u32 %v1951, %v1955
        %v1957 = vshll.u32 %v1887, 16
        %v1959 = vrot.slane %v1957, 1
        %v1960 = vsel %vm1910, %v1956, %v1959
        %v1961 = vshrl.u32 %v1671, 16
        %v1963 = vshll.u32 %v1671, 16
        %v1965 = vrot.slane %v1963, 1
        %v1966 = vor.u32 %v1961, %v1965
        %v1967 = vshll.u32 %v1889, 16
        %v1969 = vrot.slane %v1967, 1
        %v1970 = vsel %vm1910, %v1966, %v1969
        %v1971 = vshrl.u32 %v1673, 16
        %v1973 = vshll.u32 %v1673, 16
        %v1975 = vrot.slane %v1973, 1
        %v1976 = vor.u32 %v1971, %v1975
        %v1977 = vshll.u32 %v1891, 16
        %v1979 = vrot.slane %v1977, 1
        %v1980 = vsel %vm1910, %v1976, %v1979
        %v1981 = vshrl.u32 %v1675, 16
        %v1983 = vshll.u32 %v1675, 16
        %v1985 = vrot.slane %v1983, 1
        %v1986 = vor.u32 %v1981, %v1985
        %v1987 = vshll.u32 %v1893, 16
        %v1989 = vrot.slane %v1987, 1
        %v1990 = vsel %vm1910, %v1986, %v1989
        %v1991 = vshrl.u32 %v1677, 16
        %v1993 = vshll.u32 %v1677, 16
        %v1995 = vrot.slane %v1993, 1
        %v1996 = vor.u32 %v1991, %v1995
        %v1997 = vshll.u32 %v1895, 16
        %v1999 = vrot.slane %v1997, 1
        %v2000 = vsel %vm1910, %v1996, %v1999
        %v2001 = vshrl.u32 %v1679, 16
        %v2003 = vshll.u32 %v1679, 16
        %v2005 = vrot.slane %v2003, 1
        %v2006 = vor.u32 %v2001, %v2005
        %v2007 = vshll.u32 %v1897, 16
        %v2009 = vrot.slane %v2007, 1
        %v2010 = vsel %vm1910, %v2006, %v2009
        %v2011 = vshrl.u32 %v1681, 16
        %v2013 = vshll.u32 %v1681, 16
        %v2015 = vrot.slane %v2013, 1
        %v2016 = vor.u32 %v2011, %v2015
        %v2017 = vshll.u32 %v1899, 16
        %v2019 = vrot.slane %v2017, 1
        %v2020 = vsel %vm1910, %v2016, %v2019
        %v2021 = vshrl.u32 %v1683, 16
        %v2023 = vshll.u32 %v1683, 16
        %v2025 = vrot.slane %v2023, 1
        %v2026 = vor.u32 %v2021, %v2025
        %v2027 = vshll.u32 %v1901, 16
        %v2029 = vrot.slane %v2027, 1
        %v2030 = vsel %vm1910, %v2026, %v2029
        %v2031 = vshrl.u32 %v1685, 16
        %v2033 = vshll.u32 %v1685, 16
        %v2035 = vrot.slane %v2033, 1
        %v2036 = vor.u32 %v2031, %v2035
        %v2037 = vshll.u32 %v1903, 16
        %v2039 = vrot.slane %v2037, 1
        %v2040 = vsel %vm1910, %v2036, %v2039
        %v2041 = vshrl.u32 %v1687, 16
        %v2043 = vshll.u32 %v1687, 16
        %v2045 = vrot.slane %v2043, 1
        %v2046 = vor.u32 %v2041, %v2045
        %v2047 = vshll.u32 %v1905, 16
        %v2049 = vrot.slane %v2047, 1
        %v2050 = vsel %vm1910, %v2046, %v2049
        %v2051 = vshrl.u32 %v1689, 16
        %v2053 = vshll.u32 %v1689, 16
        %v2055 = vrot.slane %v2053, 1
        %v2056 = vor.u32 %v2051, %v2055
        %v2057 = vshll.u32 %v1907, 16
        %v2059 = vrot.slane %v2057, 1
        %v2060 = vsel %vm1910, %v2056, %v2059
        %v2061 = vshrl.u32 %v1691, 16
        %v2063 = vshll.u32 %v1691, 16
        %v2065 = vrot.slane %v2063, 1
        %v2066 = vor.u32 %v2061, %v2065
        %v2067 = vshll.u32 %v1909, 16
        %v2069 = vrot.slane %v2067, 1
        %v2070 = vsel %vm1910, %v2066, %v2069
        %s2071 = scalar_lea.vmem %s3, 8
        %v2072 = vld [vmem:[%s2071] sm:$0xf]
        %v2073 = vld [vmem:[%s2071 + $0x4] sm:$0x3]
        %v2076 = vunpack.c.l.b16 %v2072
        %v2077 = vunpack.c.l.b16 %v2073
        %v2078 = vpack.c.b16 %v2077, %v2076
        %vm2079 = vcmask 97280
        %v2081 = vsel %vm2079, %v1920, 0
        %v2084 = vsel %vm2079, %v1930, 0
        %v2087 = vsel %vm2079, %v1940, 0
        %v2090 = vsel %vm2079, %v1950, 0
        %v2093 = vsel %vm2079, %v1960, 0
        %v2096 = vsel %vm2079, %v1970, 0
        %v2099 = vsel %vm2079, %v1980, 0
        %v2102 = vsel %vm2079, %v1990, 0
        %v2105 = vsel %vm2079, %v2000, 0
        %v2108 = vsel %vm2079, %v2010, 0
        %v2111 = vsel %vm2079, %v2020, 0
        %v2114 = vsel %vm2079, %v2030, 0
        %v2117 = vsel %vm2079, %v2040, 0
        %v2120 = vsel %vm2079, %v2050, 0
        %v2123 = vsel %vm2079, %v2060, 0
        %v2126 = vsel %vm2079, %v2070, 0
        %vm2128 = vcmask 1045504
        %v2130 = vsel %vm2128, %v2078, 0
        %2132 = vmatprep.subr.bf16.mxu0 0
        %2133 = vmatpush1.bf16.msra.mxu0 %v2130
        %2134 = vmatprep.subr.bf16.mxu0 0
        %2135 = vmatpush1.bf16.msra.mxu0 0
        %2136 = vmatprep.subr.bf16.mxu0 0
        %2137 = vmatpush1.bf16.msra.mxu0 0
        %2138 = vmatprep.subr.bf16.mxu0 0
        %2139 = vmatpush1.bf16.msra.mxu0 0
        %2140 = vmatprep.subr.bf16.mxu0 0
        %2141 = vmatpush1.bf16.msra.mxu0 0
        %2142 = vmatprep.subr.bf16.mxu0 0
        %2143 = vmatpush1.bf16.msra.mxu0 0
        %2144 = vmatprep.subr.bf16.mxu0 0
        %2145 = vmatpush1.bf16.msra.mxu0 0
        %2146 = vmatprep.subr.bf16.mxu0 0
        %2147 = vmatpush1.bf16.msra.mxu0 0
        %2148 = vmatprep.subr.bf16.mxu0 0
        %2149 = vmatpush1.bf16.msra.mxu0 0
        %2150 = vmatprep.subr.bf16.mxu0 0
        %2151 = vmatpush1.bf16.msra.mxu0 0
        %2152 = vmatprep.subr.bf16.mxu0 0
        %2153 = vmatpush1.bf16.msra.mxu0 0
        %2154 = vmatprep.subr.bf16.mxu0 0
        %2155 = vmatpush1.bf16.msra.mxu0 0
        %2156 = vmatprep.subr.bf16.mxu0 0
        %2157 = vmatpush1.bf16.msra.mxu0 0
        %2158 = vmatprep.subr.bf16.mxu0 0
        %2159 = vmatpush1.bf16.msra.mxu0 0
        %2160 = vmatprep.subr.bf16.mxu0 0
        %2161 = vmatpush1.bf16.msra.mxu0 0
        %2162 = vmatprep.subr.bf16.mxu0 0
        %2163 = vmatpush1.bf16.msra.mxu0 0
        %2164 = vmatprep.mubr.bf16.mxu0 0
        %2165 = vmatmul.mubr.bf16.gmra.mrb[0].mxu0 %v2081
        %v2166 = vpop.f32.mrb[0].mxu0
        %v2167 = vadd.f32 0.0, %v2166
        %v2168 = vpop.f32.mrb[0].mxu0
        %v2169 = vpop.f32.mrb[0].mxu0
        %v2170 = vadd.f32 0.0, %v2169
        %v2171 = vpop.f32.mrb[0].mxu0
        %2172 = vmatprep.mubr.bf16.mxu0 0
        %2173 = vmatmul.mubr.bf16.gmra.mrb[0].mxu0 %v2084
        %v2174 = vpop.f32.mrb[0].mxu0
        %v2175 = vadd.f32 0.0, %v2174
        %v2176 = vpop.f32.mrb[0].mxu0
        %v2177 = vpop.f32.mrb[0].mxu0
        %v2178 = vadd.f32 0.0, %v2177
        %v2179 = vpop.f32.mrb[0].mxu0
        %2180 = vmatprep.mubr.bf16.mxu0 0
        %2181 = vmatmul.mubr.bf16.gmra.mrb[0].mxu0 %v2087
        %v2182 = vpop.f32.mrb[0].mxu0
        %v2183 = vadd.f32 0.0, %v2182
        %v2184 = vpop.f32.mrb[0].mxu0
        %v2185 = vpop.f32.mrb[0].mxu0
        %v2186 = vadd.f32 0.0, %v2185
        %v2187 = vpop.f32.mrb[0].mxu0
        %2188 = vmatprep.mubr.bf16.mxu0 0
        %2189 = vmatmul.mubr.bf16.gmra.mrb[0].mxu0 %v2090
        %v2190 = vpop.f32.mrb[0].mxu0
        %v2191 = vadd.f32 0.0, %v2190
        %v2192 = vpop.f32.mrb[0].mxu0
        %v2193 = vpop.f32.mrb[0].mxu0
        %v2194 = vadd.f32 0.0, %v2193
        %v2195 = vpop.f32.mrb[0].mxu0
        %2196 = vmatprep.mubr.bf16.mxu0 0
        %2197 = vmatmul.mubr.bf16.gmra.mrb[0].mxu0 %v2093
        %v2198 = vpop.f32.mrb[0].mxu0
        %v2199 = vadd.f32 0.0, %v2198
        %v2200 = vpop.f32.mrb[0].mxu0
        %v2201 = vpop.f32.mrb[0].mxu0
        %v2202 = vadd.f32 0.0, %v2201
        %v2203 = vpop.f32.mrb[0].mxu0
        %2204 = vmatprep.mubr.bf16.mxu0 0
        %2205 = vmatmul.mubr.bf16.gmra.mrb[0].mxu0 %v2096
        %v2206 = vpop.f32.mrb[0].mxu0
        %v2207 = vadd.f32 0.0, %v2206
        %v2208 = vpop.f32.mrb[0].mxu0
        %v2209 = vpop.f32.mrb[0].mxu0
        %v2210 = vadd.f32 0.0, %v2209
        %v2211 = vpop.f32.mrb[0].mxu0
        %2212 = vmatprep.mubr.bf16.mxu0 0
        %2213 = vmatmul.mubr.bf16.gmra.mrb[0].mxu0 %v2099
        %v2214 = vpop.f32.mrb[0].mxu0
        %v2215 = vadd.f32 0.0, %v2214
        %v2216 = vpop.f32.mrb[0].mxu0
        %v2217 = vpop.f32.mrb[0].mxu0
        %v2218 = vadd.f32 0.0, %v2217
        %v2219 = vpop.f32.mrb[0].mxu0
        %2220 = vmatprep.mubr.bf16.mxu0 0
        %2221 = vmatmul.mubr.bf16.gmra.mrb[0].mxu0 %v2102
        %v2222 = vpop.f32.mrb[0].mxu0
        %v2223 = vadd.f32 0.0, %v2222
        %v2224 = vpop.f32.mrb[0].mxu0
        %v2225 = vpop.f32.mrb[0].mxu0
        %v2226 = vadd.f32 0.0, %v2225
        %v2227 = vpop.f32.mrb[0].mxu0
        %2228 = vmatprep.mubr.bf16.mxu0 0
        %2229 = vmatmul.mubr.bf16.gmra.mrb[0].mxu0 %v2105
        %v2230 = vpop.f32.mrb[0].mxu0
        %v2231 = vadd.f32 0.0, %v2230
        %v2232 = vpop.f32.mrb[0].mxu0
        %v2233 = vpop.f32.mrb[0].mxu0
        %v2234 = vadd.f32 0.0, %v2233
        %v2235 = vpop.f32.mrb[0].mxu0
        %2236 = vmatprep.mubr.bf16.mxu0 0
        %2237 = vmatmul.mubr.bf16.gmra.mrb[0].mxu0 %v2108
        %v2238 = vpop.f32.mrb[0].mxu0
        %v2239 = vadd.f32 0.0, %v2238
        %v2240 = vpop.f32.mrb[0].mxu0
        %v2241 = vpop.f32.mrb[0].mxu0
        %v2242 = vadd.f32 0.0, %v2241
        %v2243 = vpop.f32.mrb[0].mxu0
        %2244 = vmatprep.mubr.bf16.mxu0 0
        %2245 = vmatmul.mubr.bf16.gmra.mrb[0].mxu0 %v2111
        %v2246 = vpop.f32.mrb[0].mxu0
        %v2247 = vadd.f32 0.0, %v2246
        %v2248 = vpop.f32.mrb[0].mxu0
        %v2249 = vpop.f32.mrb[0].mxu0
        %v2250 = vadd.f32 0.0, %v2249
        %v2251 = vpop.f32.mrb[0].mxu0
        %2252 = vmatprep.mubr.bf16.mxu0 0
        %2253 = vmatmul.mubr.bf16.gmra.mrb[0].mxu0 %v2114
        %v2254 = vpop.f32.mrb[0].mxu0
        %v2255 = vadd.f32 0.0, %v2254
        %v2256 = vpop.f32.mrb[0].mxu0
        %v2257 = vpop.f32.mrb[0].mxu0
        %v2258 = vadd.f32 0.0, %v2257
        %v2259 = vpop.f32.mrb[0].mxu0
        %2260 = vmatprep.mubr.bf16.mxu0 0
        %2261 = vmatmul.mubr.bf16.gmra.mrb[0].mxu0 %v2117
        %v2262 = vpop.f32.mrb[0].mxu0
        %v2263 = vadd.f32 0.0, %v2262
        %v2264 = vpop.f32.mrb[0].mxu0
        %v2265 = vpop.f32.mrb[0].mxu0
        %v2266 = vadd.f32 0.0, %v2265
        %v2267 = vpop.f32.mrb[0].mxu0
        %2268 = vmatprep.mubr.bf16.mxu0 0
        %2269 = vmatmul.mubr.bf16.gmra.mrb[0].mxu0 %v2120
        %v2270 = vpop.f32.mrb[0].mxu0
        %v2271 = vadd.f32 0.0, %v2270
        %v2272 = vpop.f32.mrb[0].mxu0
        %v2273 = vpop.f32.mrb[0].mxu0
        %v2274 = vadd.f32 0.0, %v2273
        %v2275 = vpop.f32.mrb[0].mxu0
        %2276 = vmatprep.mubr.bf16.mxu0 0
        %2277 = vmatmul.mubr.bf16.gmra.mrb[0].mxu0 %v2123
        %v2278 = vpop.f32.mrb[0].mxu0
        %v2279 = vadd.f32 0.0, %v2278
        %v2280 = vpop.f32.mrb[0].mxu0
        %v2281 = vpop.f32.mrb[0].mxu0
        %v2282 = vadd.f32 0.0, %v2281
        %v2283 = vpop.f32.mrb[0].mxu0
        %2284 = vmatprep.mubr.bf16.mxu0 0
        %2285 = vmatmul.mubr.bf16.gmra.mrb[0].mxu0 %v2126
        %v2286 = vpop.f32.mrb[0].mxu0
        %v2287 = vadd.f32 0.0, %v2286
        %v2288 = vpop.f32.mrb[0].mxu0
        %v2289 = vpop.f32.mrb[0].mxu0
        %v2290 = vadd.f32 0.0, %v2289
        %v2291 = vpop.f32.mrb[0].mxu0
        %2292 = vdwg.mxu0
        %v2295 = vunpack.c.l.b16 %v1692
        %v2296 = vunpack.c.l.b16 %v1693
        %v2297 = vpack.c.b16 %v2296, %v2295
        %v2298 = vsel %vm2079, %v1661, 0
        %v2300 = vsel %vm2079, %v1663, 0
        %v2302 = vsel %vm2079, %v1665, 0
        %v2304 = vsel %vm2079, %v1667, 0
        %v2306 = vsel %vm2079, %v1669, 0
        %v2308 = vsel %vm2079, %v1671, 0
        %v2310 = vsel %vm2079, %v1673, 0
        %v2312 = vsel %vm2079, %v1675, 0
        %v2314 = vsel %vm2079, %v1677, 0
        %v2316 = vsel %vm2079, %v1679, 0
        %v2318 = vsel %vm2079, %v1681, 0
        %v2320 = vsel %vm2079, %v1683, 0
        %v2322 = vsel %vm2079, %v1685, 0
        %v2324 = vsel %vm2079, %v1687, 0
        %v2326 = vsel %vm2079, %v1689, 0
        %v2328 = vsel %vm2079, %v1691, 0
        %v2331 = vsel %vm2128, %v2297, 0
        %2333 = vmatprep.subr.bf16.mxu0 0
        %2334 = vmatpush1.bf16.msra.mxu0 %v2331
        %2335 = vmatprep.subr.bf16.mxu0 0
        %2336 = vmatpush1.bf16.msra.mxu0 0
        %2337 = vmatprep.subr.bf16.mxu0 0
        %2338 = vmatpush1.bf16.msra.mxu0 0
        %2339 = vmatprep.subr.bf16.mxu0 0
        %2340 = vmatpush1.bf16.msra.mxu0 0
        %2341 = vmatprep.subr.bf16.mxu0 0
        %2342 = vmatpush1.bf16.msra.mxu0 0
        %2343 = vmatprep.subr.bf16.mxu0 0
        %2344 = vmatpush1.bf16.msra.mxu0 0
        %2345 = vmatprep.subr.bf16.mxu0 0
        %2346 = vmatpush1.bf16.msra.mxu0 0
        %2347 = vmatprep.subr.bf16.mxu0 0
        %2348 = vmatpush1.bf16.msra.mxu0 0
        %2349 = vmatprep.subr.bf16.mxu0 0
        %2350 = vmatpush1.bf16.msra.mxu0 0
        %2351 = vmatprep.subr.bf16.mxu0 0
        %2352 = vmatpush1.bf16.msra.mxu0 0
        %2353 = vmatprep.subr.bf16.mxu0 0
        %2354 = vmatpush1.bf16.msra.mxu0 0
        %2355 = vmatprep.subr.bf16.mxu0 0
        %2356 = vmatpush1.bf16.msra.mxu0 0
        %2357 = vmatprep.subr.bf16.mxu0 0
        %2358 = vmatpush1.bf16.msra.mxu0 0
        %2359 = vmatprep.subr.bf16.mxu0 0
        %2360 = vmatpush1.bf16.msra.mxu0 0
        %2361 = vmatprep.subr.bf16.mxu0 0
        %2362 = vmatpush1.bf16.msra.mxu0 0
        %2363 = vmatprep.subr.bf16.mxu0 0
        %2364 = vmatpush1.bf16.msra.mxu0 0
        %2365 = vmatprep.mubr.bf16.mxu0 0
        %2366 = vmatmul.mubr.bf16.gmra.mrb[0].mxu0 %v2298
        %v2367 = vpop.f32.mrb[0].mxu0
        %v2368 = vadd.f32 %v2167, %v2367
        %v2369 = vpop.f32.mrb[0].mxu0
        %v2370 = vpop.f32.mrb[0].mxu0
        %v2371 = vadd.f32 %v2170, %v2370
        %v2372 = vpop.f32.mrb[0].mxu0
        %2373 = vmatprep.mubr.bf16.mxu0 0
        %2374 = vmatmul.mubr.bf16.gmra.mrb[0].mxu0 %v2300
        %v2375 = vpop.f32.mrb[0].mxu0
        %v2376 = vadd.f32 %v2175, %v2375
        %v2377 = vpop.f32.mrb[0].mxu0
        %v2378 = vpop.f32.mrb[0].mxu0
        %v2379 = vadd.f32 %v2178, %v2378
        %v2380 = vpop.f32.mrb[0].mxu0
        %2381 = vmatprep.mubr.bf16.mxu0 0
        %2382 = vmatmul.mubr.bf16.gmra.mrb[0].mxu0 %v2302
        %v2383 = vpop.f32.mrb[0].mxu0
        %v2384 = vadd.f32 %v2183, %v2383
        %v2385 = vpop.f32.mrb[0].mxu0
        %v2386 = vpop.f32.mrb[0].mxu0
        %v2387 = vadd.f32 %v2186, %v2386
        %v2388 = vpop.f32.mrb[0].mxu0
        %2389 = vmatprep.mubr.bf16.mxu0 0
        %2390 = vmatmul.mubr.bf16.gmra.mrb[0].mxu0 %v2304
        %v2391 = vpop.f32.mrb[0].mxu0
        %v2392 = vadd.f32 %v2191, %v2391
        %v2393 = vpop.f32.mrb[0].mxu0
        %v2394 = vpop.f32.mrb[0].mxu0
        %v2395 = vadd.f32 %v2194, %v2394
        %v2396 = vpop.f32.mrb[0].mxu0
        %2397 = vmatprep.mubr.bf16.mxu0 0
        %2398 = vmatmul.mubr.bf16.gmra.mrb[0].mxu0 %v2306
        %v2399 = vpop.f32.mrb[0].mxu0
        %v2400 = vadd.f32 %v2199, %v2399
        %v2401 = vpop.f32.mrb[0].mxu0
        %v2402 = vpop.f32.mrb[0].mxu0
        %v2403 = vadd.f32 %v2202, %v2402
        %v2404 = vpop.f32.mrb[0].mxu0
        %2405 = vmatprep.mubr.bf16.mxu0 0
        %2406 = vmatmul.mubr.bf16.gmra.mrb[0].mxu0 %v2308
        %v2407 = vpop.f32.mrb[0].mxu0
        %v2408 = vadd.f32 %v2207, %v2407
        %v2409 = vpop.f32.mrb[0].mxu0
        %v2410 = vpop.f32.mrb[0].mxu0
        %v2411 = vadd.f32 %v2210, %v2410
        %v2412 = vpop.f32.mrb[0].mxu0
        %2413 = vmatprep.mubr.bf16.mxu0 0
        %2414 = vmatmul.mubr.bf16.gmra.mrb[0].mxu0 %v2310
        %v2415 = vpop.f32.mrb[0].mxu0
        %v2416 = vadd.f32 %v2215, %v2415
        %v2417 = vpop.f32.mrb[0].mxu0
        %v2418 = vpop.f32.mrb[0].mxu0
        %v2419 = vadd.f32 %v2218, %v2418
        %v2420 = vpop.f32.mrb[0].mxu0
        %2421 = vmatprep.mubr.bf16.mxu0 0
        %2422 = vmatmul.mubr.bf16.gmra.mrb[0].mxu0 %v2312
        %v2423 = vpop.f32.mrb[0].mxu0
        %v2424 = vadd.f32 %v2223, %v2423
        %v2425 = vpop.f32.mrb[0].mxu0
        %v2426 = vpop.f32.mrb[0].mxu0
        %v2427 = vadd.f32 %v2226, %v2426
        %v2428 = vpop.f32.mrb[0].mxu0
        %2429 = vmatprep.mubr.bf16.mxu0 0
        %2430 = vmatmul.mubr.bf16.gmra.mrb[0].mxu0 %v2314
        %v2431 = vpop.f32.mrb[0].mxu0
        %v2432 = vadd.f32 %v2231, %v2431
        %v2433 = vpop.f32.mrb[0].mxu0
        %v2434 = vpop.f32.mrb[0].mxu0
        %v2435 = vadd.f32 %v2234, %v2434
        %v2436 = vpop.f32.mrb[0].mxu0
        %2437 = vmatprep.mubr.bf16.mxu0 0
        %2438 = vmatmul.mubr.bf16.gmra.mrb[0].mxu0 %v2316
        %v2439 = vpop.f32.mrb[0].mxu0
        %v2440 = vadd.f32 %v2239, %v2439
        %v2441 = vpop.f32.mrb[0].mxu0
        %v2442 = vpop.f32.mrb[0].mxu0
        %v2443 = vadd.f32 %v2242, %v2442
        %v2444 = vpop.f32.mrb[0].mxu0
        %2445 = vmatprep.mubr.bf16.mxu0 0
        %2446 = vmatmul.mubr.bf16.gmra.mrb[0].mxu0 %v2318
        %v2447 = vpop.f32.mrb[0].mxu0
        %v2448 = vadd.f32 %v2247, %v2447
        %v2449 = vpop.f32.mrb[0].mxu0
        %v2450 = vpop.f32.mrb[0].mxu0
        %v2451 = vadd.f32 %v2250, %v2450
        %v2452 = vpop.f32.mrb[0].mxu0
        %2453 = vmatprep.mubr.bf16.mxu0 0
        %2454 = vmatmul.mubr.bf16.gmra.mrb[0].mxu0 %v2320
        %v2455 = vpop.f32.mrb[0].mxu0
        %v2456 = vadd.f32 %v2255, %v2455
        %v2457 = vpop.f32.mrb[0].mxu0
        %v2458 = vpop.f32.mrb[0].mxu0
        %v2459 = vadd.f32 %v2258, %v2458
        %v2460 = vpop.f32.mrb[0].mxu0
        %2461 = vmatprep.mubr.bf16.mxu0 0
        %2462 = vmatmul.mubr.bf16.gmra.mrb[0].mxu0 %v2322
        %v2463 = vpop.f32.mrb[0].mxu0
        %v2464 = vadd.f32 %v2263, %v2463
        %v2465 = vpop.f32.mrb[0].mxu0
        %v2466 = vpop.f32.mrb[0].mxu0
        %v2467 = vadd.f32 %v2266, %v2466
        %v2468 = vpop.f32.mrb[0].mxu0
        %2469 = vmatprep.mubr.bf16.mxu0 0
        %2470 = vmatmul.mubr.bf16.gmra.mrb[0].mxu0 %v2324
        %v2471 = vpop.f32.mrb[0].mxu0
        %v2472 = vadd.f32 %v2271, %v2471
        %v2473 = vpop.f32.mrb[0].mxu0
        %v2474 = vpop.f32.mrb[0].mxu0
        %v2475 = vadd.f32 %v2274, %v2474
        %v2476 = vpop.f32.mrb[0].mxu0
        %2477 = vmatprep.mubr.bf16.mxu0 0
        %2478 = vmatmul.mubr.bf16.gmra.mrb[0].mxu0 %v2326
        %v2479 = vpop.f32.mrb[0].mxu0
        %v2480 = vadd.f32 %v2279, %v2479
        %v2481 = vpop.f32.mrb[0].mxu0
        %v2482 = vpop.f32.mrb[0].mxu0
        %v2483 = vadd.f32 %v2282, %v2482
        %v2484 = vpop.f32.mrb[0].mxu0
        %2485 = vmatprep.mubr.bf16.mxu0 0
        %2486 = vmatmul.mubr.bf16.gmra.mrb[0].mxu0 %v2328
        %v2487 = vpop.f32.mrb[0].mxu0
        %v2488 = vadd.f32 %v2287, %v2487
        %v2489 = vpop.f32.mrb[0].mxu0
        %v2490 = vpop.f32.mrb[0].mxu0
        %v2491 = vadd.f32 %v2290, %v2490
        %v2492 = vpop.f32.mrb[0].mxu0
        %2493 = vdwg.mxu0
        %v2494 = vld [vmem:[#allocation2] sm:$0xe]
        %v2495 = vld [vmem:[#allocation2 + $0xc] sm:$0xe]
        %v2496 = vld [vmem:[#allocation2 + $0x18] sm:$0xe]
        %v2497 = vld [vmem:[#allocation2 + $0x24] sm:$0xe]
        %v2498 = vld [vmem:[#allocation2 + $0x30] sm:$0xe]
        %v2499 = vld [vmem:[#allocation2 + $0x3c] sm:$0xe]
        %v2500 = vld [vmem:[#allocation2 + $0x48] sm:$0xe]
        %v2501 = vld [vmem:[#allocation2 + $0x54] sm:$0xe]
        %v2502 = vld [vmem:[#allocation2 + $0x60] sm:$0xe]
        %v2503 = vld [vmem:[#allocation2 + $0x6c] sm:$0xe]
        %v2504 = vld [vmem:[#allocation2 + $0x78] sm:$0xe]
        %v2505 = vld [vmem:[#allocation2 + $0x84] sm:$0xe]
        %v2506 = vld [vmem:[#allocation2 + $0x90] sm:$0xe]
        %v2507 = vld [vmem:[#allocation2 + $0x9c] sm:$0xe]
        %v2508 = vld [vmem:[#allocation2 + $0xa8] sm:$0xe]
        %v2509 = vld [vmem:[#allocation2 + $0xb4] sm:$0xe]
        %v2510 = vld [vmem:[#allocation2 + $0xc0] sm:$0xe]
        %v2511 = vld [vmem:[#allocation2 + $0xcc] sm:$0xe]
        %v2528 = vunpack.c.l.b16 %v2494
        %v2529 = vunpack.c.l.b16 %v2495
        %v2530 = vunpack.c.l.b16 %v2496
        %v2531 = vunpack.c.l.b16 %v2497
        %v2532 = vunpack.c.l.b16 %v2498
        %v2533 = vunpack.c.l.b16 %v2499
        %v2534 = vunpack.c.l.b16 %v2500
        %v2535 = vunpack.c.l.b16 %v2501
        %v2536 = vunpack.c.l.b16 %v2502
        %v2537 = vunpack.c.l.b16 %v2503
        %v2538 = vunpack.c.l.b16 %v2504
        %v2539 = vunpack.c.l.b16 %v2505
        %v2540 = vunpack.c.l.b16 %v2506
        %v2541 = vunpack.c.l.b16 %v2507
        %v2542 = vunpack.c.l.b16 %v2508
        %v2543 = vunpack.c.l.b16 %v2509
        %v2544 = vpack.c.b16 %v1489, %v2528
        %v2545 = vpack.c.b16 %v1491, %v2529
        %v2546 = vpack.c.b16 %v1493, %v2530
        %v2547 = vpack.c.b16 %v1495, %v2531
        %v2548 = vpack.c.b16 %v1497, %v2532
        %v2549 = vpack.c.b16 %v1499, %v2533
        %v2550 = vpack.c.b16 %v1501, %v2534
        %v2551 = vpack.c.b16 %v1503, %v2535
        %v2552 = vpack.c.b16 %v1505, %v2536
        %v2553 = vpack.c.b16 %v1507, %v2537
        %v2554 = vpack.c.b16 %v1509, %v2538
        %v2555 = vpack.c.b16 %v1511, %v2539
        %v2556 = vpack.c.b16 %v1513, %v2540
        %v2557 = vpack.c.b16 %v1515, %v2541
        %v2558 = vpack.c.b16 %v1517, %v2542
        %v2559 = vpack.c.b16 %v1519, %v2543
        %v2561 = vunpack.c.l.b16 %v2510
        %v2562 = vpack.c.b16 %v1539, %v2561
        %2563 = vrot.lane.b32.xlu0 %v2545, 4
        %v2564 = vpop.permute.xlu0 %2563
        %2565 = vrot.lane.b32.xlu0 %v2546, 4
        %v2566 = vpop.permute.xlu0 %2565
        %2567 = vrot.lane.b32.xlu0 %v2547, 4
        %v2568 = vpop.permute.xlu0 %2567
        %2569 = vrot.lane.b32.xlu0 %v2548, 4
        %v2570 = vpop.permute.xlu0 %2569
        %2571 = vrot.lane.b32.xlu0 %v2549, 4
        %v2572 = vpop.permute.xlu0 %2571
        %2573 = vrot.lane.b32.xlu0 %v2550, 4
        %v2574 = vpop.permute.xlu0 %2573
        %2575 = vrot.lane.b32.xlu0 %v2551, 4
        %v2576 = vpop.permute.xlu0 %2575
        %2577 = vrot.lane.b32.xlu0 %v2552, 4
        %v2578 = vpop.permute.xlu0 %2577
        %2579 = vrot.lane.b32.xlu0 %v2553, 4
        %v2580 = vpop.permute.xlu0 %2579
        %2581 = vrot.lane.b32.xlu0 %v2554, 4
        %v2582 = vpop.permute.xlu0 %2581
        %2583 = vrot.lane.b32.xlu0 %v2555, 4
        %v2584 = vpop.permute.xlu0 %2583
        %2585 = vrot.lane.b32.xlu0 %v2556, 4
        %v2586 = vpop.permute.xlu0 %2585
        %2587 = vrot.lane.b32.xlu0 %v2557, 4
        %v2588 = vpop.permute.xlu0 %2587
        %2589 = vrot.lane.b32.xlu0 %v2558, 4
        %v2590 = vpop.permute.xlu0 %2589
        %2591 = vrot.lane.b32.xlu0 %v2559, 4
        %v2592 = vpop.permute.xlu0 %2591
        %2593 = vrot.lane.b32.xlu0 %v2562, 4
        %v2594 = vpop.permute.xlu0 %2593
        %v2596 = vunpack.c.l.b16 %v2511
        %v2597 = vpack.c.b16 %v1576, %v2596
        %2598 = vrot.lane.b32.xlu0 %v2546, 8
        %v2599 = vpop.permute.xlu0 %2598
        %2600 = vrot.lane.b32.xlu0 %v2547, 8
        %v2601 = vpop.permute.xlu0 %2600
        %2602 = vrot.lane.b32.xlu0 %v2548, 8
        %v2603 = vpop.permute.xlu0 %2602
        %2604 = vrot.lane.b32.xlu0 %v2549, 8
        %v2605 = vpop.permute.xlu0 %2604
        %2606 = vrot.lane.b32.xlu0 %v2550, 8
        %v2607 = vpop.permute.xlu0 %2606
        %2608 = vrot.lane.b32.xlu0 %v2551, 8
        %v2609 = vpop.permute.xlu0 %2608
        %2610 = vrot.lane.b32.xlu0 %v2552, 8
        %v2611 = vpop.permute.xlu0 %2610
        %2612 = vrot.lane.b32.xlu0 %v2553, 8
        %v2613 = vpop.permute.xlu0 %2612
        %2614 = vrot.lane.b32.xlu0 %v2554, 8
        %v2615 = vpop.permute.xlu0 %2614
        %2616 = vrot.lane.b32.xlu0 %v2555, 8
        %v2617 = vpop.permute.xlu0 %2616
        %2618 = vrot.lane.b32.xlu0 %v2556, 8
        %v2619 = vpop.permute.xlu0 %2618
        %2620 = vrot.lane.b32.xlu0 %v2557, 8
        %v2621 = vpop.permute.xlu0 %2620
        %2622 = vrot.lane.b32.xlu0 %v2558, 8
        %v2623 = vpop.permute.xlu0 %2622
        %2624 = vrot.lane.b32.xlu0 %v2559, 8
        %v2625 = vpop.permute.xlu0 %2624
        %2626 = vrot.lane.b32.xlu0 %v2562, 8
        %v2627 = vpop.permute.xlu0 %2626
        %2628 = vrot.lane.b32.xlu0 %v2597, 8
        %v2629 = vpop.permute.xlu0 %2628
        %v2632 = vsel %vm1610, %v2544, %v2564
        %v2635 = vsel %vm1610, %v2545, %v2566
        %v2638 = vsel %vm1610, %v2546, %v2568
        %v2641 = vsel %vm1610, %v2547, %v2570
        %v2644 = vsel %vm1610, %v2548, %v2572
        %v2647 = vsel %vm1610, %v2549, %v2574
        %v2650 = vsel %vm1610, %v2550, %v2576
        %v2653 = vsel %vm1610, %v2551, %v2578
        %v2656 = vsel %vm1610, %v2552, %v2580
        %v2659 = vsel %vm1610, %v2553, %v2582
        %v2662 = vsel %vm1610, %v2554, %v2584
        %v2665 = vsel %vm1610, %v2555, %v2586
        %v2668 = vsel %vm1610, %v2556, %v2588
        %v2671 = vsel %vm1610, %v2557, %v2590
        %v2674 = vsel %vm1610, %v2558, %v2592
        %v2677 = vsel %vm1610, %v2559, %v2594
        %v2679 = vsel %vm1659, %v2632, %v2599
        %v2681 = vsel %vm1659, %v2635, %v2601
        %v2683 = vsel %vm1659, %v2638, %v2603
        %v2685 = vsel %vm1659, %v2641, %v2605
        %v2687 = vsel %vm1659, %v2644, %v2607
        %v2689 = vsel %vm1659, %v2647, %v2609
        %v2691 = vsel %vm1659, %v2650, %v2611
        %v2693 = vsel %vm1659, %v2653, %v2613
        %v2695 = vsel %vm1659, %v2656, %v2615
        %v2697 = vsel %vm1659, %v2659, %v2617
        %v2699 = vsel %vm1659, %v2662, %v2619
        %v2701 = vsel %vm1659, %v2665, %v2621
        %v2703 = vsel %vm1659, %v2668, %v2623
        %v2705 = vsel %vm1659, %v2671, %v2625
        %v2707 = vsel %vm1659, %v2674, %v2627
        %v2709 = vsel %vm1659, %v2677, %v2629
        %vm2742 = vcmask 1046528
        %v2743 = vrot.slane %v2679, 1
        %v2744 = vrot.slane %v1879, 1
        %v2745 = vsel %vm2742, %v2743, %v2744
        %v2746 = vrot.slane %v2681, 1
        %v2747 = vrot.slane %v1881, 1
        %v2748 = vsel %vm2742, %v2746, %v2747
        %v2749 = vrot.slane %v2683, 1
        %v2750 = vrot.slane %v1883, 1
        %v2751 = vsel %vm2742, %v2749, %v2750
        %v2752 = vrot.slane %v2685, 1
        %v2753 = vrot.slane %v1885, 1
        %v2754 = vsel %vm2742, %v2752, %v2753
        %v2755 = vrot.slane %v2687, 1
        %v2756 = vrot.slane %v1887, 1
        %v2757 = vsel %vm2742, %v2755, %v2756
        %v2758 = vrot.slane %v2689, 1
        %v2759 = vrot.slane %v1889, 1
        %v2760 = vsel %vm2742, %v2758, %v2759
        %v2761 = vrot.slane %v2691, 1
        %v2762 = vrot.slane %v1891, 1
        %v2763 = vsel %vm2742, %v2761, %v2762
        %v2764 = vrot.slane %v2693, 1
        %v2765 = vrot.slane %v1893, 1
        %v2766 = vsel %vm2742, %v2764, %v2765
        %v2767 = vrot.slane %v2695, 1
        %v2768 = vrot.slane %v1895, 1
        %v2769 = vsel %vm2742, %v2767, %v2768
        %v2770 = vrot.slane %v2697, 1
        %v2771 = vrot.slane %v1897, 1
        %v2772 = vsel %vm2742, %v2770, %v2771
        %v2773 = vrot.slane %v2699, 1
        %v2774 = vrot.slane %v1899, 1
        %v2775 = vsel %vm2742, %v2773, %v2774
        %v2776 = vrot.slane %v2701, 1
        %v2777 = vrot.slane %v1901, 1
        %v2778 = vsel %vm2742, %v2776, %v2777
        %v2779 = vrot.slane %v2703, 1
        %v2780 = vrot.slane %v1903, 1
        %v2781 = vsel %vm2742, %v2779, %v2780
        %v2782 = vrot.slane %v2705, 1
        %v2783 = vrot.slane %v1905, 1
        %v2784 = vsel %vm2742, %v2782, %v2783
        %v2785 = vrot.slane %v2707, 1
        %v2786 = vrot.slane %v1907, 1
        %v2787 = vsel %vm2742, %v2785, %v2786
        %v2788 = vrot.slane %v2709, 1
        %v2789 = vrot.slane %v1909, 1
        %v2790 = vsel %vm2742, %v2788, %v2789
        %s2791 = scalar_lea.vmem %s3, 16
        %v2792 = vld [vmem:[%s2791] sm:$0xf]
        %v2793 = vld [vmem:[%s2791 + $0x4] sm:$0x3]
        %v2796 = vunpack.c.l.b16 %v2792
        %v2797 = vunpack.c.l.b16 %v2793
        %v2798 = vpack.c.b16 %v2797, %v2796
        %v2800 = vsel %vm2079, %v2745, 0
        %v2803 = vsel %vm2079, %v2748, 0
        %v2806 = vsel %vm2079, %v2751, 0
        %v2809 = vsel %vm2079, %v2754, 0
        %v2812 = vsel %vm2079, %v2757, 0
        %v2815 = vsel %vm2079, %v2760, 0
        %v2818 = vsel %vm2079, %v2763, 0
        %v2821 = vsel %vm2079, %v2766, 0
        %v2824 = vsel %vm2079, %v2769, 0
        %v2827 = vsel %vm2079, %v2772, 0
        %v2830 = vsel %vm2079, %v2775, 0
        %v2833 = vsel %vm2079, %v2778, 0
        %v2836 = vsel %vm2079, %v2781, 0
        %v2839 = vsel %vm2079, %v2784, 0
        %v2842 = vsel %vm2079, %v2787, 0
        %v2845 = vsel %vm2079, %v2790, 0
        %v2848 = vsel %vm2128, %v2798, 0
        %2850 = vmatprep.subr.bf16.mxu0 0
        %2851 = vmatpush1.bf16.msra.mxu0 %v2848
        %2852 = vmatprep.subr.bf16.mxu0 0
        %2853 = vmatpush1.bf16.msra.mxu0 0
        %2854 = vmatprep.subr.bf16.mxu0 0
        %2855 = vmatpush1.bf16.msra.mxu0 0
        %2856 = vmatprep.subr.bf16.mxu0 0
        %2857 = vmatpush1.bf16.msra.mxu0 0
        %2858 = vmatprep.subr.bf16.mxu0 0
        %2859 = vmatpush1.bf16.msra.mxu0 0
        %2860 = vmatprep.subr.bf16.mxu0 0
        %2861 = vmatpush1.bf16.msra.mxu0 0
        %2862 = vmatprep.subr.bf16.mxu0 0
        %2863 = vmatpush1.bf16.msra.mxu0 0
        %2864 = vmatprep.subr.bf16.mxu0 0
        %2865 = vmatpush1.bf16.msra.mxu0 0
        %2866 = vmatprep.subr.bf16.mxu0 0
        %2867 = vmatpush1.bf16.msra.mxu0 0
        %2868 = vmatprep.subr.bf16.mxu0 0
        %2869 = vmatpush1.bf16.msra.mxu0 0
        %2870 = vmatprep.subr.bf16.mxu0 0
        %2871 = vmatpush1.bf16.msra.mxu0 0
        %2872 = vmatprep.subr.bf16.mxu0 0
        %2873 = vmatpush1.bf16.msra.mxu0 0
        %2874 = vmatprep.subr.bf16.mxu0 0
        %2875 = vmatpush1.bf16.msra.mxu0 0
        %2876 = vmatprep.subr.bf16.mxu0 0
        %2877 = vmatpush1.bf16.msra.mxu0 0
        %2878 = vmatprep.subr.bf16.mxu0 0
        %2879 = vmatpush1.bf16.msra.mxu0 0
        %2880 = vmatprep.subr.bf16.mxu0 0
        %2881 = vmatpush1.bf16.msra.mxu0 0
        %2882 = vmatprep.mubr.bf16.mxu0 0
        %2883 = vmatmul.mubr.bf16.gmra.mrb[0].mxu0 %v2800
        %v2884 = vpop.f32.mrb[0].mxu0
        %v2885 = vadd.f32 0.0, %v2884
        %v2886 = vpop.f32.mrb[0].mxu0
        %v2887 = vpop.f32.mrb[0].mxu0
        %v2888 = vadd.f32 0.0, %v2887
        %v2889 = vpop.f32.mrb[0].mxu0
        %2890 = vmatprep.mubr.bf16.mxu0 0
        %2891 = vmatmul.mubr.bf16.gmra.mrb[0].mxu0 %v2803
        %v2892 = vpop.f32.mrb[0].mxu0
        %v2893 = vadd.f32 0.0, %v2892
        %v2894 = vpop.f32.mrb[0].mxu0
        %v2895 = vpop.f32.mrb[0].mxu0
        %v2896 = vadd.f32 0.0, %v2895
        %v2897 = vpop.f32.mrb[0].mxu0
        %2898 = vmatprep.mubr.bf16.mxu0 0
        %2899 = vmatmul.mubr.bf16.gmra.mrb[0].mxu0 %v2806
        %v2900 = vpop.f32.mrb[0].mxu0
        %v2901 = vadd.f32 0.0, %v2900
        %v2902 = vpop.f32.mrb[0].mxu0
        %v2903 = vpop.f32.mrb[0].mxu0
        %v2904 = vadd.f32 0.0, %v2903
        %v2905 = vpop.f32.mrb[0].mxu0
        %2906 = vmatprep.mubr.bf16.mxu0 0
        %2907 = vmatmul.mubr.bf16.gmra.mrb[0].mxu0 %v2809
        %v2908 = vpop.f32.mrb[0].mxu0
        %v2909 = vadd.f32 0.0, %v2908
        %v2910 = vpop.f32.mrb[0].mxu0
        %v2911 = vpop.f32.mrb[0].mxu0
        %v2912 = vadd.f32 0.0, %v2911
        %v2913 = vpop.f32.mrb[0].mxu0
        %2914 = vmatprep.mubr.bf16.mxu0 0
        %2915 = vmatmul.mubr.bf16.gmra.mrb[0].mxu0 %v2812
        %v2916 = vpop.f32.mrb[0].mxu0
        %v2917 = vadd.f32 0.0, %v2916
        %v2918 = vpop.f32.mrb[0].mxu0
        %v2919 = vpop.f32.mrb[0].mxu0
        %v2920 = vadd.f32 0.0, %v2919
        %v2921 = vpop.f32.mrb[0].mxu0
        %2922 = vmatprep.mubr.bf16.mxu0 0
        %2923 = vmatmul.mubr.bf16.gmra.mrb[0].mxu0 %v2815
        %v2924 = vpop.f32.mrb[0].mxu0
        %v2925 = vadd.f32 0.0, %v2924
        %v2926 = vpop.f32.mrb[0].mxu0
        %v2927 = vpop.f32.mrb[0].mxu0
        %v2928 = vadd.f32 0.0, %v2927
        %v2929 = vpop.f32.mrb[0].mxu0
        %2930 = vmatprep.mubr.bf16.mxu0 0
        %2931 = vmatmul.mubr.bf16.gmra.mrb[0].mxu0 %v2818
        %v2932 = vpop.f32.mrb[0].mxu0
        %v2933 = vadd.f32 0.0, %v2932
        %v2934 = vpop.f32.mrb[0].mxu0
        %v2935 = vpop.f32.mrb[0].mxu0
        %v2936 = vadd.f32 0.0, %v2935
        %v2937 = vpop.f32.mrb[0].mxu0
        %2938 = vmatprep.mubr.bf16.mxu0 0
        %2939 = vmatmul.mubr.bf16.gmra.mrb[0].mxu0 %v2821
        %v2940 = vpop.f32.mrb[0].mxu0
        %v2941 = vadd.f32 0.0, %v2940
        %v2942 = vpop.f32.mrb[0].mxu0
        %v2943 = vpop.f32.mrb[0].mxu0
        %v2944 = vadd.f32 0.0, %v2943
        %v2945 = vpop.f32.mrb[0].mxu0
        %2946 = vmatprep.mubr.bf16.mxu0 0
        %2947 = vmatmul.mubr.bf16.gmra.mrb[0].mxu0 %v2824
        %v2948 = vpop.f32.mrb[0].mxu0
        %v2949 = vadd.f32 0.0, %v2948
        %v2950 = vpop.f32.mrb[0].mxu0
        %v2951 = vpop.f32.mrb[0].mxu0
        %v2952 = vadd.f32 0.0, %v2951
        %v2953 = vpop.f32.mrb[0].mxu0
        %2954 = vmatprep.mubr.bf16.mxu0 0
        %2955 = vmatmul.mubr.bf16.gmra.mrb[0].mxu0 %v2827
        %v2956 = vpop.f32.mrb[0].mxu0
        %v2957 = vadd.f32 0.0, %v2956
        %v2958 = vpop.f32.mrb[0].mxu0
        %v2959 = vpop.f32.mrb[0].mxu0
        %v2960 = vadd.f32 0.0, %v2959
        %v2961 = vpop.f32.mrb[0].mxu0
        %2962 = vmatprep.mubr.bf16.mxu0 0
        %2963 = vmatmul.mubr.bf16.gmra.mrb[0].mxu0 %v2830
        %v2964 = vpop.f32.mrb[0].mxu0
        %v2965 = vadd.f32 0.0, %v2964
        %v2966 = vpop.f32.mrb[0].mxu0
        %v2967 = vpop.f32.mrb[0].mxu0
        %v2968 = vadd.f32 0.0, %v2967
        %v2969 = vpop.f32.mrb[0].mxu0
        %2970 = vmatprep.mubr.bf16.mxu0 0
        %2971 = vmatmul.mubr.bf16.gmra.mrb[0].mxu0 %v2833
        %v2972 = vpop.f32.mrb[0].mxu0
        %v2973 = vadd.f32 0.0, %v2972
        %v2974 = vpop.f32.mrb[0].mxu0
        %v2975 = vpop.f32.mrb[0].mxu0
        %v2976 = vadd.f32 0.0, %v2975
        %v2977 = vpop.f32.mrb[0].mxu0
        %2978 = vmatprep.mubr.bf16.mxu0 0
        %2979 = vmatmul.mubr.bf16.gmra.mrb[0].mxu0 %v2836
        %v2980 = vpop.f32.mrb[0].mxu0
        %v2981 = vadd.f32 0.0, %v2980
        %v2982 = vpop.f32.mrb[0].mxu0
        %v2983 = vpop.f32.mrb[0].mxu0
        %v2984 = vadd.f32 0.0, %v2983
        %v2985 = vpop.f32.mrb[0].mxu0
        %2986 = vmatprep.mubr.bf16.mxu0 0
        %2987 = vmatmul.mubr.bf16.gmra.mrb[0].mxu0 %v2839
        %v2988 = vpop.f32.mrb[0].mxu0
        %v2989 = vadd.f32 0.0, %v2988
        %v2990 = vpop.f32.mrb[0].mxu0
        %v2991 = vpop.f32.mrb[0].mxu0
        %v2992 = vadd.f32 0.0, %v2991
        %v2993 = vpop.f32.mrb[0].mxu0
        %2994 = vmatprep.mubr.bf16.mxu0 0
        %2995 = vmatmul.mubr.bf16.gmra.mrb[0].mxu0 %v2842
        %v2996 = vpop.f32.mrb[0].mxu0
        %v2997 = vadd.f32 0.0, %v2996
        %v2998 = vpop.f32.mrb[0].mxu0
        %v2999 = vpop.f32.mrb[0].mxu0
        %v3000 = vadd.f32 0.0, %v2999
        %v3001 = vpop.f32.mrb[0].mxu0
        %3002 = vmatprep.mubr.bf16.mxu0 0
        %3003 = vmatmul.mubr.bf16.gmra.mrb[0].mxu0 %v2845
        %v3004 = vpop.f32.mrb[0].mxu0
        %v3005 = vadd.f32 0.0, %v3004
        %v3006 = vpop.f32.mrb[0].mxu0
        %v3007 = vpop.f32.mrb[0].mxu0
        %v3008 = vadd.f32 0.0, %v3007
        %v3009 = vpop.f32.mrb[0].mxu0
        %3010 = vdwg.mxu0
        %v3011 = vadd.f32 %v2368, %v2885
        %v3012 = vadd.f32 %v2371, %v2888
        %v3013 = vadd.f32 %v2376, %v2893
        %v3014 = vadd.f32 %v2379, %v2896
        %v3015 = vadd.f32 %v2384, %v2901
        %v3016 = vadd.f32 %v2387, %v2904
        %v3017 = vadd.f32 %v2392, %v2909
        %v3018 = vadd.f32 %v2395, %v2912
        %v3019 = vadd.f32 %v2400, %v2917
        %v3020 = vadd.f32 %v2403, %v2920
        %v3021 = vadd.f32 %v2408, %v2925
        %v3022 = vadd.f32 %v2411, %v2928
        %v3023 = vadd.f32 %v2416, %v2933
        %v3024 = vadd.f32 %v2419, %v2936
        %v3025 = vadd.f32 %v2424, %v2941
        %v3026 = vadd.f32 %v2427, %v2944
        %v3027 = vadd.f32 %v2432, %v2949
        %v3028 = vadd.f32 %v2435, %v2952
        %v3029 = vadd.f32 %v2440, %v2957
        %v3030 = vadd.f32 %v2443, %v2960
        %v3031 = vadd.f32 %v2448, %v2965
        %v3032 = vadd.f32 %v2451, %v2968
        %v3033 = vadd.f32 %v2456, %v2973
        %v3034 = vadd.f32 %v2459, %v2976
        %v3035 = vadd.f32 %v2464, %v2981
        %v3036 = vadd.f32 %v2467, %v2984
        %v3037 = vadd.f32 %v2472, %v2989
        %v3038 = vadd.f32 %v2475, %v2992
        %v3039 = vadd.f32 %v2480, %v2997
        %v3040 = vadd.f32 %v2483, %v3000
        %v3041 = vadd.f32 %v2488, %v3005
        %v3042 = vadd.f32 %v2491, %v3008
        %v3043 = vld [vmem:[%s4] sm:$0x1]
        %v3045 = vlaneseq
        %v3046 = vshrl.u32 %v3045, 7
        %v3047 = vsub.s32 0, %v3046
        %v3048 = vrot.slane %v3043, %v3047
        %v3050 = vadd.f32 %v3011, %v3048
        %v3051 = vadd.f32 %v3012, %v3048
        %v3052 = vadd.f32 %v3013, %v3048
        %v3053 = vadd.f32 %v3014, %v3048
        %v3054 = vadd.f32 %v3015, %v3048
        %v3055 = vadd.f32 %v3016, %v3048
        %v3056 = vadd.f32 %v3017, %v3048
        %v3057 = vadd.f32 %v3018, %v3048
        %v3058 = vadd.f32 %v3019, %v3048
        %v3059 = vadd.f32 %v3020, %v3048
        %v3060 = vadd.f32 %v3021, %v3048
        %v3061 = vadd.f32 %v3022, %v3048
        %v3062 = vadd.f32 %v3023, %v3048
        %v3063 = vadd.f32 %v3024, %v3048
        %v3064 = vadd.f32 %v3025, %v3048
        %v3065 = vadd.f32 %v3026, %v3048
        %v3066 = vadd.f32 %v3027, %v3048
        %v3067 = vadd.f32 %v3028, %v3048
        %v3068 = vadd.f32 %v3029, %v3048
        %v3069 = vadd.f32 %v3030, %v3048
        %v3070 = vadd.f32 %v3031, %v3048
        %v3071 = vadd.f32 %v3032, %v3048
        %v3072 = vadd.f32 %v3033, %v3048
        %v3073 = vadd.f32 %v3034, %v3048
        %v3074 = vadd.f32 %v3035, %v3048
        %v3075 = vadd.f32 %v3036, %v3048
        %v3076 = vadd.f32 %v3037, %v3048
        %v3077 = vadd.f32 %v3038, %v3048
        %v3078 = vadd.f32 %v3039, %v3048
        %v3079 = vadd.f32 %v3040, %v3048
        %v3080 = vadd.f32 %v3041, %v3048
        %v3081 = vadd.f32 %v3042, %v3048
        %v3082 = vmax.f32 %v3050, 0.0
        %v3083 = vmax.f32 %v3051, 0.0
        %v3084 = vmax.f32 %v3052, 0.0
        %v3085 = vmax.f32 %v3053, 0.0
        %v3086 = vmax.f32 %v3054, 0.0
        %v3087 = vmax.f32 %v3055, 0.0
        %v3088 = vmax.f32 %v3056, 0.0
        %v3089 = vmax.f32 %v3057, 0.0
        %v3090 = vmax.f32 %v3058, 0.0
        %v3091 = vmax.f32 %v3059, 0.0
        %v3092 = vmax.f32 %v3060, 0.0
        %v3093 = vmax.f32 %v3061, 0.0
        %v3094 = vmax.f32 %v3062, 0.0
        %v3095 = vmax.f32 %v3063, 0.0
        %v3096 = vmax.f32 %v3064, 0.0
        %v3097 = vmax.f32 %v3065, 0.0
        %v3098 = vmax.f32 %v3066, 0.0
        %v3099 = vmax.f32 %v3067, 0.0
        %v3100 = vmax.f32 %v3068, 0.0
        %v3101 = vmax.f32 %v3069, 0.0
        %v3102 = vmax.f32 %v3070, 0.0
        %v3103 = vmax.f32 %v3071, 0.0
        %v3104 = vmax.f32 %v3072, 0.0
        %v3105 = vmax.f32 %v3073, 0.0
        %v3106 = vmax.f32 %v3074, 0.0
        %v3107 = vmax.f32 %v3075, 0.0
        %v3108 = vmax.f32 %v3076, 0.0
        %v3109 = vmax.f32 %v3077, 0.0
        %v3110 = vmax.f32 %v3078, 0.0
        %v3111 = vmax.f32 %v3079, 0.0
        %v3112 = vmax.f32 %v3080, 0.0
        %v3113 = vmax.f32 %v3081, 0.0
        %v3114 = vpack.c.bf16 %v3083, %v3082
        %v3115 = vpack.c.bf16 %v3085, %v3084
        %v3116 = vpack.c.bf16 %v3087, %v3086
        %v3117 = vpack.c.bf16 %v3089, %v3088
        %v3118 = vpack.c.bf16 %v3091, %v3090
        %v3119 = vpack.c.bf16 %v3093, %v3092
        %v3120 = vpack.c.bf16 %v3095, %v3094
        %v3121 = vpack.c.bf16 %v3097, %v3096
        %v3122 = vpack.c.bf16 %v3099, %v3098
        %v3123 = vpack.c.bf16 %v3101, %v3100
        %v3124 = vpack.c.bf16 %v3103, %v3102
        %v3125 = vpack.c.bf16 %v3105, %v3104
        %v3126 = vpack.c.bf16 %v3107, %v3106
        %v3127 = vpack.c.bf16 %v3109, %v3108
        %v3128 = vpack.c.bf16 %v3111, %v3110
        %v3129 = vpack.c.bf16 %v3113, %v3112
        %v3130 = vld [vmem:[%s5] sm:$0x3]
        %v3131 = vld [vmem:[%s6] sm:$0x1]
        %v3133 = vlaneseq
        %v3134 = vshrl.u32 %v3133, 7
        %v3135 = vsub.s32 0, %v3134
        %v3136 = vrot.slane %v3131, %v3135
        %v3139 = vsel %vm1610, %v3114, 0
        %v3142 = vsel %vm1610, %v3115, 0
        %v3145 = vsel %vm1610, %v3116, 0
        %v3148 = vsel %vm1610, %v3117, 0
        %v3151 = vsel %vm1610, %v3118, 0
        %v3154 = vsel %vm1610, %v3119, 0
        %v3157 = vsel %vm1610, %v3120, 0
        %v3160 = vsel %vm1610, %v3121, 0
        %v3163 = vsel %vm1610, %v3122, 0
        %v3166 = vsel %vm1610, %v3123, 0
        %v3169 = vsel %vm1610, %v3124, 0
        %v3172 = vsel %vm1610, %v3125, 0
        %v3175 = vsel %vm1610, %v3126, 0
        %v3178 = vsel %vm1610, %v3127, 0
        %v3181 = vsel %vm1610, %v3128, 0
        %v3184 = vsel %vm1610, %v3129, 0
        %vm3186 = vcmask 1041408
        %v3188 = vsel %vm3186, %v3130, 0
        %3190 = vmatprep.subr.bf16.mxu0 0
        %3191 = vmatpush1.bf16.msra.mxu0 %v3188
        %3192 = vmatprep.subr.bf16.mxu0 0
        %3193 = vmatpush1.bf16.msra.mxu0 0
        %3194 = vmatprep.subr.bf16.mxu0 0
        %3195 = vmatpush1.bf16.msra.mxu0 0
        %3196 = vmatprep.subr.bf16.mxu0 0
        %3197 = vmatpush1.bf16.msra.mxu0 0
        %3198 = vmatprep.subr.bf16.mxu0 0
        %3199 = vmatpush1.bf16.msra.mxu0 0
        %3200 = vmatprep.subr.bf16.mxu0 0
        %3201 = vmatpush1.bf16.msra.mxu0 0
        %3202 = vmatprep.subr.bf16.mxu0 0
        %3203 = vmatpush1.bf16.msra.mxu0 0
        %3204 = vmatprep.subr.bf16.mxu0 0
        %3205 = vmatpush1.bf16.msra.mxu0 0
        %3206 = vmatprep.subr.bf16.mxu0 0
        %3207 = vmatpush1.bf16.msra.mxu0 0
        %3208 = vmatprep.subr.bf16.mxu0 0
        %3209 = vmatpush1.bf16.msra.mxu0 0
        %3210 = vmatprep.subr.bf16.mxu0 0
        %3211 = vmatpush1.bf16.msra.mxu0 0
        %3212 = vmatprep.subr.bf16.mxu0 0
        %3213 = vmatpush1.bf16.msra.mxu0 0
        %3214 = vmatprep.subr.bf16.mxu0 0
        %3215 = vmatpush1.bf16.msra.mxu0 0
        %3216 = vmatprep.subr.bf16.mxu0 0
        %3217 = vmatpush1.bf16.msra.mxu0 0
        %3218 = vmatprep.subr.bf16.mxu0 0
        %3219 = vmatpush1.bf16.msra.mxu0 0
        %3220 = vmatprep.subr.bf16.mxu0 0
        %3221 = vmatpush1.bf16.msra.mxu0 0
        %3222 = vmatprep.mubr.bf16.mxu0 0
        %3223 = vmatmul.mubr.bf16.gmra.mrb[0].mxu0 %v3139
        %v3224 = vpop.f32.mrb[0].mxu0
        %v3225 = vadd.f32 %v3136, %v3224
        %v3226 = vpop.f32.mrb[0].mxu0
        %v3227 = vpop.f32.mrb[0].mxu0
        %v3228 = vadd.f32 %v3136, %v3227
        %v3229 = vpop.f32.mrb[0].mxu0
        %3230 = vmatprep.mubr.bf16.mxu0 0
        %3231 = vmatmul.mubr.bf16.gmra.mrb[0].mxu0 %v3142
        %v3232 = vpop.f32.mrb[0].mxu0
        %v3233 = vadd.f32 %v3136, %v3232
        %v3234 = vpop.f32.mrb[0].mxu0
        %v3235 = vpop.f32.mrb[0].mxu0
        %v3236 = vadd.f32 %v3136, %v3235
        %v3237 = vpop.f32.mrb[0].mxu0
        %3238 = vmatprep.mubr.bf16.mxu0 0
        %3239 = vmatmul.mubr.bf16.gmra.mrb[0].mxu0 %v3145
        %v3240 = vpop.f32.mrb[0].mxu0
        %v3241 = vadd.f32 %v3136, %v3240
        %v3242 = vpop.f32.mrb[0].mxu0
        %v3243 = vpop.f32.mrb[0].mxu0
        %v3244 = vadd.f32 %v3136, %v3243
        %v3245 = vpop.f32.mrb[0].mxu0
        %3246 = vmatprep.mubr.bf16.mxu0 0
        %3247 = vmatmul.mubr.bf16.gmra.mrb[0].mxu0 %v3148
        %v3248 = vpop.f32.mrb[0].mxu0
        %v3249 = vadd.f32 %v3136, %v3248
        %v3250 = vpop.f32.mrb[0].mxu0
        %v3251 = vpop.f32.mrb[0].mxu0
        %v3252 = vadd.f32 %v3136, %v3251
        %v3253 = vpop.f32.mrb[0].mxu0
        %3254 = vmatprep.mubr.bf16.mxu0 0
        %3255 = vmatmul.mubr.bf16.gmra.mrb[0].mxu0 %v3151
        %v3256 = vpop.f32.mrb[0].mxu0
        %v3257 = vadd.f32 %v3136, %v3256
        %v3258 = vpop.f32.mrb[0].mxu0
        %v3259 = vpop.f32.mrb[0].mxu0
        %v3260 = vadd.f32 %v3136, %v3259
        %v3261 = vpop.f32.mrb[0].mxu0
        %3262 = vmatprep.mubr.bf16.mxu0 0
        %3263 = vmatmul.mubr.bf16.gmra.mrb[0].mxu0 %v3154
        %v3264 = vpop.f32.mrb[0].mxu0
        %v3265 = vadd.f32 %v3136, %v3264
        %v3266 = vpop.f32.mrb[0].mxu0
        %v3267 = vpop.f32.mrb[0].mxu0
        %v3268 = vadd.f32 %v3136, %v3267
        %v3269 = vpop.f32.mrb[0].mxu0
        %3270 = vmatprep.mubr.bf16.mxu0 0
        %3271 = vmatmul.mubr.bf16.gmra.mrb[0].mxu0 %v3157
        %v3272 = vpop.f32.mrb[0].mxu0
        %v3273 = vadd.f32 %v3136, %v3272
        %v3274 = vpop.f32.mrb[0].mxu0
        %v3275 = vpop.f32.mrb[0].mxu0
        %v3276 = vadd.f32 %v3136, %v3275
        %v3277 = vpop.f32.mrb[0].mxu0
        %3278 = vmatprep.mubr.bf16.mxu0 0
        %3279 = vmatmul.mubr.bf16.gmra.mrb[0].mxu0 %v3160
        %v3280 = vpop.f32.mrb[0].mxu0
        %v3281 = vadd.f32 %v3136, %v3280
        %v3282 = vpop.f32.mrb[0].mxu0
        %v3283 = vpop.f32.mrb[0].mxu0
        %v3284 = vadd.f32 %v3136, %v3283
        %v3285 = vpop.f32.mrb[0].mxu0
        %3286 = vmatprep.mubr.bf16.mxu0 0
        %3287 = vmatmul.mubr.bf16.gmra.mrb[0].mxu0 %v3163
        %v3288 = vpop.f32.mrb[0].mxu0
        %v3289 = vadd.f32 %v3136, %v3288
        %v3290 = vpop.f32.mrb[0].mxu0
        %v3291 = vpop.f32.mrb[0].mxu0
        %v3292 = vadd.f32 %v3136, %v3291
        %v3293 = vpop.f32.mrb[0].mxu0
        %3294 = vmatprep.mubr.bf16.mxu0 0
        %3295 = vmatmul.mubr.bf16.gmra.mrb[0].mxu0 %v3166
        %v3296 = vpop.f32.mrb[0].mxu0
        %v3297 = vadd.f32 %v3136, %v3296
        %v3298 = vpop.f32.mrb[0].mxu0
        %v3299 = vpop.f32.mrb[0].mxu0
        %v3300 = vadd.f32 %v3136, %v3299
        %v3301 = vpop.f32.mrb[0].mxu0
        %3302 = vmatprep.mubr.bf16.mxu0 0
        %3303 = vmatmul.mubr.bf16.gmra.mrb[0].mxu0 %v3169
        %v3304 = vpop.f32.mrb[0].mxu0
        %v3305 = vadd.f32 %v3136, %v3304
        %v3306 = vpop.f32.mrb[0].mxu0
        %v3307 = vpop.f32.mrb[0].mxu0
        %v3308 = vadd.f32 %v3136, %v3307
        %v3309 = vpop.f32.mrb[0].mxu0
        %3310 = vmatprep.mubr.bf16.mxu0 0
        %3311 = vmatmul.mubr.bf16.gmra.mrb[0].mxu0 %v3172
        %v3312 = vpop.f32.mrb[0].mxu0
        %v3313 = vadd.f32 %v3136, %v3312
        %v3314 = vpop.f32.mrb[0].mxu0
        %v3315 = vpop.f32.mrb[0].mxu0
        %v3316 = vadd.f32 %v3136, %v3315
        %v3317 = vpop.f32.mrb[0].mxu0
        %3318 = vmatprep.mubr.bf16.mxu0 0
        %3319 = vmatmul.mubr.bf16.gmra.mrb[0].mxu0 %v3175
        %v3320 = vpop.f32.mrb[0].mxu0
        %v3321 = vadd.f32 %v3136, %v3320
        %v3322 = vpop.f32.mrb[0].mxu0
        %v3323 = vpop.f32.mrb[0].mxu0
        %v3324 = vadd.f32 %v3136, %v3323
        %v3325 = vpop.f32.mrb[0].mxu0
        %3326 = vmatprep.mubr.bf16.mxu0 0
        %3327 = vmatmul.mubr.bf16.gmra.mrb[0].mxu0 %v3178
        %v3328 = vpop.f32.mrb[0].mxu0
        %v3329 = vadd.f32 %v3136, %v3328
        %v3330 = vpop.f32.mrb[0].mxu0
        %v3331 = vpop.f32.mrb[0].mxu0
        %v3332 = vadd.f32 %v3136, %v3331
        %v3333 = vpop.f32.mrb[0].mxu0
        %3334 = vmatprep.mubr.bf16.mxu0 0
        %3335 = vmatmul.mubr.bf16.gmra.mrb[0].mxu0 %v3181
        %v3336 = vpop.f32.mrb[0].mxu0
        %v3337 = vadd.f32 %v3136, %v3336
        %v3338 = vpop.f32.mrb[0].mxu0
        %v3339 = vpop.f32.mrb[0].mxu0
        %v3340 = vadd.f32 %v3136, %v3339
        %v3341 = vpop.f32.mrb[0].mxu0
        %3342 = vmatprep.mubr.bf16.mxu0 0
        %3343 = vmatmul.mubr.bf16.gmra.mrb[0].mxu0 %v3184
        %v3344 = vpop.f32.mrb[0].mxu0
        %v3345 = vadd.f32 %v3136, %v3344
        %v3346 = vpop.f32.mrb[0].mxu0
        %v3347 = vpop.f32.mrb[0].mxu0
        %v3348 = vadd.f32 %v3136, %v3347
        %v3349 = vpop.f32.mrb[0].mxu0
        %3350 = vdwg.mxu0
        %v3351 = vlaneseq
        %v3352 = vand.u32 %v3351, 127
        %v3353 = vadd.s32 %v3352, 128
        %v3354 = vlaneseq
        %v3355 = vshrl.u32 %v3354, 7
        %v3356 = vadd.s32 %v3355, 8
        %v3357 = vmul.u32 %v3355, 16
        %v3358 = vmul.u32 %v3356, 16
        %vm3359 = vcmp.ge.s32.totalorder %v3352, %v3357
        %vm3360 = vcmp.ge.s32.totalorder %v3353, %v3357
        %vm3361 = vcmp.ge.s32.totalorder %v3352, %v3358
        %vm3362 = vcmp.ge.s32.totalorder %v3353, %v3358
        %v3363 = vadd.s32 %v3357, 16
        %v3364 = vadd.s32 %v3358, 16
        %vm3365 = vcmp.lt.s32.totalorder %v3352, %v3363
        %vm3366 = vcmp.lt.s32.totalorder %v3353, %v3363
        %vm3367 = vcmp.lt.s32.totalorder %v3352, %v3364
        %vm3368 = vcmp.lt.s32.totalorder %v3353, %v3364
        %vm3369 = vmand %vm3359, %vm3365
        %vm3370 = vmand %vm3360, %vm3366
        %vm3371 = vmand %vm3361, %vm3367
        %vm3372 = vmand %vm3362, %vm3368
        %v3373 = vsel %vm3369, 0.0625, 0.0
        %v3374 = vsel %vm3370, 0.0625, 0.0
        %v3375 = vsel %vm3371, 0.0625, 0.0
        %v3376 = vsel %vm3372, 0.0625, 0.0
        %v3377 = vpack.c.bf16 %v3375, %v3373
        %v3378 = vpack.c.bf16 %v3376, %v3374
        %v3379 = vpack.c.bf16 %v3228, %v3225
        %v3380 = vpack.c.bf16 %v3236, %v3233
        %v3381 = vpack.c.bf16 %v3244, %v3241
        %v3382 = vpack.c.bf16 %v3252, %v3249
        %v3383 = vpack.c.bf16 %v3260, %v3257
        %v3384 = vpack.c.bf16 %v3268, %v3265
        %v3385 = vpack.c.bf16 %v3276, %v3273
        %v3386 = vpack.c.bf16 %v3284, %v3281
        %v3387 = vpack.c.bf16 %v3292, %v3289
        %v3388 = vpack.c.bf16 %v3300, %v3297
        %v3389 = vpack.c.bf16 %v3308, %v3305
        %v3390 = vpack.c.bf16 %v3316, %v3313
        %v3391 = vpack.c.bf16 %v3324, %v3321
        %v3392 = vpack.c.bf16 %v3332, %v3329
        %v3393 = vpack.c.bf16 %v3340, %v3337
        %v3394 = vpack.c.bf16 %v3348, %v3345
        %3395 = vmatprep.subr.bf16.mxu0 0
        %3396 = vmatpush1.bf16.msra.mxu0 %v3379
        %3397 = vmatprep.subr.bf16.mxu0 0
        %3398 = vmatpush1.bf16.msra.mxu0 %v3380
        %3399 = vmatprep.subr.bf16.mxu0 0
        %3400 = vmatpush1.bf16.msra.mxu0 %v3381
        %3401 = vmatprep.subr.bf16.mxu0 0
        %3402 = vmatpush1.bf16.msra.mxu0 %v3382
        %3403 = vmatprep.subr.bf16.mxu0 0
        %3404 = vmatpush1.bf16.msra.mxu0 %v3383
        %3405 = vmatprep.subr.bf16.mxu0 0
        %3406 = vmatpush1.bf16.msra.mxu0 %v3384
        %3407 = vmatprep.subr.bf16.mxu0 0
        %3408 = vmatpush1.bf16.msra.mxu0 %v3385
        %3409 = vmatprep.subr.bf16.mxu0 0
        %3410 = vmatpush1.bf16.msra.mxu0 %v3386
        %3411 = vmatprep.subr.bf16.mxu0 0
        %3412 = vmatpush1.bf16.msra.mxu0 %v3387
        %3413 = vmatprep.subr.bf16.mxu0 0
        %3414 = vmatpush1.bf16.msra.mxu0 %v3388
        %3415 = vmatprep.subr.bf16.mxu0 0
        %3416 = vmatpush1.bf16.msra.mxu0 %v3389
        %3417 = vmatprep.subr.bf16.mxu0 0
        %3418 = vmatpush1.bf16.msra.mxu0 %v3390
        %3419 = vmatprep.subr.bf16.mxu0 0
        %3420 = vmatpush1.bf16.msra.mxu0 %v3391
        %3421 = vmatprep.subr.bf16.mxu0 0
        %3422 = vmatpush1.bf16.msra.mxu0 %v3392
        %3423 = vmatprep.subr.bf16.mxu0 0
        %3424 = vmatpush1.bf16.msra.mxu0 %v3393
        %3425 = vmatprep.subr.bf16.mxu0 0
        %3426 = vmatpush1.bf16.msra.mxu0 %v3394
        %3427 = vmatprep.mubr.bf16.mxu0 %v3378
        %3428 = vmatmul.mubr.bf16.gmra.mrb[0].mxu0 %v3377
        %v3429 = vpop.f32.mrb[0].mxu0
        %v3430 = vadd.f32 0.0, %v3429
        %v3431 = vpop.f32.mrb[0].mxu0
        %v3432 = vpop.f32.mrb[0].mxu0
        %v3433 = vadd.f32 0.0, %v3432
        %v3434 = vpop.f32.mrb[0].mxu0
        %3435 = vdwg.mxu0
        %v3436 = vsel %vm523, %v3225, 0.0
        %v3437 = vsel %vm523, %v3233, 0.0
        %v3438 = vadd.f32 %v3436, %v3437
        %v3439 = vsel %vm523, %v3241, 0.0
        %v3440 = vadd.f32 %v3438, %v3439
        %v3441 = vsel %vm523, %v3249, 0.0
        %v3442 = vadd.f32 %v3440, %v3441
        %v3443 = vsel %vm523, %v3257, 0.0
        %v3444 = vadd.f32 %v3442, %v3443
        %v3445 = vsel %vm523, %v3265, 0.0
        %v3446 = vadd.f32 %v3444, %v3445
        %v3447 = vsel %vm523, %v3273, 0.0
        %v3448 = vadd.f32 %v3446, %v3447
        %v3449 = vsel %vm523, %v3281, 0.0
        %v3450 = vadd.f32 %v3448, %v3449
        %v3451 = vsel %vm523, %v3289, 0.0
        %v3452 = vadd.f32 %v3450, %v3451
        %v3453 = vsel %vm523, %v3297, 0.0
        %v3454 = vadd.f32 %v3452, %v3453
        %v3455 = vsel %vm523, %v3305, 0.0
        %v3456 = vadd.f32 %v3454, %v3455
        %v3457 = vsel %vm523, %v3313, 0.0
        %v3458 = vadd.f32 %v3456, %v3457
        %v3459 = vsel %vm523, %v3321, 0.0
        %v3460 = vadd.f32 %v3458, %v3459
        %v3461 = vsel %vm523, %v3329, 0.0
        %v3462 = vadd.f32 %v3460, %v3461
        %v3463 = vsel %vm523, %v3337, 0.0
        %v3464 = vadd.f32 %v3462, %v3463
        %v3465 = vsel %vm523, %v3345, 0.0
        %v3466 = vadd.f32 %v3464, %v3465
        %v3467 = vsel %vm523, %v3228, 0.0
        %v3468 = vsel %vm523, %v3236, 0.0
        %v3469 = vadd.f32 %v3467, %v3468
        %v3470 = vsel %vm523, %v3244, 0.0
        %v3471 = vadd.f32 %v3469, %v3470
        %v3472 = vsel %vm523, %v3252, 0.0
        %v3473 = vadd.f32 %v3471, %v3472
        %v3474 = vsel %vm523, %v3260, 0.0
        %v3475 = vadd.f32 %v3473, %v3474
        %v3476 = vsel %vm523, %v3268, 0.0
        %v3477 = vadd.f32 %v3475, %v3476
        %v3478 = vsel %vm523, %v3276, 0.0
        %v3479 = vadd.f32 %v3477, %v3478
        %v3480 = vsel %vm523, %v3284, 0.0
        %v3481 = vadd.f32 %v3479, %v3480
        %v3482 = vsel %vm523, %v3292, 0.0
        %v3483 = vadd.f32 %v3481, %v3482
        %v3484 = vsel %vm523, %v3300, 0.0
        %v3485 = vadd.f32 %v3483, %v3484
        %v3486 = vsel %vm523, %v3308, 0.0
        %v3487 = vadd.f32 %v3485, %v3486
        %v3488 = vsel %vm523, %v3316, 0.0
        %v3489 = vadd.f32 %v3487, %v3488
        %v3490 = vsel %vm523, %v3324, 0.0
        %v3491 = vadd.f32 %v3489, %v3490
        %v3492 = vsel %vm523, %v3332, 0.0
        %v3493 = vadd.f32 %v3491, %v3492
        %v3494 = vsel %vm523, %v3340, 0.0
        %v3495 = vadd.f32 %v3493, %v3494
        %v3496 = vsel %vm523, %v3348, 0.0
        %v3497 = vadd.f32 %v3495, %v3496
        %v3498 = vrcp.pop 16.0
        %v3499 = vmul.f32 %v3466, %v3498
        %v3500 = vmul.f32 %v3497, %v3498
        %v3501 = vpack.c.bf16 %v3433, %v3430
        %v3502 = vpack.c.bf16 %v3500, %v3499
        %v3503 = vld [vmem:[%s7] sm:$0xf]
        %v3504 = vld [vmem:[%s7 + $0x4] sm:$0xf]
        %v3505 = vld [vmem:[%s8] sm:$0x1]
        %v3507 = vlaneseq
        %v3508 = vshrl.u32 %v3507, 7
        %v3509 = vsub.s32 0, %v3508
        %v3510 = vrot.slane %v3505, %v3509
        %v3514 = vunpack.c.l.b16 %v3503
        %v3515 = vunpack.c.l.b16 %v3504
        %v3516 = vpack.c.b16 %v3515, %v3514
        %v3519 = vsel %vm523, %v3501, 0
        %v3522 = vsel %vm523, %v3502, 0
        %3524 = vmatprep.subr.bf16.mxu0 0
        %3525 = vmatpush1.bf16.msra.mxu0 %v3516
        %3526 = vmatprep.subr.bf16.mxu0 0
        %3527 = vmatpush1.bf16.msra.mxu0 0
        %3528 = vmatprep.subr.bf16.mxu0 0
        %3529 = vmatpush1.bf16.msra.mxu0 0
        %3530 = vmatprep.subr.bf16.mxu0 0
        %3531 = vmatpush1.bf16.msra.mxu0 0
        %3532 = vmatprep.subr.bf16.mxu0 0
        %3533 = vmatpush1.bf16.msra.mxu0 0
        %3534 = vmatprep.subr.bf16.mxu0 0
        %3535 = vmatpush1.bf16.msra.mxu0 0
        %3536 = vmatprep.subr.bf16.mxu0 0
        %3537 = vmatpush1.bf16.msra.mxu0 0
        %3538 = vmatprep.subr.bf16.mxu0 0
        %3539 = vmatpush1.bf16.msra.mxu0 0
        %3540 = vmatprep.subr.bf16.mxu0 0
        %3541 = vmatpush1.bf16.msra.mxu0 0
        %3542 = vmatprep.subr.bf16.mxu0 0
        %3543 = vmatpush1.bf16.msra.mxu0 0
        %3544 = vmatprep.subr.bf16.mxu0 0
        %3545 = vmatpush1.bf16.msra.mxu0 0
        %3546 = vmatprep.subr.bf16.mxu0 0
        %3547 = vmatpush1.bf16.msra.mxu0 0
        %3548 = vmatprep.subr.bf16.mxu0 0
        %3549 = vmatpush1.bf16.msra.mxu0 0
        %3550 = vmatprep.subr.bf16.mxu0 0
        %3551 = vmatpush1.bf16.msra.mxu0 0
        %3552 = vmatprep.subr.bf16.mxu0 0
        %3553 = vmatpush1.bf16.msra.mxu0 0
        %3554 = vmatprep.subr.bf16.mxu0 0
        %3555 = vmatpush1.bf16.msra.mxu0 0
        %3556 = vmatprep.mubr.bf16.mxu0 0
        %3557 = vmatmul.mubr.bf16.gmra.mrb[0].mxu0 %v3519
        %v3558 = vpop.f32.mrb[0].mxu0
        %v3559 = vadd.f32 %v3510, %v3558
        %v3560 = vpop.f32.mrb[0].mxu0
        %v3561 = vpop.f32.mrb[0].mxu0
        %v3562 = vadd.f32 %v3510, %v3561
        %v3563 = vpop.f32.mrb[0].mxu0
        %3564 = vmatprep.mubr.bf16.mxu0 0
        %3565 = vmatmul.mubr.bf16.gmra.mrb[0].mxu0 %v3522
        %v3566 = vpop.f32.mrb[0].mxu0
        %v3567 = vadd.f32 %v3510, %v3566
        %v3568 = vpop.f32.mrb[0].mxu0
        %v3569 = vpop.f32.mrb[0].mxu0
        %v3570 = vadd.f32 %v3510, %v3569
        %v3571 = vpop.f32.mrb[0].mxu0
        %3572 = vdwg.mxu0
        %v3573 = vadd.f32 %v3559, 3.0
        %v3574 = vadd.f32 %v3562, 3.0
        %v3575 = vadd.f32 %v3567, 3.0
        %v3576 = vadd.f32 %v3570, 3.0
        %v3577 = vmax.f32 %v3573, 0.0
        %v3578 = vmax.f32 %v3574, 0.0
        %v3579 = vmax.f32 %v3575, 0.0
        %v3580 = vmax.f32 %v3576, 0.0
        %v3581 = vmin.f32 %v3577, 6.0
        %v3582 = vmin.f32 %v3578, 6.0
        %v3583 = vmin.f32 %v3579, 6.0
        %v3584 = vmin.f32 %v3580, 6.0
        %v3585 = vmul.f32 %v3581, 0.16666667
        %v3586 = vmul.f32 %v3582, 0.16666667
        %v3587 = vmul.f32 %v3583, 0.16666667
        %v3588 = vmul.f32 %v3584, 0.16666667
        %v3589 = vmul.f32 %v3559, %v3585
        %v3590 = vmul.f32 %v3562, %v3586
        %v3591 = vmul.f32 %v3567, %v3587
        %v3592 = vmul.f32 %v3570, %v3588
        %v3593 = vpack.c.bf16 %v3590, %v3589
        %v3594 = vpack.c.bf16 %v3592, %v3591
        %v3595 = vld [vmem:[%s9] sm:$0xf]
        %v3596 = vld [vmem:[%s10] sm:$0x1]
        %v3598 = vlaneseq
        %v3599 = vshrl.u32 %v3598, 7
        %v3600 = vsub.s32 0, %v3599
        %v3601 = vrot.slane %v3596, %v3600
        %v3604 = vsel %vm1659, %v3593, 0
        %vm3606 = vcmask 1043456
        %v3608 = vsel %vm3606, %v3595, 0
        %3610 = vmatprep.subr.bf16.mxu0 0
        %3611 = vmatpush1.bf16.msra.mxu0 %v3608
        %3612 = vmatprep.subr.bf16.mxu0 0
        %3613 = vmatpush1.bf16.msra.mxu0 0
        %3614 = vmatprep.subr.bf16.mxu0 0
        %3615 = vmatpush1.bf16.msra.mxu0 0
        %3616 = vmatprep.subr.bf16.mxu0 0
        %3617 = vmatpush1.bf16.msra.mxu0 0
        %3618 = vmatprep.subr.bf16.mxu0 0
        %3619 = vmatpush1.bf16.msra.mxu0 0
        %3620 = vmatprep.subr.bf16.mxu0 0
        %3621 = vmatpush1.bf16.msra.mxu0 0
        %3622 = vmatprep.subr.bf16.mxu0 0
        %3623 = vmatpush1.bf16.msra.mxu0 0
        %3624 = vmatprep.subr.bf16.mxu0 0
        %3625 = vmatpush1.bf16.msra.mxu0 0
        %3626 = vmatprep.subr.bf16.mxu0 0
        %3627 = vmatpush1.bf16.msra.mxu0 0
        %3628 = vmatprep.subr.bf16.mxu0 0
        %3629 = vmatpush1.bf16.msra.mxu0 0
        %3630 = vmatprep.subr.bf16.mxu0 0
        %3631 = vmatpush1.bf16.msra.mxu0 0
        %3632 = vmatprep.subr.bf16.mxu0 0
        %3633 = vmatpush1.bf16.msra.mxu0 0
        %3634 = vmatprep.subr.bf16.mxu0 0
        %3635 = vmatpush1.bf16.msra.mxu0 0
        %3636 = vmatprep.subr.bf16.mxu0 0
        %3637 = vmatpush1.bf16.msra.mxu0 0
        %3638 = vmatprep.subr.bf16.mxu0 0
        %3639 = vmatpush1.bf16.msra.mxu0 0
        %3640 = vmatprep.subr.bf16.mxu0 0
        %3641 = vmatpush1.bf16.msra.mxu0 0
        %3642 = vmatprep.mubr.bf16.mxu0 0
        %3643 = vmatmul.mubr.bf16.gmra.mrb[0].mxu0 %v3604
        %v3644 = vpop.f32.mrb[0].mxu0
        %v3645 = vadd.f32 %v3601, %v3644
        %v3646 = vpop.f32.mrb[0].mxu0
        %v3647 = vpop.f32.mrb[0].mxu0
        %v3648 = vadd.f32 %v3601, %v3647
        %v3649 = vpop.f32.mrb[0].mxu0
        %3650 = vdwg.mxu0
        %v3651 = vxor.u32 %v3645, 2147483648
        %v3652 = vxor.u32 %v3648, 2147483648
        %v3653 = vmul.f32 %v3651, 1.442695
        %v3654 = vpow.pop %v3653
        %v3655 = vmul.f32 %v3652, 1.442695
        %v3656 = vpow.pop %v3655
        %v3657 = vadd.f32 %v3654, 1.0
        %v3658 = vadd.f32 %v3656, 1.0
        %v3659 = vrcp.pop %v3657
        %v3660 = vmul.f32 1.0, %v3659
        %v3661 = vrcp.pop %v3658
        %v3662 = vmul.f32 1.0, %v3661
        %v3663 = vld [vmem:[%s11] sm:$0xf]
        %v3664 = vld [vmem:[%s12] sm:$0x1]
        %v3666 = vlaneseq
        %v3667 = vshrl.u32 %v3666, 7
        %v3668 = vsub.s32 0, %v3667
        %v3669 = vrot.slane %v3664, %v3668
        %v3672 = vsel %vm1659, %v3594, 0
        %v3675 = vsel %vm3606, %v3663, 0
        %3677 = vmatprep.subr.bf16.mxu0 0
        %3678 = vmatpush1.bf16.msra.mxu0 %v3675
        %3679 = vmatprep.subr.bf16.mxu0 0
        %3680 = vmatpush1.bf16.msra.mxu0 0
        %3681 = vmatprep.subr.bf16.mxu0 0
        %3682 = vmatpush1.bf16.msra.mxu0 0
        %3683 = vmatprep.subr.bf16.mxu0 0
        %3684 = vmatpush1.bf16.msra.mxu0 0
        %3685 = vmatprep.subr.bf16.mxu0 0
        %3686 = vmatpush1.bf16.msra.mxu0 0
        %3687 = vmatprep.subr.bf16.mxu0 0
        %3688 = vmatpush1.bf16.msra.mxu0 0
        %3689 = vmatprep.subr.bf16.mxu0 0
        %3690 = vmatpush1.bf16.msra.mxu0 0
        %3691 = vmatprep.subr.bf16.mxu0 0
        %3692 = vmatpush1.bf16.msra.mxu0 0
        %3693 = vmatprep.subr.bf16.mxu0 0
        %3694 = vmatpush1.bf16.msra.mxu0 0
        %3695 = vmatprep.subr.bf16.mxu0 0
        %3696 = vmatpush1.bf16.msra.mxu0 0
        %3697 = vmatprep.subr.bf16.mxu0 0
        %3698 = vmatpush1.bf16.msra.mxu0 0
        %3699 = vmatprep.subr.bf16.mxu0 0
        %3700 = vmatpush1.bf16.msra.mxu0 0
        %3701 = vmatprep.subr.bf16.mxu0 0
        %3702 = vmatpush1.bf16.msra.mxu0 0
        %3703 = vmatprep.subr.bf16.mxu0 0
        %3704 = vmatpush1.bf16.msra.mxu0 0
        %3705 = vmatprep.subr.bf16.mxu0 0
        %3706 = vmatpush1.bf16.msra.mxu0 0
        %3707 = vmatprep.subr.bf16.mxu0 0
        %3708 = vmatpush1.bf16.msra.mxu0 0
        %3709 = vmatprep.mubr.bf16.mxu0 0
        %3710 = vmatmul.mubr.bf16.gmra.mrb[0].mxu0 %v3672
        %v3711 = vpop.f32.mrb[0].mxu0
        %v3712 = vadd.f32 %v3669, %v3711
        %v3713 = vpop.f32.mrb[0].mxu0
        %v3714 = vpop.f32.mrb[0].mxu0
        %v3715 = vadd.f32 %v3669, %v3714
        %v3716 = vpop.f32.mrb[0].mxu0
        %3717 = vdwg.mxu0
        %v3718 = vxor.u32 %v3712, 2147483648
        %v3719 = vxor.u32 %v3715, 2147483648
        %v3720 = vmul.f32 %v3718, 1.442695
        %v3721 = vpow.pop %v3720
        %v3722 = vmul.f32 %v3719, 1.442695
        %v3723 = vpow.pop %v3722
        %v3724 = vadd.f32 %v3721, 1.0
        %v3725 = vadd.f32 %v3723, 1.0
        %v3726 = vrcp.pop %v3724
        %v3727 = vmul.f32 1.0, %v3726
        %v3728 = vrcp.pop %v3725
        %v3729 = vmul.f32 1.0, %v3728
        %v3730 = vmul.f32 %v3225, %v3727
        %v3731 = vmul.f32 %v3228, %v3729
        %v3732 = vmul.f32 %v3233, %v3727
        %v3733 = vmul.f32 %v3236, %v3729
        %v3734 = vmul.f32 %v3241, %v3727
        %v3735 = vmul.f32 %v3244, %v3729
        %v3736 = vmul.f32 %v3249, %v3727
        %v3737 = vmul.f32 %v3252, %v3729
        %v3738 = vmul.f32 %v3257, %v3727
        %v3739 = vmul.f32 %v3260, %v3729
        %v3740 = vmul.f32 %v3265, %v3727
        %v3741 = vmul.f32 %v3268, %v3729
        %v3742 = vmul.f32 %v3273, %v3727
        %v3743 = vmul.f32 %v3276, %v3729
        %v3744 = vmul.f32 %v3281, %v3727
        %v3745 = vmul.f32 %v3284, %v3729
        %v3746 = vmul.f32 %v3289, %v3727
        %v3747 = vmul.f32 %v3292, %v3729
        %v3748 = vmul.f32 %v3297, %v3727
        %v3749 = vmul.f32 %v3300, %v3729
        %v3750 = vmul.f32 %v3305, %v3727
        %v3751 = vmul.f32 %v3308, %v3729
        %v3752 = vmul.f32 %v3313, %v3727
        %v3753 = vmul.f32 %v3316, %v3729
        %v3754 = vmul.f32 %v3321, %v3727
        %v3755 = vmul.f32 %v3324, %v3729
        %v3756 = vmul.f32 %v3329, %v3727
        %v3757 = vmul.f32 %v3332, %v3729
        %v3758 = vmul.f32 %v3337, %v3727
        %v3759 = vmul.f32 %v3340, %v3729
        %v3760 = vmul.f32 %v3345, %v3727
        %v3761 = vmul.f32 %v3348, %v3729
        %v3764 = vcombine.high %v3660, %v3660
        %v3766 = vunpack.c.l.s4 1966171168
        %v3767 = vunpack.c.0.s8 %v3766
        %v3768 = vlaneseq
        %v3769 = vshrl.u32 %v3768, 7
        %v3770 = vsub.s32 %v3767, %v3769
        %v3771 = vrot.slane %v3660, %v3770
        %v3773 = vunpack.c.l.s4 1966171168
        %v3774 = vunpack.c.0.s8 %v3773
        %v3775 = vlaneseq
        %v3776 = vshrl.u32 %v3775, 7
        %v3777 = vsub.s32 %v3774, %v3776
        %v3778 = vrot.slane %v3764, %v3777
        %v3779 = vcombine.high %v3771, %v3771
        %v3780 = vcombine.high %v3778, %v3778
        %v3782 = vunpack.c.l.s4 1966171168
        %v3783 = vunpack.c.0.s8 %v3782
        %v3784 = vlaneseq
        %v3785 = vshrl.u32 %v3784, 7
        %v3786 = vsub.s32 %v3783, %v3785
        %v3787 = vrot.slane %v3771, %v3786
        %v3789 = vunpack.c.l.s4 1966171168
        %v3790 = vunpack.c.0.s8 %v3789
        %v3791 = vlaneseq
        %v3792 = vshrl.u32 %v3791, 7
        %v3793 = vsub.s32 %v3790, %v3792
        %v3794 = vrot.slane %v3778, %v3793
        %v3796 = vunpack.c.l.s4 1966171168
        %v3797 = vunpack.c.0.s8 %v3796
        %v3798 = vlaneseq
        %v3799 = vshrl.u32 %v3798, 7
        %v3800 = vsub.s32 %v3797, %v3799
        %v3801 = vrot.slane %v3779, %v3800
        %v3803 = vunpack.c.l.s4 1966171168
        %v3804 = vunpack.c.0.s8 %v3803
        %v3805 = vlaneseq
        %v3806 = vshrl.u32 %v3805, 7
        %v3807 = vsub.s32 %v3804, %v3806
        %v3808 = vrot.slane %v3780, %v3807
        %v3809 = vcombine.high %v3787, %v3787
        %v3810 = vcombine.high %v3794, %v3794
        %v3811 = vcombine.high %v3801, %v3801
        %v3812 = vcombine.high %v3808, %v3808
        %v3813 = vcombine.high %v3662, %v3662
        %v3815 = vunpack.c.l.s4 1966171168
        %v3816 = vunpack.c.0.s8 %v3815
        %v3817 = vlaneseq
        %v3818 = vshrl.u32 %v3817, 7
        %v3819 = vsub.s32 %v3816, %v3818
        %v3820 = vrot.slane %v3662, %v3819
        %v3822 = vunpack.c.l.s4 1966171168
        %v3823 = vunpack.c.0.s8 %v3822
        %v3824 = vlaneseq
        %v3825 = vshrl.u32 %v3824, 7
        %v3826 = vsub.s32 %v3823, %v3825
        %v3827 = vrot.slane %v3813, %v3826
        %v3828 = vcombine.high %v3820, %v3820
        %v3829 = vcombine.high %v3827, %v3827
        %v3831 = vunpack.c.l.s4 1966171168
        %v3832 = vunpack.c.0.s8 %v3831
        %v3833 = vlaneseq
        %v3834 = vshrl.u32 %v3833, 7
        %v3835 = vsub.s32 %v3832, %v3834
        %v3836 = vrot.slane %v3820, %v3835
        %v3838 = vunpack.c.l.s4 1966171168
        %v3839 = vunpack.c.0.s8 %v3838
        %v3840 = vlaneseq
        %v3841 = vshrl.u32 %v3840, 7
        %v3842 = vsub.s32 %v3839, %v3841
        %v3843 = vrot.slane %v3827, %v3842
        %v3845 = vunpack.c.l.s4 1966171168
        %v3846 = vunpack.c.0.s8 %v3845
        %v3847 = vlaneseq
        %v3848 = vshrl.u32 %v3847, 7
        %v3849 = vsub.s32 %v3846, %v3848
        %v3850 = vrot.slane %v3828, %v3849
        %v3852 = vunpack.c.l.s4 1966171168
        %v3853 = vunpack.c.0.s8 %v3852
        %v3854 = vlaneseq
        %v3855 = vshrl.u32 %v3854, 7
        %v3856 = vsub.s32 %v3853, %v3855
        %v3857 = vrot.slane %v3829, %v3856
        %v3858 = vcombine.high %v3836, %v3836
        %v3859 = vcombine.high %v3843, %v3843
        %v3860 = vcombine.high %v3850, %v3850
        %v3861 = vcombine.high %v3857, %v3857
        %v3862 = vlaneseq
        %v3863 = vshrl.u32 %v3862, 7
        %v3864 = vsub.s32 0, %v3863
        %v3865 = vrot.slane %v3787, %v3864
        %v3866 = vlaneseq
        %v3867 = vshrl.u32 %v3866, 7
        %v3868 = vsub.s32 0, %v3867
        %v3869 = vrot.slane %v3801, %v3868
        %v3870 = vlaneseq
        %v3871 = vshrl.u32 %v3870, 7
        %v3872 = vsub.s32 0, %v3871
        %v3873 = vrot.slane %v3809, %v3872
        %v3874 = vlaneseq
        %v3875 = vshrl.u32 %v3874, 7
        %v3876 = vsub.s32 0, %v3875
        %v3877 = vrot.slane %v3811, %v3876
        %v3878 = vlaneseq
        %v3879 = vshrl.u32 %v3878, 7
        %v3880 = vsub.s32 0, %v3879
        %v3881 = vrot.slane %v3794, %v3880
        %v3882 = vlaneseq
        %v3883 = vshrl.u32 %v3882, 7
        %v3884 = vsub.s32 0, %v3883
        %v3885 = vrot.slane %v3808, %v3884
        %v3886 = vlaneseq
        %v3887 = vshrl.u32 %v3886, 7
        %v3888 = vsub.s32 0, %v3887
        %v3889 = vrot.slane %v3810, %v3888
        %v3890 = vlaneseq
        %v3891 = vshrl.u32 %v3890, 7
        %v3892 = vsub.s32 0, %v3891
        %v3893 = vrot.slane %v3812, %v3892
        %v3894 = vlaneseq
        %v3895 = vshrl.u32 %v3894, 7
        %v3896 = vsub.s32 0, %v3895
        %v3897 = vrot.slane %v3836, %v3896
        %v3898 = vlaneseq
        %v3899 = vshrl.u32 %v3898, 7
        %v3900 = vsub.s32 0, %v3899
        %v3901 = vrot.slane %v3850, %v3900
        %v3902 = vlaneseq
        %v3903 = vshrl.u32 %v3902, 7
        %v3904 = vsub.s32 0, %v3903
        %v3905 = vrot.slane %v3858, %v3904
        %v3906 = vlaneseq
        %v3907 = vshrl.u32 %v3906, 7
        %v3908 = vsub.s32 0, %v3907
        %v3909 = vrot.slane %v3860, %v3908
        %v3910 = vlaneseq
        %v3911 = vshrl.u32 %v3910, 7
        %v3912 = vsub.s32 0, %v3911
        %v3913 = vrot.slane %v3843, %v3912
        %v3914 = vlaneseq
        %v3915 = vshrl.u32 %v3914, 7
        %v3916 = vsub.s32 0, %v3915
        %v3917 = vrot.slane %v3857, %v3916
        %v3918 = vlaneseq
        %v3919 = vshrl.u32 %v3918, 7
        %v3920 = vsub.s32 0, %v3919
        %v3921 = vrot.slane %v3859, %v3920
        %v3922 = vlaneseq
        %v3923 = vshrl.u32 %v3922, 7
        %v3924 = vsub.s32 0, %v3923
        %v3925 = vrot.slane %v3861, %v3924
        %v3942 = vmul.f32 %v3730, %v3865
        %v3943 = vmul.f32 %v3731, %v3865
        %v3944 = vmul.f32 %v3732, %v3869
        %v3945 = vmul.f32 %v3733, %v3869
        %v3946 = vmul.f32 %v3734, %v3873
        %v3947 = vmul.f32 %v3735, %v3873
        %v3948 = vmul.f32 %v3736, %v3877
        %v3949 = vmul.f32 %v3737, %v3877
        %v3950 = vmul.f32 %v3738, %v3881
        %v3951 = vmul.f32 %v3739, %v3881
        %v3952 = vmul.f32 %v3740, %v3885
        %v3953 = vmul.f32 %v3741, %v3885
        %v3954 = vmul.f32 %v3742, %v3889
        %v3955 = vmul.f32 %v3743, %v3889
        %v3956 = vmul.f32 %v3744, %v3893
        %v3957 = vmul.f32 %v3745, %v3893
        %v3958 = vmul.f32 %v3746, %v3897
        %v3959 = vmul.f32 %v3747, %v3897
        %v3960 = vmul.f32 %v3748, %v3901
        %v3961 = vmul.f32 %v3749, %v3901
        %v3962 = vmul.f32 %v3750, %v3905
        %v3963 = vmul.f32 %v3751, %v3905
        %v3964 = vmul.f32 %v3752, %v3909
        %v3965 = vmul.f32 %v3753, %v3909
        %v3966 = vmul.f32 %v3754, %v3913
        %v3967 = vmul.f32 %v3755, %v3913
        %v3968 = vmul.f32 %v3756, %v3917
        %v3969 = vmul.f32 %v3757, %v3917
        %v3970 = vmul.f32 %v3758, %v3921
        %v3971 = vmul.f32 %v3759, %v3921
        %v3972 = vmul.f32 %v3760, %v3925
        %v3973 = vmul.f32 %v3761, %v3925
        %v3974 = vadd.f32 %v3942, %v460
        %v3975 = vadd.f32 %v3943, %v461
        %v3976 = vadd.f32 %v3944, %v462
        %v3977 = vadd.f32 %v3945, %v463
        %v3978 = vadd.f32 %v3946, %v464
        %v3979 = vadd.f32 %v3947, %v465
        %v3980 = vadd.f32 %v3948, %v466
        %v3981 = vadd.f32 %v3949, %v467
        %v3982 = vadd.f32 %v3950, %v468
        %v3983 = vadd.f32 %v3951, %v469
        %v3984 = vadd.f32 %v3952, %v470
        %v3985 = vadd.f32 %v3953, %v471
        %v3986 = vadd.f32 %v3954, %v472
        %v3987 = vadd.f32 %v3955, %v473
        %v3988 = vadd.f32 %v3956, %v474
        %v3989 = vadd.f32 %v3957, %v475
        %v3990 = vadd.f32 %v3958, %v476
        %v3991 = vadd.f32 %v3959, %v477
        %v3992 = vadd.f32 %v3960, %v478
        %v3993 = vadd.f32 %v3961, %v479
        %v3994 = vadd.f32 %v3962, %v480
        %v3995 = vadd.f32 %v3963, %v481
        %v3996 = vadd.f32 %v3964, %v482
        %v3997 = vadd.f32 %v3965, %v483
        %v3998 = vadd.f32 %v3966, %v484
        %v3999 = vadd.f32 %v3967, %v485
        %v4000 = vadd.f32 %v3968, %v486
        %v4001 = vadd.f32 %v3969, %v487
        %v4002 = vadd.f32 %v3970, %v488
        %v4003 = vadd.f32 %v3971, %v489
        %v4004 = vadd.f32 %v3972, %v490
        %v4005 = vadd.f32 %v3973, %v491
        %v4006 = vmax.f32 %v3974, 0.0
        %v4007 = vmax.f32 %v3975, 0.0
        %v4008 = vmax.f32 %v3976, 0.0
        %v4009 = vmax.f32 %v3977, 0.0
        %v4010 = vmax.f32 %v3978, 0.0
        %v4011 = vmax.f32 %v3979, 0.0
        %v4012 = vmax.f32 %v3980, 0.0
        %v4013 = vmax.f32 %v3981, 0.0
        %v4014 = vmax.f32 %v3982, 0.0
        %v4015 = vmax.f32 %v3983, 0.0
        %v4016 = vmax.f32 %v3984, 0.0
        %v4017 = vmax.f32 %v3985, 0.0
        %v4018 = vmax.f32 %v3986, 0.0
        %v4019 = vmax.f32 %v3987, 0.0
        %v4020 = vmax.f32 %v3988, 0.0
        %v4021 = vmax.f32 %v3989, 0.0
        %v4022 = vmax.f32 %v3990, 0.0
        %v4023 = vmax.f32 %v3991, 0.0
        %v4024 = vmax.f32 %v3992, 0.0
        %v4025 = vmax.f32 %v3993, 0.0
        %v4026 = vmax.f32 %v3994, 0.0
        %v4027 = vmax.f32 %v3995, 0.0
        %v4028 = vmax.f32 %v3996, 0.0
        %v4029 = vmax.f32 %v3997, 0.0
        %v4030 = vmax.f32 %v3998, 0.0
        %v4031 = vmax.f32 %v3999, 0.0
        %v4032 = vmax.f32 %v4000, 0.0
        %v4033 = vmax.f32 %v4001, 0.0
        %v4034 = vmax.f32 %v4002, 0.0
        %v4035 = vmax.f32 %v4003, 0.0
        %v4036 = vmax.f32 %v4004, 0.0
        %v4037 = vmax.f32 %v4005, 0.0
        %4038 = vst.msk [vmem:[%s458] sm:$0xff] %vm523, %v4006
        %4039 = vst.msk [vmem:[%s458 + $0x8] sm:$0xff] %vm523, %v4007
        %4040 = vst.msk [vmem:[%s458 + $0x10] sm:$0xff] %vm523, %v4008
        %4041 = vst.msk [vmem:[%s458 + $0x18] sm:$0xff] %vm523, %v4009
        %4042 = vst.msk [vmem:[%s458 + $0x20] sm:$0xff] %vm523, %v4010
        %4043 = vst.msk [vmem:[%s458 + $0x28] sm:$0xff] %vm523, %v4011
        %4044 = vst.msk [vmem:[%s458 + $0x30] sm:$0xff] %vm523, %v4012
        %4045 = vst.msk [vmem:[%s458 + $0x38] sm:$0xff] %vm523, %v4013
        %4046 = vst.msk [vmem:[%s458 + $0x40] sm:$0xff] %vm523, %v4014
        %4047 = vst.msk [vmem:[%s458 + $0x48] sm:$0xff] %vm523, %v4015
        %4048 = vst.msk [vmem:[%s458 + $0x50] sm:$0xff] %vm523, %v4016
        %4049 = vst.msk [vmem:[%s458 + $0x58] sm:$0xff] %vm523, %v4017
        %4050 = vst.msk [vmem:[%s458 + $0x60] sm:$0xff] %vm523, %v4018
        %4051 = vst.msk [vmem:[%s458 + $0x68] sm:$0xff] %vm523, %v4019
        %4052 = vst.msk [vmem:[%s458 + $0x70] sm:$0xff] %vm523, %v4020
        %4053 = vst.msk [vmem:[%s458 + $0x78] sm:$0xff] %vm523, %v4021
        %4054 = vst.msk [vmem:[%s458 + $0x80] sm:$0xff] %vm523, %v4022
        %4055 = vst.msk [vmem:[%s458 + $0x88] sm:$0xff] %vm523, %v4023
        %4056 = vst.msk [vmem:[%s458 + $0x90] sm:$0xff] %vm523, %v4024
        %4057 = vst.msk [vmem:[%s458 + $0x98] sm:$0xff] %vm523, %v4025
        %4058 = vst.msk [vmem:[%s458 + $0xa0] sm:$0xff] %vm523, %v4026
        %4059 = vst.msk [vmem:[%s458 + $0xa8] sm:$0xff] %vm523, %v4027
        %4060 = vst.msk [vmem:[%s458 + $0xb0] sm:$0xff] %vm523, %v4028
        %4061 = vst.msk [vmem:[%s458 + $0xb8] sm:$0xff] %vm523, %v4029
        %4062 = vst.msk [vmem:[%s458 + $0xc0] sm:$0xff] %vm523, %v4030
        %4063 = vst.msk [vmem:[%s458 + $0xc8] sm:$0xff] %vm523, %v4031
        %4064 = vst.msk [vmem:[%s458 + $0xd0] sm:$0xff] %vm523, %v4032
        %4065 = vst.msk [vmem:[%s458 + $0xd8] sm:$0xff] %vm523, %v4033
        %4066 = vst.msk [vmem:[%s458 + $0xe0] sm:$0xff] %vm523, %v4034
        %4067 = vst.msk [vmem:[%s458 + $0xe8] sm:$0xff] %vm523, %v4035
        %4068 = vst.msk [vmem:[%s458 + $0xf0] sm:$0xff] %vm523, %v4036
        %4069 = vst.msk [vmem:[%s458 + $0xf8] sm:$0xff] %vm523, %v4037
        %s4070 = sand.u32 %s316, 1
        %s4071 = scalar_lea.sflag [#allocation5], %s4070
        %s4072 = sand.u32 %s316, 1
        %s4073 = smul.addr %s4072, 256
        %s4074 = scalar_lea.vmem [#allocation6], %s4073
        // Predicated region
        $region77: #{tpu_custom_call.1} parent=71 // pred_check
          %p4075 = pneg %p326
        $region78: #{tpu_custom_call.1} parent=71 // pred_check_branch
          %4077 = sbr.rel (%p4075) target = $region80
        $region79: #{tpu_custom_call.1} parent=71 // pred_region
          %s4079 = ssub.s32 4096, 4096
          %4080 = vsyncadd %s4071, %s4079
          %s4081 = smul.addr %s30, 32
          %s4082 = smul.addr %s4081, 128
          %s4083 = scalar_lea.hbm %s13, %s4082
          %s4084 = sshll.u32 %s4074, 4
          %s4085 = int_to_ptr.vmem [resolvable:$true] %s4084
          %4090 = dma.vmem_to_hbm [thread:$0]  %s4085, 4096, %s4083, %s4071, 128, 128, 8
        $region80: #{tpu_custom_call.1} parent=71 // pred_fallthru
          _
      $region72: #{tpu_custom_call.1} parent=5 // pred_fallthru
        _
      %p4091 = scmp.le.s32.totalorder 2, %s25
      // Predicated region
      $region81: #{tpu_custom_call.1} parent=5 // pred_check
        %p4092 = pneg %p4091
      $region82: #{tpu_custom_call.1} parent=5 // pred_check_branch
        %4094 = sbr.rel (%p4092) target = $region84
      $region83: #{tpu_custom_call.1} parent=5 // pred_region
        %s4095 = ssub.s32 %s25, 2
        // Predicated region
        $region85: #{tpu_custom_call.1} parent=83 // pred_check
          %p4096 = pneg %p332
        $region86: #{tpu_custom_call.1} parent=83 // pred_check_branch
          %4098 = sbr.rel (%p4096) target = $region88
        $region87: #{tpu_custom_call.1} parent=83 // pred_region
          %s4099 = sand.u32 %s317, 1
          %s4100 = scalar_lea.sflag [#allocation5], %s4099
          %s4101 = sand.u32 %s317, 1
          %s4102 = smul.addr %s4101, 256
          %s4103 = scalar_lea.vmem [#allocation6], %s4102
          %4104 = dma.done %s4100, 4096
        $region88: #{tpu_custom_call.1} parent=83 // pred_fallthru
          _
      $region84: #{tpu_custom_call.1} parent=5 // pred_fallthru
        _
    $region6: #{tpu_custom_call.1} parent=1 // loop_footer
      %s29 = sadd.s32 1, %s25
    $region7: #{tpu_custom_call.1} parent=1 // loop_footer_branch
      %24 = sbr.rel target = $region3
    $region8: #{tpu_custom_call.1} parent=1 // loop_exit
      _
    %4105 = vsyncpa [#allocation4], 1
    %s4106 = scalar_lea.sflag [#allocation4], 1
    %4107 = vsyncpa %s4106, 1
    %4108 = vsyncpa [#allocation5], 1
    %s4109 = scalar_lea.sflag [#allocation5], 1
    %4110 = vsyncpa %s4109, 1

</llo_original>
